<compile_context>
chip_gen: v5e
topology: v5e:2x2
jax: 0.10.0
libtpu: 0.0.40
codegen_flags: <defaults>
</compile_context>

<pallas_src>
import functools
import numpy as np

import jax
import jax.numpy as jnp
from jax import lax
from jax.experimental import pallas as pl
from jax.experimental.pallas import tpu as pltpu

N_HEAD = 4
N_LAYER = 6

_GELU_C = 0.7978845608028654  # sqrt(2/pi)
_NEG_INF = -1e9


# ----------------------------------------------------------------------------
# In-kernel helpers
# ----------------------------------------------------------------------------
def _gelu_new(x):
    return 0.5 * x * (1.0 + jnp.tanh(_GELU_C * (x + 0.044715 * x * x * x)))


def _layernorm(x, g, b, eps=1e-5):
    # single reduction pass: stack [x ; x*x] along sublanes, reduce once,
    # var = E[x^2] - mean^2.
    t = x.shape[0]
    inv_n = 1.0 / x.shape[-1]
    s = jnp.sum(jnp.concatenate([x, x * x], axis=0), axis=-1, keepdims=True)
    mu = s[:t] * inv_n
    var = s[t:] * inv_n - mu * mu
    return (x - mu) * lax.rsqrt(var + eps) * g + b


# ----------------------------------------------------------------------------
# Fused Pallas kernel: one sequence per grid step
# ----------------------------------------------------------------------------
def _planner_kernel(
    # per-sequence data blocks (leading grid dim of size 1)
    h0_ref, mask_ref, dd_ref, dest_ref, onehot_ref, rw_ref,
    # stacked GPT-2 weights (leading dim = layer); attention pre-split per Q/K/V
    ln1_g_ref, ln1_b_ref,
    wq_ref, bq_ref, wk_ref, bk_ref, wv_ref, bv_ref,
    wproj_ref, bproj_ref,
    ln2_g_ref, ln2_b_ref, fc_w_ref, fc_b_ref, mp_w_ref, mp_b_ref,
    lnf_g_ref, lnf_b_ref,
    # head weights (distance/direction MLPs already folded into w1dd / b1)
    w1h_ref, w1dd_ref, w1dest_ref, b1_ref, w2_ref, b2_ref, w3_ref, b3_ref,
    # output: (1,1,1) per-sequence partial loss
    o_ref,
    *, n_layer, n_head):
    f32 = jnp.float32
    _, T, E = h0_ref.shape
    Dh = E // n_head

    # ---- causal + key-padding additive bias (T,T), built once ---------------
    r = lax.broadcasted_iota(jnp.int32, (T, T), 0)
    c = lax.broadcasted_iota(jnp.int32, (T, T), 1)
    key_ok = mask_ref[0] > 0.5                                  # (1, T)
    bias = jnp.where(jnp.logical_and(r >= c, key_ok), f32(0.0), f32(_NEG_INF))
    bias_h = jnp.concatenate([bias] * n_head, axis=0)           # (n_head*T, T)

    # ---- per-head lane mask, (n_head*T, E): head-h rows keep lanes [h*Dh,(h+1)*Dh)
    lane = lax.broadcasted_iota(jnp.int32, (T, E), 1)
    head_mask = jnp.concatenate(
        [jnp.logical_and(lane >= hd * Dh, lane < (hd + 1) * Dh).astype(f32)
         for hd in range(n_head)], axis=0)                      # (n_head*T, E)

    h = h0_ref[0]                                               # (T, E) residual
    for l in range(n_layer):
        # -------- attention: all heads batched along the sublane axis --------
        x1 = _layernorm(h, ln1_g_ref[l], ln1_b_ref[l])
        q = jnp.dot(x1, wq_ref[l], preferred_element_type=f32) + bq_ref[l]   # pre-scaled
        k = jnp.dot(x1, wk_ref[l], preferred_element_type=f32) + bk_ref[l]
        v = jnp.dot(x1, wv_ref[l], preferred_element_type=f32) + bv_ref[l]
        # head-stacked queries: rows [h*T,(h+1)*T) hold head-h lanes only
        q4 = jnp.concatenate([q] * n_head, axis=0) * head_mask               # (HT, E)
        s = lax.dot_general(q4, k, (((1,), (1,)), ((), ())),
                            preferred_element_type=f32) + bias_h             # (HT, T)
        # ONE softmax pass for all heads
        s = s - jnp.max(s, axis=-1, keepdims=True)
        p = jnp.exp(s)
        p = p * pl.reciprocal(jnp.sum(p, axis=-1, keepdims=True), approx=True)
        o = jnp.dot(p, v, preferred_element_type=f32) * head_mask            # (HT, E)
        cproj = jnp.dot(o, wproj_ref[l], preferred_element_type=f32)         # (HT, E)
        attn = cproj[0:T]
        for hd in range(1, n_head):
            attn = attn + cproj[hd * T:(hd + 1) * T]
        h = h + attn + bproj_ref[l]
        # -------- MLP ---------------------------------------------------------
        x2 = _layernorm(h, ln2_g_ref[l], ln2_b_ref[l])
        m = _gelu_new(jnp.dot(x2, fc_w_ref[l], preferred_element_type=f32) + fc_b_ref[l])
        h = h + jnp.dot(m, mp_w_ref[l], preferred_element_type=f32) + mp_b_ref[l]

    hidden = _layernorm(h, lnf_g_ref[...], lnf_b_ref[...])                   # (T, E)

    # ---- out_mlp: the concat input is a sum of row-block matmuls; the
    #      distance/direction feature MLPs are folded into w1dd/b1 at pack time.
    destc = jnp.dot(dest_ref[0], w1dest_ref[...], preferred_element_type=f32)  # (1, H)
    h1 = (jnp.dot(hidden, w1h_ref[...], preferred_element_type=f32)
          + jnp.dot(dd_ref[0], w1dd_ref[...], preferred_element_type=f32)
          + destc + b1_ref[...])
    h1 = jnp.maximum(h1, 0.0)
    h2 = jnp.maximum(jnp.dot(h1, w2_ref[...], preferred_element_type=f32)
                     + b2_ref[...], 0.0)
    logits = jnp.dot(h2, w3_ref[...], preferred_element_type=f32) + b3_ref[...]  # (T, D)

    # ---- weighted CE partial sum for this sequence (row weights = 1/(L-1))
    m_ = jnp.max(logits, axis=-1, keepdims=True)
    lse = jnp.log(jnp.sum(jnp.exp(logits - m_), axis=-1, keepdims=True)) + m_
    tgt = jnp.sum(logits * onehot_ref[0], axis=-1, keepdims=True)
    o_ref[0] = jnp.sum((lse - tgt) * rw_ref[0], axis=0, keepdims=True)


# ----------------------------------------------------------------------------
# BlockSpec helpers
# ----------------------------------------------------------------------------
def _data_spec(arr):
    blk = (1,) + arr.shape[1:]
    return pl.BlockSpec(blk, lambda b, _n=arr.ndim: (b,) + (0,) * (_n - 1))


def _full_spec(arr):
    return pl.BlockSpec(arr.shape, lambda b, _n=arr.ndim: (0,) * _n)


# ----------------------------------------------------------------------------
# Planner.forward: gathers / feature prep as XLA glue + one fused pallas_call
# ----------------------------------------------------------------------------
def planner_forward(packed, geo, xs_padded, destinations, attention_mask,
                    action_onehot, row_weight):
    emb = packed['x_embedding']
    B, T = xs_padded.shape
    E = emb.shape[1]

    xs_emb = emb[xs_padded]                                       # (B,T,E) gather
    dest_emb = emb[destinations]                                  # (B,E)
    h0 = (xs_emb + packed['wpe'][:T][None, :, :]).astype(jnp.float32)   # (B,T,E)
    mask_f = attention_mask.astype(jnp.float32).reshape(B, 1, T)

    loc = geo['locations']
    distances = jnp.sum(jnp.abs(loc[xs_padded] - loc[destinations][:, None, :]),
                        axis=-1, keepdims=True) * 100.0           # (B,T,1)
    adj = geo['adj_dir'][xs_padded]                               # (B,T,D,2)
    tvd = geo['tv_dir'][xs_padded, destinations[:, None]]         # (B,T,2)
    directions = jnp.sum(adj * tvd[:, :, None, :], axis=-1)       # (B,T,D)
    directions = jnp.where(geo['deg_mask'][xs_padded], -1.0, directions)

    dd = jnp.concatenate([distances, directions], axis=-1)        # (B,T,1+D)
    kp = packed['w1dd'].shape[0]
    dd = jnp.pad(dd, ((0, 0), (0, 0), (0, kp - dd.shape[-1]))).astype(jnp.float32)

    dest3 = dest_emb.reshape(B, 1, E).astype(jnp.float32)
    onehot3 = action_onehot.astype(jnp.float32).reshape(B, T, -1)
    rw3 = row_weight.astype(jnp.float32).reshape(B, T, 1)

    data = (h0, mask_f, dd, dest3, onehot3, rw3)
    weights = (packed['ln1_g'], packed['ln1_b'],
               packed['wq'], packed['bq'], packed['wk'], packed['bk'],
               packed['wv'], packed['bv'], packed['wproj'], packed['bproj'],
               packed['ln2_g'], packed['ln2_b'], packed['fc_w'], packed['fc_b'],
               packed['mp_w'], packed['mp_b'], packed['lnf_g'], packed['lnf_b'],
               packed['w1h'], packed['w1dd'], packed['w1dest'], packed['b1'],
               packed['w2'], packed['b2'], packed['w3'], packed['b3'])

    in_specs = [_data_spec(a) for a in data] + [_full_spec(w) for w in weights]

    kernel = functools.partial(_planner_kernel, n_layer=N_LAYER, n_head=N_HEAD)
    out = pl.pallas_call(
        kernel,
        grid=(B,),
        in_specs=in_specs,
        out_specs=pl.BlockSpec((1, 1, 1), lambda b: (b, 0, 0)),
        out_shape=jax.ShapeDtypeStruct((B, 1, 1), jnp.float32),
        compiler_params=pltpu.CompilerParams(
            dimension_semantics=("parallel",),
            vmem_limit_bytes=32 * 1024 * 1024),
    )(*data, *weights)
    return jnp.sum(out)                                           # sum of per-seq means


# ----------------------------------------------------------------------------
# Parameter init (matches nn.Module structure) + one-time packing
# ----------------------------------------------------------------------------
def init_params(key, n_vertex, max_deg, x_emb_dim, n_positions=32):
    kg = iter(jax.random.split(key, 32 + 8 * N_LAYER))

    def nrm(shape, std=0.02):
        return jax.random.normal(next(kg), shape, jnp.float32) * std

    E = x_emb_dim
    emb = nrm((n_vertex + 2, E))
    emb = emb.at[n_vertex].set(0.0)  # padding_idx row

    layers = []
    for _ in range(N_LAYER):
        layers.append(dict(
            ln1_g=jnp.ones((1, E), jnp.float32), ln1_b=jnp.zeros((1, E), jnp.float32),
            attn_w=nrm((E, 3 * E)), attn_b=jnp.zeros((3 * E,), jnp.float32),
            attn_proj_w=nrm((E, E)), attn_proj_b=jnp.zeros((E,), jnp.float32),
            ln2_g=jnp.ones((1, E), jnp.float32), ln2_b=jnp.zeros((1, E), jnp.float32),
            fc_w=nrm((E, 4 * E)), fc_b=jnp.zeros((4 * E,), jnp.float32),
            mlp_proj_w=nrm((4 * E, E)), mlp_proj_b=jnp.zeros((E,), jnp.float32),
        ))
    gpt2 = dict(wpe=nrm((n_positions, E)), layers=layers,
                lnf_g=jnp.ones((1, E), jnp.float32), lnf_b=jnp.zeros((1, E), jnp.float32))

    distance_dim, direction_dim, hidden_dim = 50, 50, 100
    return dict(
        x_embedding=emb,
        gpt2=gpt2,
        distance_mlp=dict(w=nrm((1, distance_dim)), b=jnp.zeros((distance_dim,), jnp.float32)),
        direction_mlp=dict(w=nrm((max_deg, direction_dim)), b=jnp.zeros((direction_dim,), jnp.float32)),
        out_mlp=[
            dict(w=nrm((E + distance_dim + direction_dim + E, hidden_dim)),
                 b=jnp.zeros((hidden_dim,), jnp.float32)),
            dict(w=nrm((hidden_dim, hidden_dim // 2)), b=jnp.zeros((hidden_dim // 2,), jnp.float32)),
            dict(w=nrm((hidden_dim // 2, max_deg)), b=jnp.zeros((max_deg,), jnp.float32)),
        ],
    )


def pack_params(params):
    """One-time packing: stack per-layer weights, split Q/K/V, fold the 1/sqrt(Dh)
    attention scale into Wq/bq, and fold the distance/direction feature MLPs
    through out_mlp[0] (exact; no nonlinearity between)."""
    g = params['gpt2']
    layers = g['layers']
    E = g['wpe'].shape[1]
    Dh = E // N_HEAD
    qscale = 1.0 / float(np.sqrt(Dh))

    def stack(fn):
        return jnp.stack([fn(ly) for ly in layers], axis=0)

    packed = dict(
        x_embedding=params['x_embedding'],
        wpe=g['wpe'],
        ln1_g=stack(lambda l: l['ln1_g']), ln1_b=stack(lambda l: l['ln1_b']),
        wq=stack(lambda l: l['attn_w'][:, :E] * qscale),
        bq=stack(lambda l: (l['attn_b'][:E] * qscale).reshape(1, E)),
        wk=stack(lambda l: l['attn_w'][:, E:2 * E]),
        bk=stack(lambda l: l['attn_b'][E:2 * E].reshape(1, E)),
        wv=stack(lambda l: l['attn_w'][:, 2 * E:]),
        bv=stack(lambda l: l['attn_b'][2 * E:].reshape(1, E)),
        wproj=stack(lambda l: l['attn_proj_w']),
        bproj=stack(lambda l: l['attn_proj_b'].reshape(1, E)),
        ln2_g=stack(lambda l: l['ln2_g']), ln2_b=stack(lambda l: l['ln2_b']),
        fc_w=stack(lambda l: l['fc_w']), fc_b=stack(lambda l: l['fc_b'].reshape(1, -1)),
        mp_w=stack(lambda l: l['mlp_proj_w']), mp_b=stack(lambda l: l['mlp_proj_b'].reshape(1, -1)),
        lnf_g=g['lnf_g'], lnf_b=g['lnf_b'],
    )

    # distance (K=1) + direction (K=max_deg) linears merged into one K-padded
    # matmul, then folded through out_mlp[0]'s middle row-block.
    dw, db = params['distance_mlp']['w'], params['distance_mlp']['b']       # (1,50),(50,)
    rw_, rb_ = params['direction_mlp']['w'], params['direction_mlp']['b']   # (D,50),(50,)
    dist_dim, dir_dim = dw.shape[1], rw_.shape[1]
    kdim = 1 + rw_.shape[0]
    kp = max(8, kdim)
    ddw = jnp.zeros((kp, dist_dim + dir_dim), jnp.float32)
    ddw = ddw.at[0:1, :dist_dim].set(dw)
    ddw = ddw.at[1:kdim, dist_dim:].set(rw_)
    ddb = jnp.concatenate([db, rb_]).reshape(1, -1)

    w1 = params['out_mlp'][0]['w']                                          # (E+100+E, 100)
    b1 = params['out_mlp'][0]['b'].reshape(1, -1)
    w1_dd = w1[E:E + dist_dim + dir_dim]
    packed['w1h'] = w1[:E]
    packed['w1dd'] = ddw @ w1_dd                                            # (kp, hidden)
    packed['w1dest'] = w1[E + dist_dim + dir_dim:]
    packed['b1'] = b1 + ddb @ w1_dd                                         # (1, hidden)
    packed['w2'] = params['out_mlp'][1]['w']
    packed['b2'] = params['out_mlp'][1]['b'].reshape(1, -1)
    packed['w3'] = params['out_mlp'][2]['w']
    packed['b3'] = params['out_mlp'][2]['b'].reshape(1, -1)
    return packed
    # TODO(synk): GPT-2 dropout layers omitted (deterministic / eval semantics).


# ----------------------------------------------------------------------------
if __name__ == "__main__":
    key = jax.random.PRNGKey(0)
    k_param, k_walk = jax.random.split(key)

    # ---- synthetic road graph (replaces nx.Graph / adjacency A) -------------
    n_vertex = 16
    A = np.zeros((n_vertex, n_vertex), np.int64)
    for i in range(n_vertex):
        j = (i + 1) % n_vertex
        A[i, j] = A[j, i] = 1
    for i in range(4):
        A[i, i + 8] = A[i + 8, i] = 1
    deg = A.sum(1)
    max_deg = int(deg.max())
    neighbors = [list(np.nonzero(A[i])[0]) for i in range(n_vertex)]
    v_to_ord = [{int(v): j for j, v in enumerate(nb)} for nb in neighbors]
    mask_np = np.zeros((n_vertex, max_deg), bool)
    for i in range(n_vertex):
        mask_np[i, int(deg[i]):] = True
    ang = 2.0 * np.pi * np.arange(n_vertex) / n_vertex
    locations_np = np.stack([np.cos(ang), np.sin(ang)], 1).astype(np.float32)  # (lng, lat)
    tv_dir_np = np.zeros((n_vertex, n_vertex, 2), np.float32)
    for k in range(n_vertex):
        dx = locations_np[:, 0] - locations_np[k, 0]
        dy = locations_np[:, 1] - locations_np[k, 1]
        den = np.sqrt(dx * dx + dy * dy)
        nz = den > 0
        tv_dir_np[k, nz, 0] = dx[nz] / den[nz]
        tv_dir_np[k, nz, 1] = dy[nz] / den[nz]
    adj_dir_np = np.zeros((n_vertex, max_deg, 2), np.float32)
    for k in range(n_vertex):
        for j, v in enumerate(neighbors[k]):
            adj_dir_np[k, j] = tv_dir_np[k, v]

    geo = dict(locations=jnp.asarray(locations_np),
               tv_dir=jnp.asarray(tv_dir_np),
               adj_dir=jnp.asarray(adj_dir_np),
               deg_mask=jnp.asarray(mask_np))

    # ---- batch of valid random-walk trajectories (the `xs` input list) ------
    lengths = [8, 6]
    horizon = max(lengths)
    batch_size = len(lengths)
    steps = np.asarray(jax.random.randint(k_walk, (sum(lengths),), 0, 10_000))
    xs, ptr = [], 0
    for L in lengths:
        cur = int(steps[ptr]) % n_vertex
        path = [cur]
        for t in range(1, L):
            nb = neighbors[cur]
            cur = int(nb[int(steps[ptr + t]) % len(nb)])
            path.append(cur)
        ptr += L
        xs.append(path)

    xs_padded_np = np.zeros((batch_size, horizon), np.int32)      # pad_sequence(pad=0)
    attn_mask_np = np.zeros((batch_size, horizon), np.int32)
    for k, p in enumerate(xs):
        xs_padded_np[k, :len(p)] = p
        attn_mask_np[k, :len(p)] = 1
    destinations_np = np.array([p[-1] for p in xs], np.int32)

    # action targets (v_to_ord lookups) -> one-hot rows + per-row CE weights
    onehot_np = np.zeros((batch_size * horizon, max_deg), np.float32)
    weight_np = np.zeros((batch_size * horizon, 1), np.float32)
    for k, p in enumerate(xs):
        L = len(p)
        for t in range(L - 1):
            onehot_np[k * horizon + t, v_to_ord[p[t]][p[t + 1]]] = 1.0
            weight_np[k * horizon + t, 0] = 1.0 / float(L - 1)     # per-seq mean, summed

    x_emb_dim = 32
    params = init_params(k_param, n_vertex, max_deg, x_emb_dim)
    packed = pack_params(params)                                   # one-time packing

    loss_fn = jax.jit(planner_forward)
    loss = loss_fn(packed, geo,
                   jnp.asarray(xs_padded_np), jnp.asarray(destinations_np),
                   jnp.asarray(attn_mask_np), jnp.asarray(onehot_np),
                   jnp.asarray(weight_np))
    loss = jax.block_until_ready(loss)
    assert np.isfinite(float(loss))
    print("KERNEL_OK")
</pallas_src>

<mosaic_0001>
module attributes {stable_mosaic.version = 11 : i64} {
  func.func @_planner_kernel(%arg0: i32, %arg1: memref<1x8x32xf32, #tpu.memory_space<vmem>>, %arg2: memref<1x1x8xf32, #tpu.memory_space<vmem>>, %arg3: memref<1x8x8xf32, #tpu.memory_space<vmem>>, %arg4: memref<1x1x32xf32, #tpu.memory_space<vmem>>, %arg5: memref<1x8x3xf32, #tpu.memory_space<vmem>>, %arg6: memref<1x8x1xf32, #tpu.memory_space<vmem>>, %arg7: memref<6x1x32xf32, #tpu.memory_space<vmem>>, %arg8: memref<6x1x32xf32, #tpu.memory_space<vmem>>, %arg9: memref<6x32x32xf32, #tpu.memory_space<vmem>>, %arg10: memref<6x1x32xf32, #tpu.memory_space<vmem>>, %arg11: memref<6x32x32xf32, #tpu.memory_space<vmem>>, %arg12: memref<6x1x32xf32, #tpu.memory_space<vmem>>, %arg13: memref<6x32x32xf32, #tpu.memory_space<vmem>>, %arg14: memref<6x1x32xf32, #tpu.memory_space<vmem>>, %arg15: memref<6x32x32xf32, #tpu.memory_space<vmem>>, %arg16: memref<6x1x32xf32, #tpu.memory_space<vmem>>, %arg17: memref<6x1x32xf32, #tpu.memory_space<vmem>>, %arg18: memref<6x1x32xf32, #tpu.memory_space<vmem>>, %arg19: memref<6x32x128xf32, #tpu.memory_space<vmem>>, %arg20: memref<6x1x128xf32, #tpu.memory_space<vmem>>, %arg21: memref<6x128x32xf32, #tpu.memory_space<vmem>>, %arg22: memref<6x1x32xf32, #tpu.memory_space<vmem>>, %arg23: memref<1x32xf32, #tpu.memory_space<vmem>>, %arg24: memref<1x32xf32, #tpu.memory_space<vmem>>, %arg25: memref<32x100xf32, #tpu.memory_space<vmem>>, %arg26: memref<8x100xf32, #tpu.memory_space<vmem>>, %arg27: memref<32x100xf32, #tpu.memory_space<vmem>>, %arg28: memref<1x100xf32, #tpu.memory_space<vmem>>, %arg29: memref<100x50xf32, #tpu.memory_space<vmem>>, %arg30: memref<1x50xf32, #tpu.memory_space<vmem>>, %arg31: memref<50x3xf32, #tpu.memory_space<vmem>>, %arg32: memref<1x3xf32, #tpu.memory_space<vmem>>, %arg33: memref<1x1x1xf32, #tpu.memory_space<vmem>>) attributes {dimension_semantics = [#tpu.dimension_semantics<parallel>], iteration_bounds = array<i64: 2>, scalar_prefetch = 0 : i64, scratch_operands = 0 : i64, tpu.core_type = #tpu.core_type<tc>, window_params = [{transform_indices = @transform_0, window_bounds = array<i64: 1, 8, 32>}, {transform_indices = @transform_1, window_bounds = array<i64: 1, 1, 8>}, {transform_indices = @transform_2, window_bounds = array<i64: 1, 8, 8>}, {transform_indices = @transform_3, window_bounds = array<i64: 1, 1, 32>}, {transform_indices = @transform_4, window_bounds = array<i64: 1, 8, 3>}, {transform_indices = @transform_5, window_bounds = array<i64: 1, 8, 1>}, {pipeline_mode = #tpu.pipeline_mode<synchronous>, transform_indices = @transform_6, window_bounds = array<i64: 6, 1, 32>}, {pipeline_mode = #tpu.pipeline_mode<synchronous>, transform_indices = @transform_7, window_bounds = array<i64: 6, 1, 32>}, {pipeline_mode = #tpu.pipeline_mode<synchronous>, transform_indices = @transform_8, window_bounds = array<i64: 6, 32, 32>}, {pipeline_mode = #tpu.pipeline_mode<synchronous>, transform_indices = @transform_9, window_bounds = array<i64: 6, 1, 32>}, {pipeline_mode = #tpu.pipeline_mode<synchronous>, transform_indices = @transform_10, window_bounds = array<i64: 6, 32, 32>}, {pipeline_mode = #tpu.pipeline_mode<synchronous>, transform_indices = @transform_11, window_bounds = array<i64: 6, 1, 32>}, {pipeline_mode = #tpu.pipeline_mode<synchronous>, transform_indices = @transform_12, window_bounds = array<i64: 6, 32, 32>}, {pipeline_mode = #tpu.pipeline_mode<synchronous>, transform_indices = @transform_13, window_bounds = array<i64: 6, 1, 32>}, {pipeline_mode = #tpu.pipeline_mode<synchronous>, transform_indices = @transform_14, window_bounds = array<i64: 6, 32, 32>}, {pipeline_mode = #tpu.pipeline_mode<synchronous>, transform_indices = @transform_15, window_bounds = array<i64: 6, 1, 32>}, {pipeline_mode = #tpu.pipeline_mode<synchronous>, transform_indices = @transform_16, window_bounds = array<i64: 6, 1, 32>}, {pipeline_mode = #tpu.pipeline_mode<synchronous>, transform_indices = @transform_17, window_bounds = array<i64: 6, 1, 32>}, {pipeline_mode = #tpu.pipeline_mode<synchronous>, transform_indices = @transform_18, window_bounds = array<i64: 6, 32, 128>}, {pipeline_mode = #tpu.pipeline_mode<synchronous>, transform_indices = @transform_19, window_bounds = array<i64: 6, 1, 128>}, {pipeline_mode = #tpu.pipeline_mode<synchronous>, transform_indices = @transform_20, window_bounds = array<i64: 6, 128, 32>}, {pipeline_mode = #tpu.pipeline_mode<synchronous>, transform_indices = @transform_21, window_bounds = array<i64: 6, 1, 32>}, {pipeline_mode = #tpu.pipeline_mode<synchronous>, transform_indices = @transform_22, window_bounds = array<i64: 1, 32>}, {pipeline_mode = #tpu.pipeline_mode<synchronous>, transform_indices = @transform_23, window_bounds = array<i64: 1, 32>}, {pipeline_mode = #tpu.pipeline_mode<synchronous>, transform_indices = @transform_24, window_bounds = array<i64: 32, 100>}, {pipeline_mode = #tpu.pipeline_mode<synchronous>, transform_indices = @transform_25, window_bounds = array<i64: 8, 100>}, {pipeline_mode = #tpu.pipeline_mode<synchronous>, transform_indices = @transform_26, window_bounds = array<i64: 32, 100>}, {pipeline_mode = #tpu.pipeline_mode<synchronous>, transform_indices = @transform_27, window_bounds = array<i64: 1, 100>}, {pipeline_mode = #tpu.pipeline_mode<synchronous>, transform_indices = @transform_28, window_bounds = array<i64: 100, 50>}, {pipeline_mode = #tpu.pipeline_mode<synchronous>, transform_indices = @transform_29, window_bounds = array<i64: 1, 50>}, {pipeline_mode = #tpu.pipeline_mode<synchronous>, transform_indices = @transform_30, window_bounds = array<i64: 50, 3>}, {pipeline_mode = #tpu.pipeline_mode<synchronous>, transform_indices = @transform_31, window_bounds = array<i64: 1, 3>}, {transform_indices = @transform_32, window_bounds = array<i64: 1, 1, 1>}]} {
    %0 = tpu.iota {dimensions = array<i32: 0>} : vector<8x8xi32>
    %1 = tpu.iota {dimensions = array<i32: 1>} : vector<8x8xi32>
    %c0 = arith.constant 0 : index
    %c0_0 = arith.constant 0 : index
    %c0_1 = arith.constant 0 : index
    %2 = vector.load %arg2[%c0, %c0_0, %c0_1] : memref<1x1x8xf32, #tpu.memory_space<vmem>>, vector<1x1x8xf32>
    %3 = vector.shape_cast %2 : vector<1x1x8xf32> to vector<1x8xf32>
    %cst = arith.constant 5.000000e-01 : f32
    %4 = vector.broadcast %cst : f32 to vector<1x8xf32>
    %5 = arith.cmpf ogt, %3, %4 : vector<1x8xf32>
    %6 = arith.cmpi sge, %0, %1 : vector<8x8xi32>
    %7 = vector.broadcast %5 : vector<1x8xi1> to vector<8x8xi1>
    %8 = arith.andi %6, %7 : vector<8x8xi1>
    %cst_2 = arith.constant 0.000000e+00 : f32
    %cst_3 = arith.constant -1.000000e+09 : f32
    %9 = vector.broadcast %cst_2 : f32 to vector<8x8xf32>
    %10 = vector.broadcast %cst_3 : f32 to vector<8x8xf32>
    %11 = arith.select %8, %9, %10 : vector<8x8xi1>, vector<8x8xf32>
    %12 = tpu.concatenate %11, %11, %11, %11 in 0 : vector<8x8xf32>, vector<8x8xf32>, vector<8x8xf32>, vector<8x8xf32> -> vector<32x8xf32>
    %13 = tpu.iota {dimensions = array<i32: 1>} : vector<8x32xi32>
    %c0_i32 = arith.constant 0 : i32
    %14 = vector.broadcast %c0_i32 : i32 to vector<8x32xi32>
    %15 = arith.cmpi sge, %13, %14 : vector<8x32xi32>
    %c8_i32 = arith.constant 8 : i32
    %16 = vector.broadcast %c8_i32 : i32 to vector<8x32xi32>
    %17 = arith.cmpi slt, %13, %16 : vector<8x32xi32>
    %18 = arith.andi %15, %17 : vector<8x32xi1>
    %19 = arith.extui %18 : vector<8x32xi1> to vector<8x32xi32>
    %20 = arith.sitofp %19 : vector<8x32xi32> to vector<8x32xf32>
    %c8_i32_4 = arith.constant 8 : i32
    %21 = vector.broadcast %c8_i32_4 : i32 to vector<8x32xi32>
    %22 = arith.cmpi sge, %13, %21 : vector<8x32xi32>
    %c16_i32 = arith.constant 16 : i32
    %23 = vector.broadcast %c16_i32 : i32 to vector<8x32xi32>
    %24 = arith.cmpi slt, %13, %23 : vector<8x32xi32>
    %25 = arith.andi %22, %24 : vector<8x32xi1>
    %26 = arith.extui %25 : vector<8x32xi1> to vector<8x32xi32>
    %27 = arith.sitofp %26 : vector<8x32xi32> to vector<8x32xf32>
    %c16_i32_5 = arith.constant 16 : i32
    %28 = vector.broadcast %c16_i32_5 : i32 to vector<8x32xi32>
    %29 = arith.cmpi sge, %13, %28 : vector<8x32xi32>
    %c24_i32 = arith.constant 24 : i32
    %30 = vector.broadcast %c24_i32 : i32 to vector<8x32xi32>
    %31 = arith.cmpi slt, %13, %30 : vector<8x32xi32>
    %32 = arith.andi %29, %31 : vector<8x32xi1>
    %33 = arith.extui %32 : vector<8x32xi1> to vector<8x32xi32>
    %34 = arith.sitofp %33 : vector<8x32xi32> to vector<8x32xf32>
    %c24_i32_6 = arith.constant 24 : i32
    %35 = vector.broadcast %c24_i32_6 : i32 to vector<8x32xi32>
    %36 = arith.cmpi sge, %13, %35 : vector<8x32xi32>
    %c32_i32 = arith.constant 32 : i32
    %37 = vector.broadcast %c32_i32 : i32 to vector<8x32xi32>
    %38 = arith.cmpi slt, %13, %37 : vector<8x32xi32>
    %39 = arith.andi %36, %38 : vector<8x32xi1>
    %40 = arith.extui %39 : vector<8x32xi1> to vector<8x32xi32>
    %41 = arith.sitofp %40 : vector<8x32xi32> to vector<8x32xf32>
    %42 = tpu.concatenate %20, %27, %34, %41 in 0 : vector<8x32xf32>, vector<8x32xf32>, vector<8x32xf32>, vector<8x32xf32> -> vector<32x32xf32>
    %c0_7 = arith.constant 0 : index
    %c0_8 = arith.constant 0 : index
    %c0_9 = arith.constant 0 : index
    %43 = vector.load %arg1[%c0_7, %c0_8, %c0_9] : memref<1x8x32xf32, #tpu.memory_space<vmem>>, vector<1x8x32xf32>
    %44 = vector.shape_cast %43 : vector<1x8x32xf32> to vector<8x32xf32>
    %c0_10 = arith.constant 0 : index
    %c0_11 = arith.constant 0 : index
    %c0_12 = arith.constant 0 : index
    %45 = vector.load %arg7[%c0_10, %c0_11, %c0_12] : memref<6x1x32xf32, #tpu.memory_space<vmem>>, vector<1x1x32xf32>
    %46 = vector.shape_cast %45 : vector<1x1x32xf32> to vector<1x32xf32>
    %c0_13 = arith.constant 0 : index
    %c0_14 = arith.constant 0 : index
    %c0_15 = arith.constant 0 : index
    %47 = vector.load %arg8[%c0_13, %c0_14, %c0_15] : memref<6x1x32xf32, #tpu.memory_space<vmem>>, vector<1x1x32xf32>
    %48 = vector.shape_cast %47 : vector<1x1x32xf32> to vector<1x32xf32>
    %49 = arith.mulf %44, %44 : vector<8x32xf32>
    %50 = tpu.concatenate %44, %49 in 0 : vector<8x32xf32>, vector<8x32xf32> -> vector<16x32xf32>
    %cst_16 = arith.constant dense<0.000000e+00> : vector<16xf32>
    %51 = vector.multi_reduction <add>, %50, %cst_16 [1] : vector<16x32xf32> to vector<16xf32>
    %52 = vector.shape_cast %51 : vector<16xf32> to vector<16x1xf32>
    %53 = vector.extract_strided_slice %52 {offsets = [0, 0], sizes = [8, 1], strides = [1, 1]} : vector<16x1xf32> to vector<8x1xf32>
    %cst_17 = arith.constant 3.125000e-02 : f32
    %54 = vector.broadcast %cst_17 : f32 to vector<8x1xf32>
    %55 = arith.mulf %53, %54 : vector<8x1xf32>
    %56 = vector.extract_strided_slice %52 {offsets = [8, 0], sizes = [8, 1], strides = [1, 1]} : vector<16x1xf32> to vector<8x1xf32>
    %cst_18 = arith.constant 3.125000e-02 : f32
    %57 = vector.broadcast %cst_18 : f32 to vector<8x1xf32>
    %58 = arith.mulf %56, %57 : vector<8x1xf32>
    %59 = arith.mulf %55, %55 : vector<8x1xf32>
    %60 = arith.subf %58, %59 : vector<8x1xf32>
    %61 = vector.broadcast %55 : vector<8x1xf32> to vector<8x32xf32>
    %62 = arith.subf %44, %61 : vector<8x32xf32>
    %cst_19 = arith.constant 9.99999974E-6 : f32
    %63 = vector.broadcast %cst_19 : f32 to vector<8x1xf32>
    %64 = arith.addf %60, %63 : vector<8x1xf32>
    %65 = math.rsqrt %64 : vector<8x1xf32>
    %66 = vector.broadcast %65 : vector<8x1xf32> to vector<8x32xf32>
    %67 = arith.mulf %62, %66 : vector<8x32xf32>
    %68 = vector.broadcast %46 : vector<1x32xf32> to vector<8x32xf32>
    %69 = arith.mulf %67, %68 : vector<8x32xf32>
    %70 = vector.broadcast %48 : vector<1x32xf32> to vector<8x32xf32>
    %71 = arith.addf %69, %70 : vector<8x32xf32>
    %c0_20 = arith.constant 0 : index
    %c0_21 = arith.constant 0 : index
    %c0_22 = arith.constant 0 : index
    %72 = vector.load %arg9[%c0_20, %c0_21, %c0_22] : memref<6x32x32xf32, #tpu.memory_space<vmem>>, vector<1x32x32xf32>
    %73 = vector.shape_cast %72 : vector<1x32x32xf32> to vector<32x32xf32>
    %cst_23 = arith.constant dense<0.000000e+00> : vector<8x32xf32>
    %74 = tpu.matmul %71, %73, %cst_23 {dimension_numbers = #tpu.dot_dimension_numbers<[1], [0], [0], [1], [0, 0, 1, 1], [], []>} : vector<8x32xf32>, vector<32x32xf32>, vector<8x32xf32> -> vector<8x32xf32>
    %c0_24 = arith.constant 0 : index
    %c0_25 = arith.constant 0 : index
    %c0_26 = arith.constant 0 : index
    %75 = vector.load %arg10[%c0_24, %c0_25, %c0_26] : memref<6x1x32xf32, #tpu.memory_space<vmem>>, vector<1x1x32xf32>
    %76 = vector.shape_cast %75 : vector<1x1x32xf32> to vector<1x32xf32>
    %77 = vector.broadcast %76 : vector<1x32xf32> to vector<8x32xf32>
    %78 = arith.addf %74, %77 : vector<8x32xf32>
    %c0_27 = arith.constant 0 : index
    %c0_28 = arith.constant 0 : index
    %c0_29 = arith.constant 0 : index
    %79 = vector.load %arg11[%c0_27, %c0_28, %c0_29] : memref<6x32x32xf32, #tpu.memory_space<vmem>>, vector<1x32x32xf32>
    %80 = vector.shape_cast %79 : vector<1x32x32xf32> to vector<32x32xf32>
    %cst_30 = arith.constant dense<0.000000e+00> : vector<8x32xf32>
    %81 = tpu.matmul %71, %80, %cst_30 {dimension_numbers = #tpu.dot_dimension_numbers<[1], [0], [0], [1], [0, 0, 1, 1], [], []>} : vector<8x32xf32>, vector<32x32xf32>, vector<8x32xf32> -> vector<8x32xf32>
    %c0_31 = arith.constant 0 : index
    %c0_32 = arith.constant 0 : index
    %c0_33 = arith.constant 0 : index
    %82 = vector.load %arg12[%c0_31, %c0_32, %c0_33] : memref<6x1x32xf32, #tpu.memory_space<vmem>>, vector<1x1x32xf32>
    %83 = vector.shape_cast %82 : vector<1x1x32xf32> to vector<1x32xf32>
    %84 = vector.broadcast %83 : vector<1x32xf32> to vector<8x32xf32>
    %85 = arith.addf %81, %84 : vector<8x32xf32>
    %c0_34 = arith.constant 0 : index
    %c0_35 = arith.constant 0 : index
    %c0_36 = arith.constant 0 : index
    %86 = vector.load %arg13[%c0_34, %c0_35, %c0_36] : memref<6x32x32xf32, #tpu.memory_space<vmem>>, vector<1x32x32xf32>
    %87 = vector.shape_cast %86 : vector<1x32x32xf32> to vector<32x32xf32>
    %cst_37 = arith.constant dense<0.000000e+00> : vector<8x32xf32>
    %88 = tpu.matmul %71, %87, %cst_37 {dimension_numbers = #tpu.dot_dimension_numbers<[1], [0], [0], [1], [0, 0, 1, 1], [], []>} : vector<8x32xf32>, vector<32x32xf32>, vector<8x32xf32> -> vector<8x32xf32>
    %c0_38 = arith.constant 0 : index
    %c0_39 = arith.constant 0 : index
    %c0_40 = arith.constant 0 : index
    %89 = vector.load %arg14[%c0_38, %c0_39, %c0_40] : memref<6x1x32xf32, #tpu.memory_space<vmem>>, vector<1x1x32xf32>
    %90 = vector.shape_cast %89 : vector<1x1x32xf32> to vector<1x32xf32>
    %91 = vector.broadcast %90 : vector<1x32xf32> to vector<8x32xf32>
    %92 = arith.addf %88, %91 : vector<8x32xf32>
    %93 = tpu.concatenate %78, %78, %78, %78 in 0 : vector<8x32xf32>, vector<8x32xf32>, vector<8x32xf32>, vector<8x32xf32> -> vector<32x32xf32>
    %94 = arith.mulf %93, %42 : vector<32x32xf32>
    %cst_41 = arith.constant dense<0.000000e+00> : vector<32x8xf32>
    %95 = tpu.matmul %94, %85, %cst_41 {dimension_numbers = #tpu.dot_dimension_numbers<[1], [1], [0], [0], [0, 0, 1, 0], [], []>} : vector<32x32xf32>, vector<8x32xf32>, vector<32x8xf32> -> vector<32x8xf32>
    %96 = arith.addf %95, %12 : vector<32x8xf32>
    %cst_42 = arith.constant dense<0xFF800000> : vector<32xf32>
    %97 = vector.multi_reduction <maximumf>, %96, %cst_42 [1] : vector<32x8xf32> to vector<32xf32>
    %98 = vector.shape_cast %97 : vector<32xf32> to vector<32x1xf32>
    %99 = vector.broadcast %98 : vector<32x1xf32> to vector<32x8xf32>
    %100 = arith.subf %96, %99 : vector<32x8xf32>
    %101 = math.exp %100 : vector<32x8xf32>
    %cst_43 = arith.constant dense<0.000000e+00> : vector<32xf32>
    %102 = vector.multi_reduction <add>, %101, %cst_43 [1] : vector<32x8xf32> to vector<32xf32>
    %103 = vector.shape_cast %102 : vector<32xf32> to vector<32x1xf32>
    %104 = tpu.reciprocal %103 {approx = true} : vector<32x1xf32> -> vector<32x1xf32>
    %105 = vector.broadcast %104 : vector<32x1xf32> to vector<32x8xf32>
    %106 = arith.mulf %101, %105 : vector<32x8xf32>
    %cst_44 = arith.constant dense<0.000000e+00> : vector<32x32xf32>
    %107 = tpu.matmul %106, %92, %cst_44 {dimension_numbers = #tpu.dot_dimension_numbers<[1], [0], [0], [1], [0, 0, 1, 1], [], []>} : vector<32x8xf32>, vector<8x32xf32>, vector<32x32xf32> -> vector<32x32xf32>
    %108 = arith.mulf %107, %42 : vector<32x32xf32>
    %c0_45 = arith.constant 0 : index
    %c0_46 = arith.constant 0 : index
    %c0_47 = arith.constant 0 : index
    %109 = vector.load %arg15[%c0_45, %c0_46, %c0_47] : memref<6x32x32xf32, #tpu.memory_space<vmem>>, vector<1x32x32xf32>
    %110 = vector.shape_cast %109 : vector<1x32x32xf32> to vector<32x32xf32>
    %cst_48 = arith.constant dense<0.000000e+00> : vector<32x32xf32>
    %111 = tpu.matmul %108, %110, %cst_48 {dimension_numbers = #tpu.dot_dimension_numbers<[1], [0], [0], [1], [0, 0, 1, 1], [], []>} : vector<32x32xf32>, vector<32x32xf32>, vector<32x32xf32> -> vector<32x32xf32>
    %112 = vector.extract_strided_slice %111 {offsets = [0, 0], sizes = [8, 32], strides = [1, 1]} : vector<32x32xf32> to vector<8x32xf32>
    %113 = vector.extract_strided_slice %111 {offsets = [8, 0], sizes = [8, 32], strides = [1, 1]} : vector<32x32xf32> to vector<8x32xf32>
    %114 = arith.addf %112, %113 : vector<8x32xf32>
    %115 = vector.extract_strided_slice %111 {offsets = [16, 0], sizes = [8, 32], strides = [1, 1]} : vector<32x32xf32> to vector<8x32xf32>
    %116 = arith.addf %114, %115 : vector<8x32xf32>
    %117 = vector.extract_strided_slice %111 {offsets = [24, 0], sizes = [8, 32], strides = [1, 1]} : vector<32x32xf32> to vector<8x32xf32>
    %118 = arith.addf %116, %117 : vector<8x32xf32>
    %119 = arith.addf %44, %118 : vector<8x32xf32>
    %c0_49 = arith.constant 0 : index
    %c0_50 = arith.constant 0 : index
    %c0_51 = arith.constant 0 : index
    %120 = vector.load %arg16[%c0_49, %c0_50, %c0_51] : memref<6x1x32xf32, #tpu.memory_space<vmem>>, vector<1x1x32xf32>
    %121 = vector.shape_cast %120 : vector<1x1x32xf32> to vector<1x32xf32>
    %122 = vector.broadcast %121 : vector<1x32xf32> to vector<8x32xf32>
    %123 = arith.addf %119, %122 : vector<8x32xf32>
    %c0_52 = arith.constant 0 : index
    %c0_53 = arith.constant 0 : index
    %c0_54 = arith.constant 0 : index
    %124 = vector.load %arg17[%c0_52, %c0_53, %c0_54] : memref<6x1x32xf32, #tpu.memory_space<vmem>>, vector<1x1x32xf32>
    %125 = vector.shape_cast %124 : vector<1x1x32xf32> to vector<1x32xf32>
    %c0_55 = arith.constant 0 : index
    %c0_56 = arith.constant 0 : index
    %c0_57 = arith.constant 0 : index
    %126 = vector.load %arg18[%c0_55, %c0_56, %c0_57] : memref<6x1x32xf32, #tpu.memory_space<vmem>>, vector<1x1x32xf32>
    %127 = vector.shape_cast %126 : vector<1x1x32xf32> to vector<1x32xf32>
    %128 = arith.mulf %123, %123 : vector<8x32xf32>
    %129 = tpu.concatenate %123, %128 in 0 : vector<8x32xf32>, vector<8x32xf32> -> vector<16x32xf32>
    %cst_58 = arith.constant dense<0.000000e+00> : vector<16xf32>
    %130 = vector.multi_reduction <add>, %129, %cst_58 [1] : vector<16x32xf32> to vector<16xf32>
    %131 = vector.shape_cast %130 : vector<16xf32> to vector<16x1xf32>
    %132 = vector.extract_strided_slice %131 {offsets = [0, 0], sizes = [8, 1], strides = [1, 1]} : vector<16x1xf32> to vector<8x1xf32>
    %cst_59 = arith.constant 3.125000e-02 : f32
    %133 = vector.broadcast %cst_59 : f32 to vector<8x1xf32>
    %134 = arith.mulf %132, %133 : vector<8x1xf32>
    %135 = vector.extract_strided_slice %131 {offsets = [8, 0], sizes = [8, 1], strides = [1, 1]} : vector<16x1xf32> to vector<8x1xf32>
    %cst_60 = arith.constant 3.125000e-02 : f32
    %136 = vector.broadcast %cst_60 : f32 to vector<8x1xf32>
    %137 = arith.mulf %135, %136 : vector<8x1xf32>
    %138 = arith.mulf %134, %134 : vector<8x1xf32>
    %139 = arith.subf %137, %138 : vector<8x1xf32>
    %140 = vector.broadcast %134 : vector<8x1xf32> to vector<8x32xf32>
    %141 = arith.subf %123, %140 : vector<8x32xf32>
    %cst_61 = arith.constant 9.99999974E-6 : f32
    %142 = vector.broadcast %cst_61 : f32 to vector<8x1xf32>
    %143 = arith.addf %139, %142 : vector<8x1xf32>
    %144 = math.rsqrt %143 : vector<8x1xf32>
    %145 = vector.broadcast %144 : vector<8x1xf32> to vector<8x32xf32>
    %146 = arith.mulf %141, %145 : vector<8x32xf32>
    %147 = vector.broadcast %125 : vector<1x32xf32> to vector<8x32xf32>
    %148 = arith.mulf %146, %147 : vector<8x32xf32>
    %149 = vector.broadcast %127 : vector<1x32xf32> to vector<8x32xf32>
    %150 = arith.addf %148, %149 : vector<8x32xf32>
    %c0_62 = arith.constant 0 : index
    %c0_63 = arith.constant 0 : index
    %c0_64 = arith.constant 0 : index
    %151 = vector.load %arg19[%c0_62, %c0_63, %c0_64] : memref<6x32x128xf32, #tpu.memory_space<vmem>>, vector<1x32x128xf32>
    %152 = vector.shape_cast %151 : vector<1x32x128xf32> to vector<32x128xf32>
    %cst_65 = arith.constant dense<0.000000e+00> : vector<8x128xf32>
    %153 = tpu.matmul %150, %152, %cst_65 {dimension_numbers = #tpu.dot_dimension_numbers<[1], [0], [0], [1], [0, 0, 1, 1], [], []>} : vector<8x32xf32>, vector<32x128xf32>, vector<8x128xf32> -> vector<8x128xf32>
    %c0_66 = arith.constant 0 : index
    %c0_67 = arith.constant 0 : index
    %c0_68 = arith.constant 0 : index
    %154 = vector.load %arg20[%c0_66, %c0_67, %c0_68] : memref<6x1x128xf32, #tpu.memory_space<vmem>>, vector<1x1x128xf32>
    %155 = vector.shape_cast %154 : vector<1x1x128xf32> to vector<1x128xf32>
    %156 = vector.broadcast %155 : vector<1x128xf32> to vector<8x128xf32>
    %157 = arith.addf %153, %156 : vector<8x128xf32>
    %cst_69 = arith.constant 5.000000e-01 : f32
    %158 = vector.broadcast %cst_69 : f32 to vector<8x128xf32>
    %159 = arith.mulf %158, %157 : vector<8x128xf32>
    %cst_70 = arith.constant 4.471500e-02 : f32
    %160 = vector.broadcast %cst_70 : f32 to vector<8x128xf32>
    %161 = arith.mulf %160, %157 : vector<8x128xf32>
    %162 = arith.mulf %161, %157 : vector<8x128xf32>
    %163 = arith.mulf %162, %157 : vector<8x128xf32>
    %164 = arith.addf %157, %163 : vector<8x128xf32>
    %cst_71 = arith.constant 0.797884583 : f32
    %165 = vector.broadcast %cst_71 : f32 to vector<8x128xf32>
    %166 = arith.mulf %165, %164 : vector<8x128xf32>
    %167 = math.tanh %166 : vector<8x128xf32>
    %cst_72 = arith.constant 1.000000e+00 : f32
    %168 = vector.broadcast %cst_72 : f32 to vector<8x128xf32>
    %169 = arith.addf %168, %167 : vector<8x128xf32>
    %170 = arith.mulf %159, %169 : vector<8x128xf32>
    %c0_73 = arith.constant 0 : index
    %c0_74 = arith.constant 0 : index
    %c0_75 = arith.constant 0 : index
    %171 = vector.load %arg21[%c0_73, %c0_74, %c0_75] : memref<6x128x32xf32, #tpu.memory_space<vmem>>, vector<1x128x32xf32>
    %172 = vector.shape_cast %171 : vector<1x128x32xf32> to vector<128x32xf32>
    %cst_76 = arith.constant dense<0.000000e+00> : vector<8x32xf32>
    %173 = tpu.matmul %170, %172, %cst_76 {dimension_numbers = #tpu.dot_dimension_numbers<[1], [0], [0], [1], [0, 0, 1, 1], [], []>} : vector<8x128xf32>, vector<128x32xf32>, vector<8x32xf32> -> vector<8x32xf32>
    %174 = arith.addf %123, %173 : vector<8x32xf32>
    %c0_77 = arith.constant 0 : index
    %c0_78 = arith.constant 0 : index
    %c0_79 = arith.constant 0 : index
    %175 = vector.load %arg22[%c0_77, %c0_78, %c0_79] : memref<6x1x32xf32, #tpu.memory_space<vmem>>, vector<1x1x32xf32>
    %176 = vector.shape_cast %175 : vector<1x1x32xf32> to vector<1x32xf32>
    %177 = vector.broadcast %176 : vector<1x32xf32> to vector<8x32xf32>
    %178 = arith.addf %174, %177 : vector<8x32xf32>
    %c1 = arith.constant 1 : index
    %c0_80 = arith.constant 0 : index
    %c0_81 = arith.constant 0 : index
    %179 = vector.load %arg7[%c1, %c0_80, %c0_81] : memref<6x1x32xf32, #tpu.memory_space<vmem>>, vector<1x1x32xf32>
    %180 = vector.shape_cast %179 : vector<1x1x32xf32> to vector<1x32xf32>
    %c1_82 = arith.constant 1 : index
    %c0_83 = arith.constant 0 : index
    %c0_84 = arith.constant 0 : index
    %181 = vector.load %arg8[%c1_82, %c0_83, %c0_84] : memref<6x1x32xf32, #tpu.memory_space<vmem>>, vector<1x1x32xf32>
    %182 = vector.shape_cast %181 : vector<1x1x32xf32> to vector<1x32xf32>
    %183 = arith.mulf %178, %178 : vector<8x32xf32>
    %184 = tpu.concatenate %178, %183 in 0 : vector<8x32xf32>, vector<8x32xf32> -> vector<16x32xf32>
    %cst_85 = arith.constant dense<0.000000e+00> : vector<16xf32>
    %185 = vector.multi_reduction <add>, %184, %cst_85 [1] : vector<16x32xf32> to vector<16xf32>
    %186 = vector.shape_cast %185 : vector<16xf32> to vector<16x1xf32>
    %187 = vector.extract_strided_slice %186 {offsets = [0, 0], sizes = [8, 1], strides = [1, 1]} : vector<16x1xf32> to vector<8x1xf32>
    %cst_86 = arith.constant 3.125000e-02 : f32
    %188 = vector.broadcast %cst_86 : f32 to vector<8x1xf32>
    %189 = arith.mulf %187, %188 : vector<8x1xf32>
    %190 = vector.extract_strided_slice %186 {offsets = [8, 0], sizes = [8, 1], strides = [1, 1]} : vector<16x1xf32> to vector<8x1xf32>
    %cst_87 = arith.constant 3.125000e-02 : f32
    %191 = vector.broadcast %cst_87 : f32 to vector<8x1xf32>
    %192 = arith.mulf %190, %191 : vector<8x1xf32>
    %193 = arith.mulf %189, %189 : vector<8x1xf32>
    %194 = arith.subf %192, %193 : vector<8x1xf32>
    %195 = vector.broadcast %189 : vector<8x1xf32> to vector<8x32xf32>
    %196 = arith.subf %178, %195 : vector<8x32xf32>
    %cst_88 = arith.constant 9.99999974E-6 : f32
    %197 = vector.broadcast %cst_88 : f32 to vector<8x1xf32>
    %198 = arith.addf %194, %197 : vector<8x1xf32>
    %199 = math.rsqrt %198 : vector<8x1xf32>
    %200 = vector.broadcast %199 : vector<8x1xf32> to vector<8x32xf32>
    %201 = arith.mulf %196, %200 : vector<8x32xf32>
    %202 = vector.broadcast %180 : vector<1x32xf32> to vector<8x32xf32>
    %203 = arith.mulf %201, %202 : vector<8x32xf32>
    %204 = vector.broadcast %182 : vector<1x32xf32> to vector<8x32xf32>
    %205 = arith.addf %203, %204 : vector<8x32xf32>
    %c1_89 = arith.constant 1 : index
    %c0_90 = arith.constant 0 : index
    %c0_91 = arith.constant 0 : index
    %206 = vector.load %arg9[%c1_89, %c0_90, %c0_91] : memref<6x32x32xf32, #tpu.memory_space<vmem>>, vector<1x32x32xf32>
    %207 = vector.shape_cast %206 : vector<1x32x32xf32> to vector<32x32xf32>
    %cst_92 = arith.constant dense<0.000000e+00> : vector<8x32xf32>
    %208 = tpu.matmul %205, %207, %cst_92 {dimension_numbers = #tpu.dot_dimension_numbers<[1], [0], [0], [1], [0, 0, 1, 1], [], []>} : vector<8x32xf32>, vector<32x32xf32>, vector<8x32xf32> -> vector<8x32xf32>
    %c1_93 = arith.constant 1 : index
    %c0_94 = arith.constant 0 : index
    %c0_95 = arith.constant 0 : index
    %209 = vector.load %arg10[%c1_93, %c0_94, %c0_95] : memref<6x1x32xf32, #tpu.memory_space<vmem>>, vector<1x1x32xf32>
    %210 = vector.shape_cast %209 : vector<1x1x32xf32> to vector<1x32xf32>
    %211 = vector.broadcast %210 : vector<1x32xf32> to vector<8x32xf32>
    %212 = arith.addf %208, %211 : vector<8x32xf32>
    %c1_96 = arith.constant 1 : index
    %c0_97 = arith.constant 0 : index
    %c0_98 = arith.constant 0 : index
    %213 = vector.load %arg11[%c1_96, %c0_97, %c0_98] : memref<6x32x32xf32, #tpu.memory_space<vmem>>, vector<1x32x32xf32>
    %214 = vector.shape_cast %213 : vector<1x32x32xf32> to vector<32x32xf32>
    %cst_99 = arith.constant dense<0.000000e+00> : vector<8x32xf32>
    %215 = tpu.matmul %205, %214, %cst_99 {dimension_numbers = #tpu.dot_dimension_numbers<[1], [0], [0], [1], [0, 0, 1, 1], [], []>} : vector<8x32xf32>, vector<32x32xf32>, vector<8x32xf32> -> vector<8x32xf32>
    %c1_100 = arith.constant 1 : index
    %c0_101 = arith.constant 0 : index
    %c0_102 = arith.constant 0 : index
    %216 = vector.load %arg12[%c1_100, %c0_101, %c0_102] : memref<6x1x32xf32, #tpu.memory_space<vmem>>, vector<1x1x32xf32>
    %217 = vector.shape_cast %216 : vector<1x1x32xf32> to vector<1x32xf32>
    %218 = vector.broadcast %217 : vector<1x32xf32> to vector<8x32xf32>
    %219 = arith.addf %215, %218 : vector<8x32xf32>
    %c1_103 = arith.constant 1 : index
    %c0_104 = arith.constant 0 : index
    %c0_105 = arith.constant 0 : index
    %220 = vector.load %arg13[%c1_103, %c0_104, %c0_105] : memref<6x32x32xf32, #tpu.memory_space<vmem>>, vector<1x32x32xf32>
    %221 = vector.shape_cast %220 : vector<1x32x32xf32> to vector<32x32xf32>
    %cst_106 = arith.constant dense<0.000000e+00> : vector<8x32xf32>
    %222 = tpu.matmul %205, %221, %cst_106 {dimension_numbers = #tpu.dot_dimension_numbers<[1], [0], [0], [1], [0, 0, 1, 1], [], []>} : vector<8x32xf32>, vector<32x32xf32>, vector<8x32xf32> -> vector<8x32xf32>
    %c1_107 = arith.constant 1 : index
    %c0_108 = arith.constant 0 : index
    %c0_109 = arith.constant 0 : index
    %223 = vector.load %arg14[%c1_107, %c0_108, %c0_109] : memref<6x1x32xf32, #tpu.memory_space<vmem>>, vector<1x1x32xf32>
    %224 = vector.shape_cast %223 : vector<1x1x32xf32> to vector<1x32xf32>
    %225 = vector.broadcast %224 : vector<1x32xf32> to vector<8x32xf32>
    %226 = arith.addf %222, %225 : vector<8x32xf32>
    %227 = tpu.concatenate %212, %212, %212, %212 in 0 : vector<8x32xf32>, vector<8x32xf32>, vector<8x32xf32>, vector<8x32xf32> -> vector<32x32xf32>
    %228 = arith.mulf %227, %42 : vector<32x32xf32>
    %cst_110 = arith.constant dense<0.000000e+00> : vector<32x8xf32>
    %229 = tpu.matmul %228, %219, %cst_110 {dimension_numbers = #tpu.dot_dimension_numbers<[1], [1], [0], [0], [0, 0, 1, 0], [], []>} : vector<32x32xf32>, vector<8x32xf32>, vector<32x8xf32> -> vector<32x8xf32>
    %230 = arith.addf %229, %12 : vector<32x8xf32>
    %cst_111 = arith.constant dense<0xFF800000> : vector<32xf32>
    %231 = vector.multi_reduction <maximumf>, %230, %cst_111 [1] : vector<32x8xf32> to vector<32xf32>
    %232 = vector.shape_cast %231 : vector<32xf32> to vector<32x1xf32>
    %233 = vector.broadcast %232 : vector<32x1xf32> to vector<32x8xf32>
    %234 = arith.subf %230, %233 : vector<32x8xf32>
    %235 = math.exp %234 : vector<32x8xf32>
    %cst_112 = arith.constant dense<0.000000e+00> : vector<32xf32>
    %236 = vector.multi_reduction <add>, %235, %cst_112 [1] : vector<32x8xf32> to vector<32xf32>
    %237 = vector.shape_cast %236 : vector<32xf32> to vector<32x1xf32>
    %238 = tpu.reciprocal %237 {approx = true} : vector<32x1xf32> -> vector<32x1xf32>
    %239 = vector.broadcast %238 : vector<32x1xf32> to vector<32x8xf32>
    %240 = arith.mulf %235, %239 : vector<32x8xf32>
    %cst_113 = arith.constant dense<0.000000e+00> : vector<32x32xf32>
    %241 = tpu.matmul %240, %226, %cst_113 {dimension_numbers = #tpu.dot_dimension_numbers<[1], [0], [0], [1], [0, 0, 1, 1], [], []>} : vector<32x8xf32>, vector<8x32xf32>, vector<32x32xf32> -> vector<32x32xf32>
    %242 = arith.mulf %241, %42 : vector<32x32xf32>
    %c1_114 = arith.constant 1 : index
    %c0_115 = arith.constant 0 : index
    %c0_116 = arith.constant 0 : index
    %243 = vector.load %arg15[%c1_114, %c0_115, %c0_116] : memref<6x32x32xf32, #tpu.memory_space<vmem>>, vector<1x32x32xf32>
    %244 = vector.shape_cast %243 : vector<1x32x32xf32> to vector<32x32xf32>
    %cst_117 = arith.constant dense<0.000000e+00> : vector<32x32xf32>
    %245 = tpu.matmul %242, %244, %cst_117 {dimension_numbers = #tpu.dot_dimension_numbers<[1], [0], [0], [1], [0, 0, 1, 1], [], []>} : vector<32x32xf32>, vector<32x32xf32>, vector<32x32xf32> -> vector<32x32xf32>
    %246 = vector.extract_strided_slice %245 {offsets = [0, 0], sizes = [8, 32], strides = [1, 1]} : vector<32x32xf32> to vector<8x32xf32>
    %247 = vector.extract_strided_slice %245 {offsets = [8, 0], sizes = [8, 32], strides = [1, 1]} : vector<32x32xf32> to vector<8x32xf32>
    %248 = arith.addf %246, %247 : vector<8x32xf32>
    %249 = vector.extract_strided_slice %245 {offsets = [16, 0], sizes = [8, 32], strides = [1, 1]} : vector<32x32xf32> to vector<8x32xf32>
    %250 = arith.addf %248, %249 : vector<8x32xf32>
    %251 = vector.extract_strided_slice %245 {offsets = [24, 0], sizes = [8, 32], strides = [1, 1]} : vector<32x32xf32> to vector<8x32xf32>
    %252 = arith.addf %250, %251 : vector<8x32xf32>
    %253 = arith.addf %178, %252 : vector<8x32xf32>
    %c1_118 = arith.constant 1 : index
    %c0_119 = arith.constant 0 : index
    %c0_120 = arith.constant 0 : index
    %254 = vector.load %arg16[%c1_118, %c0_119, %c0_120] : memref<6x1x32xf32, #tpu.memory_space<vmem>>, vector<1x1x32xf32>
    %255 = vector.shape_cast %254 : vector<1x1x32xf32> to vector<1x32xf32>
    %256 = vector.broadcast %255 : vector<1x32xf32> to vector<8x32xf32>
    %257 = arith.addf %253, %256 : vector<8x32xf32>
    %c1_121 = arith.constant 1 : index
    %c0_122 = arith.constant 0 : index
    %c0_123 = arith.constant 0 : index
    %258 = vector.load %arg17[%c1_121, %c0_122, %c0_123] : memref<6x1x32xf32, #tpu.memory_space<vmem>>, vector<1x1x32xf32>
    %259 = vector.shape_cast %258 : vector<1x1x32xf32> to vector<1x32xf32>
    %c1_124 = arith.constant 1 : index
    %c0_125 = arith.constant 0 : index
    %c0_126 = arith.constant 0 : index
    %260 = vector.load %arg18[%c1_124, %c0_125, %c0_126] : memref<6x1x32xf32, #tpu.memory_space<vmem>>, vector<1x1x32xf32>
    %261 = vector.shape_cast %260 : vector<1x1x32xf32> to vector<1x32xf32>
    %262 = arith.mulf %257, %257 : vector<8x32xf32>
    %263 = tpu.concatenate %257, %262 in 0 : vector<8x32xf32>, vector<8x32xf32> -> vector<16x32xf32>
    %cst_127 = arith.constant dense<0.000000e+00> : vector<16xf32>
    %264 = vector.multi_reduction <add>, %263, %cst_127 [1] : vector<16x32xf32> to vector<16xf32>
    %265 = vector.shape_cast %264 : vector<16xf32> to vector<16x1xf32>
    %266 = vector.extract_strided_slice %265 {offsets = [0, 0], sizes = [8, 1], strides = [1, 1]} : vector<16x1xf32> to vector<8x1xf32>
    %cst_128 = arith.constant 3.125000e-02 : f32
    %267 = vector.broadcast %cst_128 : f32 to vector<8x1xf32>
    %268 = arith.mulf %266, %267 : vector<8x1xf32>
    %269 = vector.extract_strided_slice %265 {offsets = [8, 0], sizes = [8, 1], strides = [1, 1]} : vector<16x1xf32> to vector<8x1xf32>
    %cst_129 = arith.constant 3.125000e-02 : f32
    %270 = vector.broadcast %cst_129 : f32 to vector<8x1xf32>
    %271 = arith.mulf %269, %270 : vector<8x1xf32>
    %272 = arith.mulf %268, %268 : vector<8x1xf32>
    %273 = arith.subf %271, %272 : vector<8x1xf32>
    %274 = vector.broadcast %268 : vector<8x1xf32> to vector<8x32xf32>
    %275 = arith.subf %257, %274 : vector<8x32xf32>
    %cst_130 = arith.constant 9.99999974E-6 : f32
    %276 = vector.broadcast %cst_130 : f32 to vector<8x1xf32>
    %277 = arith.addf %273, %276 : vector<8x1xf32>
    %278 = math.rsqrt %277 : vector<8x1xf32>
    %279 = vector.broadcast %278 : vector<8x1xf32> to vector<8x32xf32>
    %280 = arith.mulf %275, %279 : vector<8x32xf32>
    %281 = vector.broadcast %259 : vector<1x32xf32> to vector<8x32xf32>
    %282 = arith.mulf %280, %281 : vector<8x32xf32>
    %283 = vector.broadcast %261 : vector<1x32xf32> to vector<8x32xf32>
    %284 = arith.addf %282, %283 : vector<8x32xf32>
    %c1_131 = arith.constant 1 : index
    %c0_132 = arith.constant 0 : index
    %c0_133 = arith.constant 0 : index
    %285 = vector.load %arg19[%c1_131, %c0_132, %c0_133] : memref<6x32x128xf32, #tpu.memory_space<vmem>>, vector<1x32x128xf32>
    %286 = vector.shape_cast %285 : vector<1x32x128xf32> to vector<32x128xf32>
    %cst_134 = arith.constant dense<0.000000e+00> : vector<8x128xf32>
    %287 = tpu.matmul %284, %286, %cst_134 {dimension_numbers = #tpu.dot_dimension_numbers<[1], [0], [0], [1], [0, 0, 1, 1], [], []>} : vector<8x32xf32>, vector<32x128xf32>, vector<8x128xf32> -> vector<8x128xf32>
    %c1_135 = arith.constant 1 : index
    %c0_136 = arith.constant 0 : index
    %c0_137 = arith.constant 0 : index
    %288 = vector.load %arg20[%c1_135, %c0_136, %c0_137] : memref<6x1x128xf32, #tpu.memory_space<vmem>>, vector<1x1x128xf32>
    %289 = vector.shape_cast %288 : vector<1x1x128xf32> to vector<1x128xf32>
    %290 = vector.broadcast %289 : vector<1x128xf32> to vector<8x128xf32>
    %291 = arith.addf %287, %290 : vector<8x128xf32>
    %cst_138 = arith.constant 5.000000e-01 : f32
    %292 = vector.broadcast %cst_138 : f32 to vector<8x128xf32>
    %293 = arith.mulf %292, %291 : vector<8x128xf32>
    %cst_139 = arith.constant 4.471500e-02 : f32
    %294 = vector.broadcast %cst_139 : f32 to vector<8x128xf32>
    %295 = arith.mulf %294, %291 : vector<8x128xf32>
    %296 = arith.mulf %295, %291 : vector<8x128xf32>
    %297 = arith.mulf %296, %291 : vector<8x128xf32>
    %298 = arith.addf %291, %297 : vector<8x128xf32>
    %cst_140 = arith.constant 0.797884583 : f32
    %299 = vector.broadcast %cst_140 : f32 to vector<8x128xf32>
    %300 = arith.mulf %299, %298 : vector<8x128xf32>
    %301 = math.tanh %300 : vector<8x128xf32>
    %cst_141 = arith.constant 1.000000e+00 : f32
    %302 = vector.broadcast %cst_141 : f32 to vector<8x128xf32>
    %303 = arith.addf %302, %301 : vector<8x128xf32>
    %304 = arith.mulf %293, %303 : vector<8x128xf32>
    %c1_142 = arith.constant 1 : index
    %c0_143 = arith.constant 0 : index
    %c0_144 = arith.constant 0 : index
    %305 = vector.load %arg21[%c1_142, %c0_143, %c0_144] : memref<6x128x32xf32, #tpu.memory_space<vmem>>, vector<1x128x32xf32>
    %306 = vector.shape_cast %305 : vector<1x128x32xf32> to vector<128x32xf32>
    %cst_145 = arith.constant dense<0.000000e+00> : vector<8x32xf32>
    %307 = tpu.matmul %304, %306, %cst_145 {dimension_numbers = #tpu.dot_dimension_numbers<[1], [0], [0], [1], [0, 0, 1, 1], [], []>} : vector<8x128xf32>, vector<128x32xf32>, vector<8x32xf32> -> vector<8x32xf32>
    %308 = arith.addf %257, %307 : vector<8x32xf32>
    %c1_146 = arith.constant 1 : index
    %c0_147 = arith.constant 0 : index
    %c0_148 = arith.constant 0 : index
    %309 = vector.load %arg22[%c1_146, %c0_147, %c0_148] : memref<6x1x32xf32, #tpu.memory_space<vmem>>, vector<1x1x32xf32>
    %310 = vector.shape_cast %309 : vector<1x1x32xf32> to vector<1x32xf32>
    %311 = vector.broadcast %310 : vector<1x32xf32> to vector<8x32xf32>
    %312 = arith.addf %308, %311 : vector<8x32xf32>
    %c2 = arith.constant 2 : index
    %c0_149 = arith.constant 0 : index
    %c0_150 = arith.constant 0 : index
    %313 = vector.load %arg7[%c2, %c0_149, %c0_150] : memref<6x1x32xf32, #tpu.memory_space<vmem>>, vector<1x1x32xf32>
    %314 = vector.shape_cast %313 : vector<1x1x32xf32> to vector<1x32xf32>
    %c2_151 = arith.constant 2 : index
    %c0_152 = arith.constant 0 : index
    %c0_153 = arith.constant 0 : index
    %315 = vector.load %arg8[%c2_151, %c0_152, %c0_153] : memref<6x1x32xf32, #tpu.memory_space<vmem>>, vector<1x1x32xf32>
    %316 = vector.shape_cast %315 : vector<1x1x32xf32> to vector<1x32xf32>
    %317 = arith.mulf %312, %312 : vector<8x32xf32>
    %318 = tpu.concatenate %312, %317 in 0 : vector<8x32xf32>, vector<8x32xf32> -> vector<16x32xf32>
    %cst_154 = arith.constant dense<0.000000e+00> : vector<16xf32>
    %319 = vector.multi_reduction <add>, %318, %cst_154 [1] : vector<16x32xf32> to vector<16xf32>
    %320 = vector.shape_cast %319 : vector<16xf32> to vector<16x1xf32>
    %321 = vector.extract_strided_slice %320 {offsets = [0, 0], sizes = [8, 1], strides = [1, 1]} : vector<16x1xf32> to vector<8x1xf32>
    %cst_155 = arith.constant 3.125000e-02 : f32
    %322 = vector.broadcast %cst_155 : f32 to vector<8x1xf32>
    %323 = arith.mulf %321, %322 : vector<8x1xf32>
    %324 = vector.extract_strided_slice %320 {offsets = [8, 0], sizes = [8, 1], strides = [1, 1]} : vector<16x1xf32> to vector<8x1xf32>
    %cst_156 = arith.constant 3.125000e-02 : f32
    %325 = vector.broadcast %cst_156 : f32 to vector<8x1xf32>
    %326 = arith.mulf %324, %325 : vector<8x1xf32>
    %327 = arith.mulf %323, %323 : vector<8x1xf32>
    %328 = arith.subf %326, %327 : vector<8x1xf32>
    %329 = vector.broadcast %323 : vector<8x1xf32> to vector<8x32xf32>
    %330 = arith.subf %312, %329 : vector<8x32xf32>
    %cst_157 = arith.constant 9.99999974E-6 : f32
    %331 = vector.broadcast %cst_157 : f32 to vector<8x1xf32>
    %332 = arith.addf %328, %331 : vector<8x1xf32>
    %333 = math.rsqrt %332 : vector<8x1xf32>
    %334 = vector.broadcast %333 : vector<8x1xf32> to vector<8x32xf32>
    %335 = arith.mulf %330, %334 : vector<8x32xf32>
    %336 = vector.broadcast %314 : vector<1x32xf32> to vector<8x32xf32>
    %337 = arith.mulf %335, %336 : vector<8x32xf32>
    %338 = vector.broadcast %316 : vector<1x32xf32> to vector<8x32xf32>
    %339 = arith.addf %337, %338 : vector<8x32xf32>
    %c2_158 = arith.constant 2 : index
    %c0_159 = arith.constant 0 : index
    %c0_160 = arith.constant 0 : index
    %340 = vector.load %arg9[%c2_158, %c0_159, %c0_160] : memref<6x32x32xf32, #tpu.memory_space<vmem>>, vector<1x32x32xf32>
    %341 = vector.shape_cast %340 : vector<1x32x32xf32> to vector<32x32xf32>
    %cst_161 = arith.constant dense<0.000000e+00> : vector<8x32xf32>
    %342 = tpu.matmul %339, %341, %cst_161 {dimension_numbers = #tpu.dot_dimension_numbers<[1], [0], [0], [1], [0, 0, 1, 1], [], []>} : vector<8x32xf32>, vector<32x32xf32>, vector<8x32xf32> -> vector<8x32xf32>
    %c2_162 = arith.constant 2 : index
    %c0_163 = arith.constant 0 : index
    %c0_164 = arith.constant 0 : index
    %343 = vector.load %arg10[%c2_162, %c0_163, %c0_164] : memref<6x1x32xf32, #tpu.memory_space<vmem>>, vector<1x1x32xf32>
    %344 = vector.shape_cast %343 : vector<1x1x32xf32> to vector<1x32xf32>
    %345 = vector.broadcast %344 : vector<1x32xf32> to vector<8x32xf32>
    %346 = arith.addf %342, %345 : vector<8x32xf32>
    %c2_165 = arith.constant 2 : index
    %c0_166 = arith.constant 0 : index
    %c0_167 = arith.constant 0 : index
    %347 = vector.load %arg11[%c2_165, %c0_166, %c0_167] : memref<6x32x32xf32, #tpu.memory_space<vmem>>, vector<1x32x32xf32>
    %348 = vector.shape_cast %347 : vector<1x32x32xf32> to vector<32x32xf32>
    %cst_168 = arith.constant dense<0.000000e+00> : vector<8x32xf32>
    %349 = tpu.matmul %339, %348, %cst_168 {dimension_numbers = #tpu.dot_dimension_numbers<[1], [0], [0], [1], [0, 0, 1, 1], [], []>} : vector<8x32xf32>, vector<32x32xf32>, vector<8x32xf32> -> vector<8x32xf32>
    %c2_169 = arith.constant 2 : index
    %c0_170 = arith.constant 0 : index
    %c0_171 = arith.constant 0 : index
    %350 = vector.load %arg12[%c2_169, %c0_170, %c0_171] : memref<6x1x32xf32, #tpu.memory_space<vmem>>, vector<1x1x32xf32>
    %351 = vector.shape_cast %350 : vector<1x1x32xf32> to vector<1x32xf32>
    %352 = vector.broadcast %351 : vector<1x32xf32> to vector<8x32xf32>
    %353 = arith.addf %349, %352 : vector<8x32xf32>
    %c2_172 = arith.constant 2 : index
    %c0_173 = arith.constant 0 : index
    %c0_174 = arith.constant 0 : index
    %354 = vector.load %arg13[%c2_172, %c0_173, %c0_174] : memref<6x32x32xf32, #tpu.memory_space<vmem>>, vector<1x32x32xf32>
    %355 = vector.shape_cast %354 : vector<1x32x32xf32> to vector<32x32xf32>
    %cst_175 = arith.constant dense<0.000000e+00> : vector<8x32xf32>
    %356 = tpu.matmul %339, %355, %cst_175 {dimension_numbers = #tpu.dot_dimension_numbers<[1], [0], [0], [1], [0, 0, 1, 1], [], []>} : vector<8x32xf32>, vector<32x32xf32>, vector<8x32xf32> -> vector<8x32xf32>
    %c2_176 = arith.constant 2 : index
    %c0_177 = arith.constant 0 : index
    %c0_178 = arith.constant 0 : index
    %357 = vector.load %arg14[%c2_176, %c0_177, %c0_178] : memref<6x1x32xf32, #tpu.memory_space<vmem>>, vector<1x1x32xf32>
    %358 = vector.shape_cast %357 : vector<1x1x32xf32> to vector<1x32xf32>
    %359 = vector.broadcast %358 : vector<1x32xf32> to vector<8x32xf32>
    %360 = arith.addf %356, %359 : vector<8x32xf32>
    %361 = tpu.concatenate %346, %346, %346, %346 in 0 : vector<8x32xf32>, vector<8x32xf32>, vector<8x32xf32>, vector<8x32xf32> -> vector<32x32xf32>
    %362 = arith.mulf %361, %42 : vector<32x32xf32>
    %cst_179 = arith.constant dense<0.000000e+00> : vector<32x8xf32>
    %363 = tpu.matmul %362, %353, %cst_179 {dimension_numbers = #tpu.dot_dimension_numbers<[1], [1], [0], [0], [0, 0, 1, 0], [], []>} : vector<32x32xf32>, vector<8x32xf32>, vector<32x8xf32> -> vector<32x8xf32>
    %364 = arith.addf %363, %12 : vector<32x8xf32>
    %cst_180 = arith.constant dense<0xFF800000> : vector<32xf32>
    %365 = vector.multi_reduction <maximumf>, %364, %cst_180 [1] : vector<32x8xf32> to vector<32xf32>
    %366 = vector.shape_cast %365 : vector<32xf32> to vector<32x1xf32>
    %367 = vector.broadcast %366 : vector<32x1xf32> to vector<32x8xf32>
    %368 = arith.subf %364, %367 : vector<32x8xf32>
    %369 = math.exp %368 : vector<32x8xf32>
    %cst_181 = arith.constant dense<0.000000e+00> : vector<32xf32>
    %370 = vector.multi_reduction <add>, %369, %cst_181 [1] : vector<32x8xf32> to vector<32xf32>
    %371 = vector.shape_cast %370 : vector<32xf32> to vector<32x1xf32>
    %372 = tpu.reciprocal %371 {approx = true} : vector<32x1xf32> -> vector<32x1xf32>
    %373 = vector.broadcast %372 : vector<32x1xf32> to vector<32x8xf32>
    %374 = arith.mulf %369, %373 : vector<32x8xf32>
    %cst_182 = arith.constant dense<0.000000e+00> : vector<32x32xf32>
    %375 = tpu.matmul %374, %360, %cst_182 {dimension_numbers = #tpu.dot_dimension_numbers<[1], [0], [0], [1], [0, 0, 1, 1], [], []>} : vector<32x8xf32>, vector<8x32xf32>, vector<32x32xf32> -> vector<32x32xf32>
    %376 = arith.mulf %375, %42 : vector<32x32xf32>
    %c2_183 = arith.constant 2 : index
    %c0_184 = arith.constant 0 : index
    %c0_185 = arith.constant 0 : index
    %377 = vector.load %arg15[%c2_183, %c0_184, %c0_185] : memref<6x32x32xf32, #tpu.memory_space<vmem>>, vector<1x32x32xf32>
    %378 = vector.shape_cast %377 : vector<1x32x32xf32> to vector<32x32xf32>
    %cst_186 = arith.constant dense<0.000000e+00> : vector<32x32xf32>
    %379 = tpu.matmul %376, %378, %cst_186 {dimension_numbers = #tpu.dot_dimension_numbers<[1], [0], [0], [1], [0, 0, 1, 1], [], []>} : vector<32x32xf32>, vector<32x32xf32>, vector<32x32xf32> -> vector<32x32xf32>
    %380 = vector.extract_strided_slice %379 {offsets = [0, 0], sizes = [8, 32], strides = [1, 1]} : vector<32x32xf32> to vector<8x32xf32>
    %381 = vector.extract_strided_slice %379 {offsets = [8, 0], sizes = [8, 32], strides = [1, 1]} : vector<32x32xf32> to vector<8x32xf32>
    %382 = arith.addf %380, %381 : vector<8x32xf32>
    %383 = vector.extract_strided_slice %379 {offsets = [16, 0], sizes = [8, 32], strides = [1, 1]} : vector<32x32xf32> to vector<8x32xf32>
    %384 = arith.addf %382, %383 : vector<8x32xf32>
    %385 = vector.extract_strided_slice %379 {offsets = [24, 0], sizes = [8, 32], strides = [1, 1]} : vector<32x32xf32> to vector<8x32xf32>
    %386 = arith.addf %384, %385 : vector<8x32xf32>
    %387 = arith.addf %312, %386 : vector<8x32xf32>
    %c2_187 = arith.constant 2 : index
    %c0_188 = arith.constant 0 : index
    %c0_189 = arith.constant 0 : index
    %388 = vector.load %arg16[%c2_187, %c0_188, %c0_189] : memref<6x1x32xf32, #tpu.memory_space<vmem>>, vector<1x1x32xf32>
    %389 = vector.shape_cast %388 : vector<1x1x32xf32> to vector<1x32xf32>
    %390 = vector.broadcast %389 : vector<1x32xf32> to vector<8x32xf32>
    %391 = arith.addf %387, %390 : vector<8x32xf32>
    %c2_190 = arith.constant 2 : index
    %c0_191 = arith.constant 0 : index
    %c0_192 = arith.constant 0 : index
    %392 = vector.load %arg17[%c2_190, %c0_191, %c0_192] : memref<6x1x32xf32, #tpu.memory_space<vmem>>, vector<1x1x32xf32>
    %393 = vector.shape_cast %392 : vector<1x1x32xf32> to vector<1x32xf32>
    %c2_193 = arith.constant 2 : index
    %c0_194 = arith.constant 0 : index
    %c0_195 = arith.constant 0 : index
    %394 = vector.load %arg18[%c2_193, %c0_194, %c0_195] : memref<6x1x32xf32, #tpu.memory_space<vmem>>, vector<1x1x32xf32>
    %395 = vector.shape_cast %394 : vector<1x1x32xf32> to vector<1x32xf32>
    %396 = arith.mulf %391, %391 : vector<8x32xf32>
    %397 = tpu.concatenate %391, %396 in 0 : vector<8x32xf32>, vector<8x32xf32> -> vector<16x32xf32>
    %cst_196 = arith.constant dense<0.000000e+00> : vector<16xf32>
    %398 = vector.multi_reduction <add>, %397, %cst_196 [1] : vector<16x32xf32> to vector<16xf32>
    %399 = vector.shape_cast %398 : vector<16xf32> to vector<16x1xf32>
    %400 = vector.extract_strided_slice %399 {offsets = [0, 0], sizes = [8, 1], strides = [1, 1]} : vector<16x1xf32> to vector<8x1xf32>
    %cst_197 = arith.constant 3.125000e-02 : f32
    %401 = vector.broadcast %cst_197 : f32 to vector<8x1xf32>
    %402 = arith.mulf %400, %401 : vector<8x1xf32>
    %403 = vector.extract_strided_slice %399 {offsets = [8, 0], sizes = [8, 1], strides = [1, 1]} : vector<16x1xf32> to vector<8x1xf32>
    %cst_198 = arith.constant 3.125000e-02 : f32
    %404 = vector.broadcast %cst_198 : f32 to vector<8x1xf32>
    %405 = arith.mulf %403, %404 : vector<8x1xf32>
    %406 = arith.mulf %402, %402 : vector<8x1xf32>
    %407 = arith.subf %405, %406 : vector<8x1xf32>
    %408 = vector.broadcast %402 : vector<8x1xf32> to vector<8x32xf32>
    %409 = arith.subf %391, %408 : vector<8x32xf32>
    %cst_199 = arith.constant 9.99999974E-6 : f32
    %410 = vector.broadcast %cst_199 : f32 to vector<8x1xf32>
    %411 = arith.addf %407, %410 : vector<8x1xf32>
    %412 = math.rsqrt %411 : vector<8x1xf32>
    %413 = vector.broadcast %412 : vector<8x1xf32> to vector<8x32xf32>
    %414 = arith.mulf %409, %413 : vector<8x32xf32>
    %415 = vector.broadcast %393 : vector<1x32xf32> to vector<8x32xf32>
    %416 = arith.mulf %414, %415 : vector<8x32xf32>
    %417 = vector.broadcast %395 : vector<1x32xf32> to vector<8x32xf32>
    %418 = arith.addf %416, %417 : vector<8x32xf32>
    %c2_200 = arith.constant 2 : index
    %c0_201 = arith.constant 0 : index
    %c0_202 = arith.constant 0 : index
    %419 = vector.load %arg19[%c2_200, %c0_201, %c0_202] : memref<6x32x128xf32, #tpu.memory_space<vmem>>, vector<1x32x128xf32>
    %420 = vector.shape_cast %419 : vector<1x32x128xf32> to vector<32x128xf32>
    %cst_203 = arith.constant dense<0.000000e+00> : vector<8x128xf32>
    %421 = tpu.matmul %418, %420, %cst_203 {dimension_numbers = #tpu.dot_dimension_numbers<[1], [0], [0], [1], [0, 0, 1, 1], [], []>} : vector<8x32xf32>, vector<32x128xf32>, vector<8x128xf32> -> vector<8x128xf32>
    %c2_204 = arith.constant 2 : index
    %c0_205 = arith.constant 0 : index
    %c0_206 = arith.constant 0 : index
    %422 = vector.load %arg20[%c2_204, %c0_205, %c0_206] : memref<6x1x128xf32, #tpu.memory_space<vmem>>, vector<1x1x128xf32>
    %423 = vector.shape_cast %422 : vector<1x1x128xf32> to vector<1x128xf32>
    %424 = vector.broadcast %423 : vector<1x128xf32> to vector<8x128xf32>
    %425 = arith.addf %421, %424 : vector<8x128xf32>
    %cst_207 = arith.constant 5.000000e-01 : f32
    %426 = vector.broadcast %cst_207 : f32 to vector<8x128xf32>
    %427 = arith.mulf %426, %425 : vector<8x128xf32>
    %cst_208 = arith.constant 4.471500e-02 : f32
    %428 = vector.broadcast %cst_208 : f32 to vector<8x128xf32>
    %429 = arith.mulf %428, %425 : vector<8x128xf32>
    %430 = arith.mulf %429, %425 : vector<8x128xf32>
    %431 = arith.mulf %430, %425 : vector<8x128xf32>
    %432 = arith.addf %425, %431 : vector<8x128xf32>
    %cst_209 = arith.constant 0.797884583 : f32
    %433 = vector.broadcast %cst_209 : f32 to vector<8x128xf32>
    %434 = arith.mulf %433, %432 : vector<8x128xf32>
    %435 = math.tanh %434 : vector<8x128xf32>
    %cst_210 = arith.constant 1.000000e+00 : f32
    %436 = vector.broadcast %cst_210 : f32 to vector<8x128xf32>
    %437 = arith.addf %436, %435 : vector<8x128xf32>
    %438 = arith.mulf %427, %437 : vector<8x128xf32>
    %c2_211 = arith.constant 2 : index
    %c0_212 = arith.constant 0 : index
    %c0_213 = arith.constant 0 : index
    %439 = vector.load %arg21[%c2_211, %c0_212, %c0_213] : memref<6x128x32xf32, #tpu.memory_space<vmem>>, vector<1x128x32xf32>
    %440 = vector.shape_cast %439 : vector<1x128x32xf32> to vector<128x32xf32>
    %cst_214 = arith.constant dense<0.000000e+00> : vector<8x32xf32>
    %441 = tpu.matmul %438, %440, %cst_214 {dimension_numbers = #tpu.dot_dimension_numbers<[1], [0], [0], [1], [0, 0, 1, 1], [], []>} : vector<8x128xf32>, vector<128x32xf32>, vector<8x32xf32> -> vector<8x32xf32>
    %442 = arith.addf %391, %441 : vector<8x32xf32>
    %c2_215 = arith.constant 2 : index
    %c0_216 = arith.constant 0 : index
    %c0_217 = arith.constant 0 : index
    %443 = vector.load %arg22[%c2_215, %c0_216, %c0_217] : memref<6x1x32xf32, #tpu.memory_space<vmem>>, vector<1x1x32xf32>
    %444 = vector.shape_cast %443 : vector<1x1x32xf32> to vector<1x32xf32>
    %445 = vector.broadcast %444 : vector<1x32xf32> to vector<8x32xf32>
    %446 = arith.addf %442, %445 : vector<8x32xf32>
    %c3 = arith.constant 3 : index
    %c0_218 = arith.constant 0 : index
    %c0_219 = arith.constant 0 : index
    %447 = vector.load %arg7[%c3, %c0_218, %c0_219] : memref<6x1x32xf32, #tpu.memory_space<vmem>>, vector<1x1x32xf32>
    %448 = vector.shape_cast %447 : vector<1x1x32xf32> to vector<1x32xf32>
    %c3_220 = arith.constant 3 : index
    %c0_221 = arith.constant 0 : index
    %c0_222 = arith.constant 0 : index
    %449 = vector.load %arg8[%c3_220, %c0_221, %c0_222] : memref<6x1x32xf32, #tpu.memory_space<vmem>>, vector<1x1x32xf32>
    %450 = vector.shape_cast %449 : vector<1x1x32xf32> to vector<1x32xf32>
    %451 = arith.mulf %446, %446 : vector<8x32xf32>
    %452 = tpu.concatenate %446, %451 in 0 : vector<8x32xf32>, vector<8x32xf32> -> vector<16x32xf32>
    %cst_223 = arith.constant dense<0.000000e+00> : vector<16xf32>
    %453 = vector.multi_reduction <add>, %452, %cst_223 [1] : vector<16x32xf32> to vector<16xf32>
    %454 = vector.shape_cast %453 : vector<16xf32> to vector<16x1xf32>
    %455 = vector.extract_strided_slice %454 {offsets = [0, 0], sizes = [8, 1], strides = [1, 1]} : vector<16x1xf32> to vector<8x1xf32>
    %cst_224 = arith.constant 3.125000e-02 : f32
    %456 = vector.broadcast %cst_224 : f32 to vector<8x1xf32>
    %457 = arith.mulf %455, %456 : vector<8x1xf32>
    %458 = vector.extract_strided_slice %454 {offsets = [8, 0], sizes = [8, 1], strides = [1, 1]} : vector<16x1xf32> to vector<8x1xf32>
    %cst_225 = arith.constant 3.125000e-02 : f32
    %459 = vector.broadcast %cst_225 : f32 to vector<8x1xf32>
    %460 = arith.mulf %458, %459 : vector<8x1xf32>
    %461 = arith.mulf %457, %457 : vector<8x1xf32>
    %462 = arith.subf %460, %461 : vector<8x1xf32>
    %463 = vector.broadcast %457 : vector<8x1xf32> to vector<8x32xf32>
    %464 = arith.subf %446, %463 : vector<8x32xf32>
    %cst_226 = arith.constant 9.99999974E-6 : f32
    %465 = vector.broadcast %cst_226 : f32 to vector<8x1xf32>
    %466 = arith.addf %462, %465 : vector<8x1xf32>
    %467 = math.rsqrt %466 : vector<8x1xf32>
    %468 = vector.broadcast %467 : vector<8x1xf32> to vector<8x32xf32>
    %469 = arith.mulf %464, %468 : vector<8x32xf32>
    %470 = vector.broadcast %448 : vector<1x32xf32> to vector<8x32xf32>
    %471 = arith.mulf %469, %470 : vector<8x32xf32>
    %472 = vector.broadcast %450 : vector<1x32xf32> to vector<8x32xf32>
    %473 = arith.addf %471, %472 : vector<8x32xf32>
    %c3_227 = arith.constant 3 : index
    %c0_228 = arith.constant 0 : index
    %c0_229 = arith.constant 0 : index
    %474 = vector.load %arg9[%c3_227, %c0_228, %c0_229] : memref<6x32x32xf32, #tpu.memory_space<vmem>>, vector<1x32x32xf32>
    %475 = vector.shape_cast %474 : vector<1x32x32xf32> to vector<32x32xf32>
    %cst_230 = arith.constant dense<0.000000e+00> : vector<8x32xf32>
    %476 = tpu.matmul %473, %475, %cst_230 {dimension_numbers = #tpu.dot_dimension_numbers<[1], [0], [0], [1], [0, 0, 1, 1], [], []>} : vector<8x32xf32>, vector<32x32xf32>, vector<8x32xf32> -> vector<8x32xf32>
    %c3_231 = arith.constant 3 : index
    %c0_232 = arith.constant 0 : index
    %c0_233 = arith.constant 0 : index
    %477 = vector.load %arg10[%c3_231, %c0_232, %c0_233] : memref<6x1x32xf32, #tpu.memory_space<vmem>>, vector<1x1x32xf32>
    %478 = vector.shape_cast %477 : vector<1x1x32xf32> to vector<1x32xf32>
    %479 = vector.broadcast %478 : vector<1x32xf32> to vector<8x32xf32>
    %480 = arith.addf %476, %479 : vector<8x32xf32>
    %c3_234 = arith.constant 3 : index
    %c0_235 = arith.constant 0 : index
    %c0_236 = arith.constant 0 : index
    %481 = vector.load %arg11[%c3_234, %c0_235, %c0_236] : memref<6x32x32xf32, #tpu.memory_space<vmem>>, vector<1x32x32xf32>
    %482 = vector.shape_cast %481 : vector<1x32x32xf32> to vector<32x32xf32>
    %cst_237 = arith.constant dense<0.000000e+00> : vector<8x32xf32>
    %483 = tpu.matmul %473, %482, %cst_237 {dimension_numbers = #tpu.dot_dimension_numbers<[1], [0], [0], [1], [0, 0, 1, 1], [], []>} : vector<8x32xf32>, vector<32x32xf32>, vector<8x32xf32> -> vector<8x32xf32>
    %c3_238 = arith.constant 3 : index
    %c0_239 = arith.constant 0 : index
    %c0_240 = arith.constant 0 : index
    %484 = vector.load %arg12[%c3_238, %c0_239, %c0_240] : memref<6x1x32xf32, #tpu.memory_space<vmem>>, vector<1x1x32xf32>
    %485 = vector.shape_cast %484 : vector<1x1x32xf32> to vector<1x32xf32>
    %486 = vector.broadcast %485 : vector<1x32xf32> to vector<8x32xf32>
    %487 = arith.addf %483, %486 : vector<8x32xf32>
    %c3_241 = arith.constant 3 : index
    %c0_242 = arith.constant 0 : index
    %c0_243 = arith.constant 0 : index
    %488 = vector.load %arg13[%c3_241, %c0_242, %c0_243] : memref<6x32x32xf32, #tpu.memory_space<vmem>>, vector<1x32x32xf32>
    %489 = vector.shape_cast %488 : vector<1x32x32xf32> to vector<32x32xf32>
    %cst_244 = arith.constant dense<0.000000e+00> : vector<8x32xf32>
    %490 = tpu.matmul %473, %489, %cst_244 {dimension_numbers = #tpu.dot_dimension_numbers<[1], [0], [0], [1], [0, 0, 1, 1], [], []>} : vector<8x32xf32>, vector<32x32xf32>, vector<8x32xf32> -> vector<8x32xf32>
    %c3_245 = arith.constant 3 : index
    %c0_246 = arith.constant 0 : index
    %c0_247 = arith.constant 0 : index
    %491 = vector.load %arg14[%c3_245, %c0_246, %c0_247] : memref<6x1x32xf32, #tpu.memory_space<vmem>>, vector<1x1x32xf32>
    %492 = vector.shape_cast %491 : vector<1x1x32xf32> to vector<1x32xf32>
    %493 = vector.broadcast %492 : vector<1x32xf32> to vector<8x32xf32>
    %494 = arith.addf %490, %493 : vector<8x32xf32>
    %495 = tpu.concatenate %480, %480, %480, %480 in 0 : vector<8x32xf32>, vector<8x32xf32>, vector<8x32xf32>, vector<8x32xf32> -> vector<32x32xf32>
    %496 = arith.mulf %495, %42 : vector<32x32xf32>
    %cst_248 = arith.constant dense<0.000000e+00> : vector<32x8xf32>
    %497 = tpu.matmul %496, %487, %cst_248 {dimension_numbers = #tpu.dot_dimension_numbers<[1], [1], [0], [0], [0, 0, 1, 0], [], []>} : vector<32x32xf32>, vector<8x32xf32>, vector<32x8xf32> -> vector<32x8xf32>
    %498 = arith.addf %497, %12 : vector<32x8xf32>
    %cst_249 = arith.constant dense<0xFF800000> : vector<32xf32>
    %499 = vector.multi_reduction <maximumf>, %498, %cst_249 [1] : vector<32x8xf32> to vector<32xf32>
    %500 = vector.shape_cast %499 : vector<32xf32> to vector<32x1xf32>
    %501 = vector.broadcast %500 : vector<32x1xf32> to vector<32x8xf32>
    %502 = arith.subf %498, %501 : vector<32x8xf32>
    %503 = math.exp %502 : vector<32x8xf32>
    %cst_250 = arith.constant dense<0.000000e+00> : vector<32xf32>
    %504 = vector.multi_reduction <add>, %503, %cst_250 [1] : vector<32x8xf32> to vector<32xf32>
    %505 = vector.shape_cast %504 : vector<32xf32> to vector<32x1xf32>
    %506 = tpu.reciprocal %505 {approx = true} : vector<32x1xf32> -> vector<32x1xf32>
    %507 = vector.broadcast %506 : vector<32x1xf32> to vector<32x8xf32>
    %508 = arith.mulf %503, %507 : vector<32x8xf32>
    %cst_251 = arith.constant dense<0.000000e+00> : vector<32x32xf32>
    %509 = tpu.matmul %508, %494, %cst_251 {dimension_numbers = #tpu.dot_dimension_numbers<[1], [0], [0], [1], [0, 0, 1, 1], [], []>} : vector<32x8xf32>, vector<8x32xf32>, vector<32x32xf32> -> vector<32x32xf32>
    %510 = arith.mulf %509, %42 : vector<32x32xf32>
    %c3_252 = arith.constant 3 : index
    %c0_253 = arith.constant 0 : index
    %c0_254 = arith.constant 0 : index
    %511 = vector.load %arg15[%c3_252, %c0_253, %c0_254] : memref<6x32x32xf32, #tpu.memory_space<vmem>>, vector<1x32x32xf32>
    %512 = vector.shape_cast %511 : vector<1x32x32xf32> to vector<32x32xf32>
    %cst_255 = arith.constant dense<0.000000e+00> : vector<32x32xf32>
    %513 = tpu.matmul %510, %512, %cst_255 {dimension_numbers = #tpu.dot_dimension_numbers<[1], [0], [0], [1], [0, 0, 1, 1], [], []>} : vector<32x32xf32>, vector<32x32xf32>, vector<32x32xf32> -> vector<32x32xf32>
    %514 = vector.extract_strided_slice %513 {offsets = [0, 0], sizes = [8, 32], strides = [1, 1]} : vector<32x32xf32> to vector<8x32xf32>
    %515 = vector.extract_strided_slice %513 {offsets = [8, 0], sizes = [8, 32], strides = [1, 1]} : vector<32x32xf32> to vector<8x32xf32>
    %516 = arith.addf %514, %515 : vector<8x32xf32>
    %517 = vector.extract_strided_slice %513 {offsets = [16, 0], sizes = [8, 32], strides = [1, 1]} : vector<32x32xf32> to vector<8x32xf32>
    %518 = arith.addf %516, %517 : vector<8x32xf32>
    %519 = vector.extract_strided_slice %513 {offsets = [24, 0], sizes = [8, 32], strides = [1, 1]} : vector<32x32xf32> to vector<8x32xf32>
    %520 = arith.addf %518, %519 : vector<8x32xf32>
    %521 = arith.addf %446, %520 : vector<8x32xf32>
    %c3_256 = arith.constant 3 : index
    %c0_257 = arith.constant 0 : index
    %c0_258 = arith.constant 0 : index
    %522 = vector.load %arg16[%c3_256, %c0_257, %c0_258] : memref<6x1x32xf32, #tpu.memory_space<vmem>>, vector<1x1x32xf32>
    %523 = vector.shape_cast %522 : vector<1x1x32xf32> to vector<1x32xf32>
    %524 = vector.broadcast %523 : vector<1x32xf32> to vector<8x32xf32>
    %525 = arith.addf %521, %524 : vector<8x32xf32>
    %c3_259 = arith.constant 3 : index
    %c0_260 = arith.constant 0 : index
    %c0_261 = arith.constant 0 : index
    %526 = vector.load %arg17[%c3_259, %c0_260, %c0_261] : memref<6x1x32xf32, #tpu.memory_space<vmem>>, vector<1x1x32xf32>
    %527 = vector.shape_cast %526 : vector<1x1x32xf32> to vector<1x32xf32>
    %c3_262 = arith.constant 3 : index
    %c0_263 = arith.constant 0 : index
    %c0_264 = arith.constant 0 : index
    %528 = vector.load %arg18[%c3_262, %c0_263, %c0_264] : memref<6x1x32xf32, #tpu.memory_space<vmem>>, vector<1x1x32xf32>
    %529 = vector.shape_cast %528 : vector<1x1x32xf32> to vector<1x32xf32>
    %530 = arith.mulf %525, %525 : vector<8x32xf32>
    %531 = tpu.concatenate %525, %530 in 0 : vector<8x32xf32>, vector<8x32xf32> -> vector<16x32xf32>
    %cst_265 = arith.constant dense<0.000000e+00> : vector<16xf32>
    %532 = vector.multi_reduction <add>, %531, %cst_265 [1] : vector<16x32xf32> to vector<16xf32>
    %533 = vector.shape_cast %532 : vector<16xf32> to vector<16x1xf32>
    %534 = vector.extract_strided_slice %533 {offsets = [0, 0], sizes = [8, 1], strides = [1, 1]} : vector<16x1xf32> to vector<8x1xf32>
    %cst_266 = arith.constant 3.125000e-02 : f32
    %535 = vector.broadcast %cst_266 : f32 to vector<8x1xf32>
    %536 = arith.mulf %534, %535 : vector<8x1xf32>
    %537 = vector.extract_strided_slice %533 {offsets = [8, 0], sizes = [8, 1], strides = [1, 1]} : vector<16x1xf32> to vector<8x1xf32>
    %cst_267 = arith.constant 3.125000e-02 : f32
    %538 = vector.broadcast %cst_267 : f32 to vector<8x1xf32>
    %539 = arith.mulf %537, %538 : vector<8x1xf32>
    %540 = arith.mulf %536, %536 : vector<8x1xf32>
    %541 = arith.subf %539, %540 : vector<8x1xf32>
    %542 = vector.broadcast %536 : vector<8x1xf32> to vector<8x32xf32>
    %543 = arith.subf %525, %542 : vector<8x32xf32>
    %cst_268 = arith.constant 9.99999974E-6 : f32
    %544 = vector.broadcast %cst_268 : f32 to vector<8x1xf32>
    %545 = arith.addf %541, %544 : vector<8x1xf32>
    %546 = math.rsqrt %545 : vector<8x1xf32>
    %547 = vector.broadcast %546 : vector<8x1xf32> to vector<8x32xf32>
    %548 = arith.mulf %543, %547 : vector<8x32xf32>
    %549 = vector.broadcast %527 : vector<1x32xf32> to vector<8x32xf32>
    %550 = arith.mulf %548, %549 : vector<8x32xf32>
    %551 = vector.broadcast %529 : vector<1x32xf32> to vector<8x32xf32>
    %552 = arith.addf %550, %551 : vector<8x32xf32>
    %c3_269 = arith.constant 3 : index
    %c0_270 = arith.constant 0 : index
    %c0_271 = arith.constant 0 : index
    %553 = vector.load %arg19[%c3_269, %c0_270, %c0_271] : memref<6x32x128xf32, #tpu.memory_space<vmem>>, vector<1x32x128xf32>
    %554 = vector.shape_cast %553 : vector<1x32x128xf32> to vector<32x128xf32>
    %cst_272 = arith.constant dense<0.000000e+00> : vector<8x128xf32>
    %555 = tpu.matmul %552, %554, %cst_272 {dimension_numbers = #tpu.dot_dimension_numbers<[1], [0], [0], [1], [0, 0, 1, 1], [], []>} : vector<8x32xf32>, vector<32x128xf32>, vector<8x128xf32> -> vector<8x128xf32>
    %c3_273 = arith.constant 3 : index
    %c0_274 = arith.constant 0 : index
    %c0_275 = arith.constant 0 : index
    %556 = vector.load %arg20[%c3_273, %c0_274, %c0_275] : memref<6x1x128xf32, #tpu.memory_space<vmem>>, vector<1x1x128xf32>
    %557 = vector.shape_cast %556 : vector<1x1x128xf32> to vector<1x128xf32>
    %558 = vector.broadcast %557 : vector<1x128xf32> to vector<8x128xf32>
    %559 = arith.addf %555, %558 : vector<8x128xf32>
    %cst_276 = arith.constant 5.000000e-01 : f32
    %560 = vector.broadcast %cst_276 : f32 to vector<8x128xf32>
    %561 = arith.mulf %560, %559 : vector<8x128xf32>
    %cst_277 = arith.constant 4.471500e-02 : f32
    %562 = vector.broadcast %cst_277 : f32 to vector<8x128xf32>
    %563 = arith.mulf %562, %559 : vector<8x128xf32>
    %564 = arith.mulf %563, %559 : vector<8x128xf32>
    %565 = arith.mulf %564, %559 : vector<8x128xf32>
    %566 = arith.addf %559, %565 : vector<8x128xf32>
    %cst_278 = arith.constant 0.797884583 : f32
    %567 = vector.broadcast %cst_278 : f32 to vector<8x128xf32>
    %568 = arith.mulf %567, %566 : vector<8x128xf32>
    %569 = math.tanh %568 : vector<8x128xf32>
    %cst_279 = arith.constant 1.000000e+00 : f32
    %570 = vector.broadcast %cst_279 : f32 to vector<8x128xf32>
    %571 = arith.addf %570, %569 : vector<8x128xf32>
    %572 = arith.mulf %561, %571 : vector<8x128xf32>
    %c3_280 = arith.constant 3 : index
    %c0_281 = arith.constant 0 : index
    %c0_282 = arith.constant 0 : index
    %573 = vector.load %arg21[%c3_280, %c0_281, %c0_282] : memref<6x128x32xf32, #tpu.memory_space<vmem>>, vector<1x128x32xf32>
    %574 = vector.shape_cast %573 : vector<1x128x32xf32> to vector<128x32xf32>
    %cst_283 = arith.constant dense<0.000000e+00> : vector<8x32xf32>
    %575 = tpu.matmul %572, %574, %cst_283 {dimension_numbers = #tpu.dot_dimension_numbers<[1], [0], [0], [1], [0, 0, 1, 1], [], []>} : vector<8x128xf32>, vector<128x32xf32>, vector<8x32xf32> -> vector<8x32xf32>
    %576 = arith.addf %525, %575 : vector<8x32xf32>
    %c3_284 = arith.constant 3 : index
    %c0_285 = arith.constant 0 : index
    %c0_286 = arith.constant 0 : index
    %577 = vector.load %arg22[%c3_284, %c0_285, %c0_286] : memref<6x1x32xf32, #tpu.memory_space<vmem>>, vector<1x1x32xf32>
    %578 = vector.shape_cast %577 : vector<1x1x32xf32> to vector<1x32xf32>
    %579 = vector.broadcast %578 : vector<1x32xf32> to vector<8x32xf32>
    %580 = arith.addf %576, %579 : vector<8x32xf32>
    %c4 = arith.constant 4 : index
    %c0_287 = arith.constant 0 : index
    %c0_288 = arith.constant 0 : index
    %581 = vector.load %arg7[%c4, %c0_287, %c0_288] : memref<6x1x32xf32, #tpu.memory_space<vmem>>, vector<1x1x32xf32>
    %582 = vector.shape_cast %581 : vector<1x1x32xf32> to vector<1x32xf32>
    %c4_289 = arith.constant 4 : index
    %c0_290 = arith.constant 0 : index
    %c0_291 = arith.constant 0 : index
    %583 = vector.load %arg8[%c4_289, %c0_290, %c0_291] : memref<6x1x32xf32, #tpu.memory_space<vmem>>, vector<1x1x32xf32>
    %584 = vector.shape_cast %583 : vector<1x1x32xf32> to vector<1x32xf32>
    %585 = arith.mulf %580, %580 : vector<8x32xf32>
    %586 = tpu.concatenate %580, %585 in 0 : vector<8x32xf32>, vector<8x32xf32> -> vector<16x32xf32>
    %cst_292 = arith.constant dense<0.000000e+00> : vector<16xf32>
    %587 = vector.multi_reduction <add>, %586, %cst_292 [1] : vector<16x32xf32> to vector<16xf32>
    %588 = vector.shape_cast %587 : vector<16xf32> to vector<16x1xf32>
    %589 = vector.extract_strided_slice %588 {offsets = [0, 0], sizes = [8, 1], strides = [1, 1]} : vector<16x1xf32> to vector<8x1xf32>
    %cst_293 = arith.constant 3.125000e-02 : f32
    %590 = vector.broadcast %cst_293 : f32 to vector<8x1xf32>
    %591 = arith.mulf %589, %590 : vector<8x1xf32>
    %592 = vector.extract_strided_slice %588 {offsets = [8, 0], sizes = [8, 1], strides = [1, 1]} : vector<16x1xf32> to vector<8x1xf32>
    %cst_294 = arith.constant 3.125000e-02 : f32
    %593 = vector.broadcast %cst_294 : f32 to vector<8x1xf32>
    %594 = arith.mulf %592, %593 : vector<8x1xf32>
    %595 = arith.mulf %591, %591 : vector<8x1xf32>
    %596 = arith.subf %594, %595 : vector<8x1xf32>
    %597 = vector.broadcast %591 : vector<8x1xf32> to vector<8x32xf32>
    %598 = arith.subf %580, %597 : vector<8x32xf32>
    %cst_295 = arith.constant 9.99999974E-6 : f32
    %599 = vector.broadcast %cst_295 : f32 to vector<8x1xf32>
    %600 = arith.addf %596, %599 : vector<8x1xf32>
    %601 = math.rsqrt %600 : vector<8x1xf32>
    %602 = vector.broadcast %601 : vector<8x1xf32> to vector<8x32xf32>
    %603 = arith.mulf %598, %602 : vector<8x32xf32>
    %604 = vector.broadcast %582 : vector<1x32xf32> to vector<8x32xf32>
    %605 = arith.mulf %603, %604 : vector<8x32xf32>
    %606 = vector.broadcast %584 : vector<1x32xf32> to vector<8x32xf32>
    %607 = arith.addf %605, %606 : vector<8x32xf32>
    %c4_296 = arith.constant 4 : index
    %c0_297 = arith.constant 0 : index
    %c0_298 = arith.constant 0 : index
    %608 = vector.load %arg9[%c4_296, %c0_297, %c0_298] : memref<6x32x32xf32, #tpu.memory_space<vmem>>, vector<1x32x32xf32>
    %609 = vector.shape_cast %608 : vector<1x32x32xf32> to vector<32x32xf32>
    %cst_299 = arith.constant dense<0.000000e+00> : vector<8x32xf32>
    %610 = tpu.matmul %607, %609, %cst_299 {dimension_numbers = #tpu.dot_dimension_numbers<[1], [0], [0], [1], [0, 0, 1, 1], [], []>} : vector<8x32xf32>, vector<32x32xf32>, vector<8x32xf32> -> vector<8x32xf32>
    %c4_300 = arith.constant 4 : index
    %c0_301 = arith.constant 0 : index
    %c0_302 = arith.constant 0 : index
    %611 = vector.load %arg10[%c4_300, %c0_301, %c0_302] : memref<6x1x32xf32, #tpu.memory_space<vmem>>, vector<1x1x32xf32>
    %612 = vector.shape_cast %611 : vector<1x1x32xf32> to vector<1x32xf32>
    %613 = vector.broadcast %612 : vector<1x32xf32> to vector<8x32xf32>
    %614 = arith.addf %610, %613 : vector<8x32xf32>
    %c4_303 = arith.constant 4 : index
    %c0_304 = arith.constant 0 : index
    %c0_305 = arith.constant 0 : index
    %615 = vector.load %arg11[%c4_303, %c0_304, %c0_305] : memref<6x32x32xf32, #tpu.memory_space<vmem>>, vector<1x32x32xf32>
    %616 = vector.shape_cast %615 : vector<1x32x32xf32> to vector<32x32xf32>
    %cst_306 = arith.constant dense<0.000000e+00> : vector<8x32xf32>
    %617 = tpu.matmul %607, %616, %cst_306 {dimension_numbers = #tpu.dot_dimension_numbers<[1], [0], [0], [1], [0, 0, 1, 1], [], []>} : vector<8x32xf32>, vector<32x32xf32>, vector<8x32xf32> -> vector<8x32xf32>
    %c4_307 = arith.constant 4 : index
    %c0_308 = arith.constant 0 : index
    %c0_309 = arith.constant 0 : index
    %618 = vector.load %arg12[%c4_307, %c0_308, %c0_309] : memref<6x1x32xf32, #tpu.memory_space<vmem>>, vector<1x1x32xf32>
    %619 = vector.shape_cast %618 : vector<1x1x32xf32> to vector<1x32xf32>
    %620 = vector.broadcast %619 : vector<1x32xf32> to vector<8x32xf32>
    %621 = arith.addf %617, %620 : vector<8x32xf32>
    %c4_310 = arith.constant 4 : index
    %c0_311 = arith.constant 0 : index
    %c0_312 = arith.constant 0 : index
    %622 = vector.load %arg13[%c4_310, %c0_311, %c0_312] : memref<6x32x32xf32, #tpu.memory_space<vmem>>, vector<1x32x32xf32>
    %623 = vector.shape_cast %622 : vector<1x32x32xf32> to vector<32x32xf32>
    %cst_313 = arith.constant dense<0.000000e+00> : vector<8x32xf32>
    %624 = tpu.matmul %607, %623, %cst_313 {dimension_numbers = #tpu.dot_dimension_numbers<[1], [0], [0], [1], [0, 0, 1, 1], [], []>} : vector<8x32xf32>, vector<32x32xf32>, vector<8x32xf32> -> vector<8x32xf32>
    %c4_314 = arith.constant 4 : index
    %c0_315 = arith.constant 0 : index
    %c0_316 = arith.constant 0 : index
    %625 = vector.load %arg14[%c4_314, %c0_315, %c0_316] : memref<6x1x32xf32, #tpu.memory_space<vmem>>, vector<1x1x32xf32>
    %626 = vector.shape_cast %625 : vector<1x1x32xf32> to vector<1x32xf32>
    %627 = vector.broadcast %626 : vector<1x32xf32> to vector<8x32xf32>
    %628 = arith.addf %624, %627 : vector<8x32xf32>
    %629 = tpu.concatenate %614, %614, %614, %614 in 0 : vector<8x32xf32>, vector<8x32xf32>, vector<8x32xf32>, vector<8x32xf32> -> vector<32x32xf32>
    %630 = arith.mulf %629, %42 : vector<32x32xf32>
    %cst_317 = arith.constant dense<0.000000e+00> : vector<32x8xf32>
    %631 = tpu.matmul %630, %621, %cst_317 {dimension_numbers = #tpu.dot_dimension_numbers<[1], [1], [0], [0], [0, 0, 1, 0], [], []>} : vector<32x32xf32>, vector<8x32xf32>, vector<32x8xf32> -> vector<32x8xf32>
    %632 = arith.addf %631, %12 : vector<32x8xf32>
    %cst_318 = arith.constant dense<0xFF800000> : vector<32xf32>
    %633 = vector.multi_reduction <maximumf>, %632, %cst_318 [1] : vector<32x8xf32> to vector<32xf32>
    %634 = vector.shape_cast %633 : vector<32xf32> to vector<32x1xf32>
    %635 = vector.broadcast %634 : vector<32x1xf32> to vector<32x8xf32>
    %636 = arith.subf %632, %635 : vector<32x8xf32>
    %637 = math.exp %636 : vector<32x8xf32>
    %cst_319 = arith.constant dense<0.000000e+00> : vector<32xf32>
    %638 = vector.multi_reduction <add>, %637, %cst_319 [1] : vector<32x8xf32> to vector<32xf32>
    %639 = vector.shape_cast %638 : vector<32xf32> to vector<32x1xf32>
    %640 = tpu.reciprocal %639 {approx = true} : vector<32x1xf32> -> vector<32x1xf32>
    %641 = vector.broadcast %640 : vector<32x1xf32> to vector<32x8xf32>
    %642 = arith.mulf %637, %641 : vector<32x8xf32>
    %cst_320 = arith.constant dense<0.000000e+00> : vector<32x32xf32>
    %643 = tpu.matmul %642, %628, %cst_320 {dimension_numbers = #tpu.dot_dimension_numbers<[1], [0], [0], [1], [0, 0, 1, 1], [], []>} : vector<32x8xf32>, vector<8x32xf32>, vector<32x32xf32> -> vector<32x32xf32>
    %644 = arith.mulf %643, %42 : vector<32x32xf32>
    %c4_321 = arith.constant 4 : index
    %c0_322 = arith.constant 0 : index
    %c0_323 = arith.constant 0 : index
    %645 = vector.load %arg15[%c4_321, %c0_322, %c0_323] : memref<6x32x32xf32, #tpu.memory_space<vmem>>, vector<1x32x32xf32>
    %646 = vector.shape_cast %645 : vector<1x32x32xf32> to vector<32x32xf32>
    %cst_324 = arith.constant dense<0.000000e+00> : vector<32x32xf32>
    %647 = tpu.matmul %644, %646, %cst_324 {dimension_numbers = #tpu.dot_dimension_numbers<[1], [0], [0], [1], [0, 0, 1, 1], [], []>} : vector<32x32xf32>, vector<32x32xf32>, vector<32x32xf32> -> vector<32x32xf32>
    %648 = vector.extract_strided_slice %647 {offsets = [0, 0], sizes = [8, 32], strides = [1, 1]} : vector<32x32xf32> to vector<8x32xf32>
    %649 = vector.extract_strided_slice %647 {offsets = [8, 0], sizes = [8, 32], strides = [1, 1]} : vector<32x32xf32> to vector<8x32xf32>
    %650 = arith.addf %648, %649 : vector<8x32xf32>
    %651 = vector.extract_strided_slice %647 {offsets = [16, 0], sizes = [8, 32], strides = [1, 1]} : vector<32x32xf32> to vector<8x32xf32>
    %652 = arith.addf %650, %651 : vector<8x32xf32>
    %653 = vector.extract_strided_slice %647 {offsets = [24, 0], sizes = [8, 32], strides = [1, 1]} : vector<32x32xf32> to vector<8x32xf32>
    %654 = arith.addf %652, %653 : vector<8x32xf32>
    %655 = arith.addf %580, %654 : vector<8x32xf32>
    %c4_325 = arith.constant 4 : index
    %c0_326 = arith.constant 0 : index
    %c0_327 = arith.constant 0 : index
    %656 = vector.load %arg16[%c4_325, %c0_326, %c0_327] : memref<6x1x32xf32, #tpu.memory_space<vmem>>, vector<1x1x32xf32>
    %657 = vector.shape_cast %656 : vector<1x1x32xf32> to vector<1x32xf32>
    %658 = vector.broadcast %657 : vector<1x32xf32> to vector<8x32xf32>
    %659 = arith.addf %655, %658 : vector<8x32xf32>
    %c4_328 = arith.constant 4 : index
    %c0_329 = arith.constant 0 : index
    %c0_330 = arith.constant 0 : index
    %660 = vector.load %arg17[%c4_328, %c0_329, %c0_330] : memref<6x1x32xf32, #tpu.memory_space<vmem>>, vector<1x1x32xf32>
    %661 = vector.shape_cast %660 : vector<1x1x32xf32> to vector<1x32xf32>
    %c4_331 = arith.constant 4 : index
    %c0_332 = arith.constant 0 : index
    %c0_333 = arith.constant 0 : index
    %662 = vector.load %arg18[%c4_331, %c0_332, %c0_333] : memref<6x1x32xf32, #tpu.memory_space<vmem>>, vector<1x1x32xf32>
    %663 = vector.shape_cast %662 : vector<1x1x32xf32> to vector<1x32xf32>
    %664 = arith.mulf %659, %659 : vector<8x32xf32>
    %665 = tpu.concatenate %659, %664 in 0 : vector<8x32xf32>, vector<8x32xf32> -> vector<16x32xf32>
    %cst_334 = arith.constant dense<0.000000e+00> : vector<16xf32>
    %666 = vector.multi_reduction <add>, %665, %cst_334 [1] : vector<16x32xf32> to vector<16xf32>
    %667 = vector.shape_cast %666 : vector<16xf32> to vector<16x1xf32>
    %668 = vector.extract_strided_slice %667 {offsets = [0, 0], sizes = [8, 1], strides = [1, 1]} : vector<16x1xf32> to vector<8x1xf32>
    %cst_335 = arith.constant 3.125000e-02 : f32
    %669 = vector.broadcast %cst_335 : f32 to vector<8x1xf32>
    %670 = arith.mulf %668, %669 : vector<8x1xf32>
    %671 = vector.extract_strided_slice %667 {offsets = [8, 0], sizes = [8, 1], strides = [1, 1]} : vector<16x1xf32> to vector<8x1xf32>
    %cst_336 = arith.constant 3.125000e-02 : f32
    %672 = vector.broadcast %cst_336 : f32 to vector<8x1xf32>
    %673 = arith.mulf %671, %672 : vector<8x1xf32>
    %674 = arith.mulf %670, %670 : vector<8x1xf32>
    %675 = arith.subf %673, %674 : vector<8x1xf32>
    %676 = vector.broadcast %670 : vector<8x1xf32> to vector<8x32xf32>
    %677 = arith.subf %659, %676 : vector<8x32xf32>
    %cst_337 = arith.constant 9.99999974E-6 : f32
    %678 = vector.broadcast %cst_337 : f32 to vector<8x1xf32>
    %679 = arith.addf %675, %678 : vector<8x1xf32>
    %680 = math.rsqrt %679 : vector<8x1xf32>
    %681 = vector.broadcast %680 : vector<8x1xf32> to vector<8x32xf32>
    %682 = arith.mulf %677, %681 : vector<8x32xf32>
    %683 = vector.broadcast %661 : vector<1x32xf32> to vector<8x32xf32>
    %684 = arith.mulf %682, %683 : vector<8x32xf32>
    %685 = vector.broadcast %663 : vector<1x32xf32> to vector<8x32xf32>
    %686 = arith.addf %684, %685 : vector<8x32xf32>
    %c4_338 = arith.constant 4 : index
    %c0_339 = arith.constant 0 : index
    %c0_340 = arith.constant 0 : index
    %687 = vector.load %arg19[%c4_338, %c0_339, %c0_340] : memref<6x32x128xf32, #tpu.memory_space<vmem>>, vector<1x32x128xf32>
    %688 = vector.shape_cast %687 : vector<1x32x128xf32> to vector<32x128xf32>
    %cst_341 = arith.constant dense<0.000000e+00> : vector<8x128xf32>
    %689 = tpu.matmul %686, %688, %cst_341 {dimension_numbers = #tpu.dot_dimension_numbers<[1], [0], [0], [1], [0, 0, 1, 1], [], []>} : vector<8x32xf32>, vector<32x128xf32>, vector<8x128xf32> -> vector<8x128xf32>
    %c4_342 = arith.constant 4 : index
    %c0_343 = arith.constant 0 : index
    %c0_344 = arith.constant 0 : index
    %690 = vector.load %arg20[%c4_342, %c0_343, %c0_344] : memref<6x1x128xf32, #tpu.memory_space<vmem>>, vector<1x1x128xf32>
    %691 = vector.shape_cast %690 : vector<1x1x128xf32> to vector<1x128xf32>
    %692 = vector.broadcast %691 : vector<1x128xf32> to vector<8x128xf32>
    %693 = arith.addf %689, %692 : vector<8x128xf32>
    %cst_345 = arith.constant 5.000000e-01 : f32
    %694 = vector.broadcast %cst_345 : f32 to vector<8x128xf32>
    %695 = arith.mulf %694, %693 : vector<8x128xf32>
    %cst_346 = arith.constant 4.471500e-02 : f32
    %696 = vector.broadcast %cst_346 : f32 to vector<8x128xf32>
    %697 = arith.mulf %696, %693 : vector<8x128xf32>
    %698 = arith.mulf %697, %693 : vector<8x128xf32>
    %699 = arith.mulf %698, %693 : vector<8x128xf32>
    %700 = arith.addf %693, %699 : vector<8x128xf32>
    %cst_347 = arith.constant 0.797884583 : f32
    %701 = vector.broadcast %cst_347 : f32 to vector<8x128xf32>
    %702 = arith.mulf %701, %700 : vector<8x128xf32>
    %703 = math.tanh %702 : vector<8x128xf32>
    %cst_348 = arith.constant 1.000000e+00 : f32
    %704 = vector.broadcast %cst_348 : f32 to vector<8x128xf32>
    %705 = arith.addf %704, %703 : vector<8x128xf32>
    %706 = arith.mulf %695, %705 : vector<8x128xf32>
    %c4_349 = arith.constant 4 : index
    %c0_350 = arith.constant 0 : index
    %c0_351 = arith.constant 0 : index
    %707 = vector.load %arg21[%c4_349, %c0_350, %c0_351] : memref<6x128x32xf32, #tpu.memory_space<vmem>>, vector<1x128x32xf32>
    %708 = vector.shape_cast %707 : vector<1x128x32xf32> to vector<128x32xf32>
    %cst_352 = arith.constant dense<0.000000e+00> : vector<8x32xf32>
    %709 = tpu.matmul %706, %708, %cst_352 {dimension_numbers = #tpu.dot_dimension_numbers<[1], [0], [0], [1], [0, 0, 1, 1], [], []>} : vector<8x128xf32>, vector<128x32xf32>, vector<8x32xf32> -> vector<8x32xf32>
    %710 = arith.addf %659, %709 : vector<8x32xf32>
    %c4_353 = arith.constant 4 : index
    %c0_354 = arith.constant 0 : index
    %c0_355 = arith.constant 0 : index
    %711 = vector.load %arg22[%c4_353, %c0_354, %c0_355] : memref<6x1x32xf32, #tpu.memory_space<vmem>>, vector<1x1x32xf32>
    %712 = vector.shape_cast %711 : vector<1x1x32xf32> to vector<1x32xf32>
    %713 = vector.broadcast %712 : vector<1x32xf32> to vector<8x32xf32>
    %714 = arith.addf %710, %713 : vector<8x32xf32>
    %c5 = arith.constant 5 : index
    %c0_356 = arith.constant 0 : index
    %c0_357 = arith.constant 0 : index
    %715 = vector.load %arg7[%c5, %c0_356, %c0_357] : memref<6x1x32xf32, #tpu.memory_space<vmem>>, vector<1x1x32xf32>
    %716 = vector.shape_cast %715 : vector<1x1x32xf32> to vector<1x32xf32>
    %c5_358 = arith.constant 5 : index
    %c0_359 = arith.constant 0 : index
    %c0_360 = arith.constant 0 : index
    %717 = vector.load %arg8[%c5_358, %c0_359, %c0_360] : memref<6x1x32xf32, #tpu.memory_space<vmem>>, vector<1x1x32xf32>
    %718 = vector.shape_cast %717 : vector<1x1x32xf32> to vector<1x32xf32>
    %719 = arith.mulf %714, %714 : vector<8x32xf32>
    %720 = tpu.concatenate %714, %719 in 0 : vector<8x32xf32>, vector<8x32xf32> -> vector<16x32xf32>
    %cst_361 = arith.constant dense<0.000000e+00> : vector<16xf32>
    %721 = vector.multi_reduction <add>, %720, %cst_361 [1] : vector<16x32xf32> to vector<16xf32>
    %722 = vector.shape_cast %721 : vector<16xf32> to vector<16x1xf32>
    %723 = vector.extract_strided_slice %722 {offsets = [0, 0], sizes = [8, 1], strides = [1, 1]} : vector<16x1xf32> to vector<8x1xf32>
    %cst_362 = arith.constant 3.125000e-02 : f32
    %724 = vector.broadcast %cst_362 : f32 to vector<8x1xf32>
    %725 = arith.mulf %723, %724 : vector<8x1xf32>
    %726 = vector.extract_strided_slice %722 {offsets = [8, 0], sizes = [8, 1], strides = [1, 1]} : vector<16x1xf32> to vector<8x1xf32>
    %cst_363 = arith.constant 3.125000e-02 : f32
    %727 = vector.broadcast %cst_363 : f32 to vector<8x1xf32>
    %728 = arith.mulf %726, %727 : vector<8x1xf32>
    %729 = arith.mulf %725, %725 : vector<8x1xf32>
    %730 = arith.subf %728, %729 : vector<8x1xf32>
    %731 = vector.broadcast %725 : vector<8x1xf32> to vector<8x32xf32>
    %732 = arith.subf %714, %731 : vector<8x32xf32>
    %cst_364 = arith.constant 9.99999974E-6 : f32
    %733 = vector.broadcast %cst_364 : f32 to vector<8x1xf32>
    %734 = arith.addf %730, %733 : vector<8x1xf32>
    %735 = math.rsqrt %734 : vector<8x1xf32>
    %736 = vector.broadcast %735 : vector<8x1xf32> to vector<8x32xf32>
    %737 = arith.mulf %732, %736 : vector<8x32xf32>
    %738 = vector.broadcast %716 : vector<1x32xf32> to vector<8x32xf32>
    %739 = arith.mulf %737, %738 : vector<8x32xf32>
    %740 = vector.broadcast %718 : vector<1x32xf32> to vector<8x32xf32>
    %741 = arith.addf %739, %740 : vector<8x32xf32>
    %c5_365 = arith.constant 5 : index
    %c0_366 = arith.constant 0 : index
    %c0_367 = arith.constant 0 : index
    %742 = vector.load %arg9[%c5_365, %c0_366, %c0_367] : memref<6x32x32xf32, #tpu.memory_space<vmem>>, vector<1x32x32xf32>
    %743 = vector.shape_cast %742 : vector<1x32x32xf32> to vector<32x32xf32>
    %cst_368 = arith.constant dense<0.000000e+00> : vector<8x32xf32>
    %744 = tpu.matmul %741, %743, %cst_368 {dimension_numbers = #tpu.dot_dimension_numbers<[1], [0], [0], [1], [0, 0, 1, 1], [], []>} : vector<8x32xf32>, vector<32x32xf32>, vector<8x32xf32> -> vector<8x32xf32>
    %c5_369 = arith.constant 5 : index
    %c0_370 = arith.constant 0 : index
    %c0_371 = arith.constant 0 : index
    %745 = vector.load %arg10[%c5_369, %c0_370, %c0_371] : memref<6x1x32xf32, #tpu.memory_space<vmem>>, vector<1x1x32xf32>
    %746 = vector.shape_cast %745 : vector<1x1x32xf32> to vector<1x32xf32>
    %747 = vector.broadcast %746 : vector<1x32xf32> to vector<8x32xf32>
    %748 = arith.addf %744, %747 : vector<8x32xf32>
    %c5_372 = arith.constant 5 : index
    %c0_373 = arith.constant 0 : index
    %c0_374 = arith.constant 0 : index
    %749 = vector.load %arg11[%c5_372, %c0_373, %c0_374] : memref<6x32x32xf32, #tpu.memory_space<vmem>>, vector<1x32x32xf32>
    %750 = vector.shape_cast %749 : vector<1x32x32xf32> to vector<32x32xf32>
    %cst_375 = arith.constant dense<0.000000e+00> : vector<8x32xf32>
    %751 = tpu.matmul %741, %750, %cst_375 {dimension_numbers = #tpu.dot_dimension_numbers<[1], [0], [0], [1], [0, 0, 1, 1], [], []>} : vector<8x32xf32>, vector<32x32xf32>, vector<8x32xf32> -> vector<8x32xf32>
    %c5_376 = arith.constant 5 : index
    %c0_377 = arith.constant 0 : index
    %c0_378 = arith.constant 0 : index
    %752 = vector.load %arg12[%c5_376, %c0_377, %c0_378] : memref<6x1x32xf32, #tpu.memory_space<vmem>>, vector<1x1x32xf32>
    %753 = vector.shape_cast %752 : vector<1x1x32xf32> to vector<1x32xf32>
    %754 = vector.broadcast %753 : vector<1x32xf32> to vector<8x32xf32>
    %755 = arith.addf %751, %754 : vector<8x32xf32>
    %c5_379 = arith.constant 5 : index
    %c0_380 = arith.constant 0 : index
    %c0_381 = arith.constant 0 : index
    %756 = vector.load %arg13[%c5_379, %c0_380, %c0_381] : memref<6x32x32xf32, #tpu.memory_space<vmem>>, vector<1x32x32xf32>
    %757 = vector.shape_cast %756 : vector<1x32x32xf32> to vector<32x32xf32>
    %cst_382 = arith.constant dense<0.000000e+00> : vector<8x32xf32>
    %758 = tpu.matmul %741, %757, %cst_382 {dimension_numbers = #tpu.dot_dimension_numbers<[1], [0], [0], [1], [0, 0, 1, 1], [], []>} : vector<8x32xf32>, vector<32x32xf32>, vector<8x32xf32> -> vector<8x32xf32>
    %c5_383 = arith.constant 5 : index
    %c0_384 = arith.constant 0 : index
    %c0_385 = arith.constant 0 : index
    %759 = vector.load %arg14[%c5_383, %c0_384, %c0_385] : memref<6x1x32xf32, #tpu.memory_space<vmem>>, vector<1x1x32xf32>
    %760 = vector.shape_cast %759 : vector<1x1x32xf32> to vector<1x32xf32>
    %761 = vector.broadcast %760 : vector<1x32xf32> to vector<8x32xf32>
    %762 = arith.addf %758, %761 : vector<8x32xf32>
    %763 = tpu.concatenate %748, %748, %748, %748 in 0 : vector<8x32xf32>, vector<8x32xf32>, vector<8x32xf32>, vector<8x32xf32> -> vector<32x32xf32>
    %764 = arith.mulf %763, %42 : vector<32x32xf32>
    %cst_386 = arith.constant dense<0.000000e+00> : vector<32x8xf32>
    %765 = tpu.matmul %764, %755, %cst_386 {dimension_numbers = #tpu.dot_dimension_numbers<[1], [1], [0], [0], [0, 0, 1, 0], [], []>} : vector<32x32xf32>, vector<8x32xf32>, vector<32x8xf32> -> vector<32x8xf32>
    %766 = arith.addf %765, %12 : vector<32x8xf32>
    %cst_387 = arith.constant dense<0xFF800000> : vector<32xf32>
    %767 = vector.multi_reduction <maximumf>, %766, %cst_387 [1] : vector<32x8xf32> to vector<32xf32>
    %768 = vector.shape_cast %767 : vector<32xf32> to vector<32x1xf32>
    %769 = vector.broadcast %768 : vector<32x1xf32> to vector<32x8xf32>
    %770 = arith.subf %766, %769 : vector<32x8xf32>
    %771 = math.exp %770 : vector<32x8xf32>
    %cst_388 = arith.constant dense<0.000000e+00> : vector<32xf32>
    %772 = vector.multi_reduction <add>, %771, %cst_388 [1] : vector<32x8xf32> to vector<32xf32>
    %773 = vector.shape_cast %772 : vector<32xf32> to vector<32x1xf32>
    %774 = tpu.reciprocal %773 {approx = true} : vector<32x1xf32> -> vector<32x1xf32>
    %775 = vector.broadcast %774 : vector<32x1xf32> to vector<32x8xf32>
    %776 = arith.mulf %771, %775 : vector<32x8xf32>
    %cst_389 = arith.constant dense<0.000000e+00> : vector<32x32xf32>
    %777 = tpu.matmul %776, %762, %cst_389 {dimension_numbers = #tpu.dot_dimension_numbers<[1], [0], [0], [1], [0, 0, 1, 1], [], []>} : vector<32x8xf32>, vector<8x32xf32>, vector<32x32xf32> -> vector<32x32xf32>
    %778 = arith.mulf %777, %42 : vector<32x32xf32>
    %c5_390 = arith.constant 5 : index
    %c0_391 = arith.constant 0 : index
    %c0_392 = arith.constant 0 : index
    %779 = vector.load %arg15[%c5_390, %c0_391, %c0_392] : memref<6x32x32xf32, #tpu.memory_space<vmem>>, vector<1x32x32xf32>
    %780 = vector.shape_cast %779 : vector<1x32x32xf32> to vector<32x32xf32>
    %cst_393 = arith.constant dense<0.000000e+00> : vector<32x32xf32>
    %781 = tpu.matmul %778, %780, %cst_393 {dimension_numbers = #tpu.dot_dimension_numbers<[1], [0], [0], [1], [0, 0, 1, 1], [], []>} : vector<32x32xf32>, vector<32x32xf32>, vector<32x32xf32> -> vector<32x32xf32>
    %782 = vector.extract_strided_slice %781 {offsets = [0, 0], sizes = [8, 32], strides = [1, 1]} : vector<32x32xf32> to vector<8x32xf32>
    %783 = vector.extract_strided_slice %781 {offsets = [8, 0], sizes = [8, 32], strides = [1, 1]} : vector<32x32xf32> to vector<8x32xf32>
    %784 = arith.addf %782, %783 : vector<8x32xf32>
    %785 = vector.extract_strided_slice %781 {offsets = [16, 0], sizes = [8, 32], strides = [1, 1]} : vector<32x32xf32> to vector<8x32xf32>
    %786 = arith.addf %784, %785 : vector<8x32xf32>
    %787 = vector.extract_strided_slice %781 {offsets = [24, 0], sizes = [8, 32], strides = [1, 1]} : vector<32x32xf32> to vector<8x32xf32>
    %788 = arith.addf %786, %787 : vector<8x32xf32>
    %789 = arith.addf %714, %788 : vector<8x32xf32>
    %c5_394 = arith.constant 5 : index
    %c0_395 = arith.constant 0 : index
    %c0_396 = arith.constant 0 : index
    %790 = vector.load %arg16[%c5_394, %c0_395, %c0_396] : memref<6x1x32xf32, #tpu.memory_space<vmem>>, vector<1x1x32xf32>
    %791 = vector.shape_cast %790 : vector<1x1x32xf32> to vector<1x32xf32>
    %792 = vector.broadcast %791 : vector<1x32xf32> to vector<8x32xf32>
    %793 = arith.addf %789, %792 : vector<8x32xf32>
    %c5_397 = arith.constant 5 : index
    %c0_398 = arith.constant 0 : index
    %c0_399 = arith.constant 0 : index
    %794 = vector.load %arg17[%c5_397, %c0_398, %c0_399] : memref<6x1x32xf32, #tpu.memory_space<vmem>>, vector<1x1x32xf32>
    %795 = vector.shape_cast %794 : vector<1x1x32xf32> to vector<1x32xf32>
    %c5_400 = arith.constant 5 : index
    %c0_401 = arith.constant 0 : index
    %c0_402 = arith.constant 0 : index
    %796 = vector.load %arg18[%c5_400, %c0_401, %c0_402] : memref<6x1x32xf32, #tpu.memory_space<vmem>>, vector<1x1x32xf32>
    %797 = vector.shape_cast %796 : vector<1x1x32xf32> to vector<1x32xf32>
    %798 = arith.mulf %793, %793 : vector<8x32xf32>
    %799 = tpu.concatenate %793, %798 in 0 : vector<8x32xf32>, vector<8x32xf32> -> vector<16x32xf32>
    %cst_403 = arith.constant dense<0.000000e+00> : vector<16xf32>
    %800 = vector.multi_reduction <add>, %799, %cst_403 [1] : vector<16x32xf32> to vector<16xf32>
    %801 = vector.shape_cast %800 : vector<16xf32> to vector<16x1xf32>
    %802 = vector.extract_strided_slice %801 {offsets = [0, 0], sizes = [8, 1], strides = [1, 1]} : vector<16x1xf32> to vector<8x1xf32>
    %cst_404 = arith.constant 3.125000e-02 : f32
    %803 = vector.broadcast %cst_404 : f32 to vector<8x1xf32>
    %804 = arith.mulf %802, %803 : vector<8x1xf32>
    %805 = vector.extract_strided_slice %801 {offsets = [8, 0], sizes = [8, 1], strides = [1, 1]} : vector<16x1xf32> to vector<8x1xf32>
    %cst_405 = arith.constant 3.125000e-02 : f32
    %806 = vector.broadcast %cst_405 : f32 to vector<8x1xf32>
    %807 = arith.mulf %805, %806 : vector<8x1xf32>
    %808 = arith.mulf %804, %804 : vector<8x1xf32>
    %809 = arith.subf %807, %808 : vector<8x1xf32>
    %810 = vector.broadcast %804 : vector<8x1xf32> to vector<8x32xf32>
    %811 = arith.subf %793, %810 : vector<8x32xf32>
    %cst_406 = arith.constant 9.99999974E-6 : f32
    %812 = vector.broadcast %cst_406 : f32 to vector<8x1xf32>
    %813 = arith.addf %809, %812 : vector<8x1xf32>
    %814 = math.rsqrt %813 : vector<8x1xf32>
    %815 = vector.broadcast %814 : vector<8x1xf32> to vector<8x32xf32>
    %816 = arith.mulf %811, %815 : vector<8x32xf32>
    %817 = vector.broadcast %795 : vector<1x32xf32> to vector<8x32xf32>
    %818 = arith.mulf %816, %817 : vector<8x32xf32>
    %819 = vector.broadcast %797 : vector<1x32xf32> to vector<8x32xf32>
    %820 = arith.addf %818, %819 : vector<8x32xf32>
    %c5_407 = arith.constant 5 : index
    %c0_408 = arith.constant 0 : index
    %c0_409 = arith.constant 0 : index
    %821 = vector.load %arg19[%c5_407, %c0_408, %c0_409] : memref<6x32x128xf32, #tpu.memory_space<vmem>>, vector<1x32x128xf32>
    %822 = vector.shape_cast %821 : vector<1x32x128xf32> to vector<32x128xf32>
    %cst_410 = arith.constant dense<0.000000e+00> : vector<8x128xf32>
    %823 = tpu.matmul %820, %822, %cst_410 {dimension_numbers = #tpu.dot_dimension_numbers<[1], [0], [0], [1], [0, 0, 1, 1], [], []>} : vector<8x32xf32>, vector<32x128xf32>, vector<8x128xf32> -> vector<8x128xf32>
    %c5_411 = arith.constant 5 : index
    %c0_412 = arith.constant 0 : index
    %c0_413 = arith.constant 0 : index
    %824 = vector.load %arg20[%c5_411, %c0_412, %c0_413] : memref<6x1x128xf32, #tpu.memory_space<vmem>>, vector<1x1x128xf32>
    %825 = vector.shape_cast %824 : vector<1x1x128xf32> to vector<1x128xf32>
    %826 = vector.broadcast %825 : vector<1x128xf32> to vector<8x128xf32>
    %827 = arith.addf %823, %826 : vector<8x128xf32>
    %cst_414 = arith.constant 5.000000e-01 : f32
    %828 = vector.broadcast %cst_414 : f32 to vector<8x128xf32>
    %829 = arith.mulf %828, %827 : vector<8x128xf32>
    %cst_415 = arith.constant 4.471500e-02 : f32
    %830 = vector.broadcast %cst_415 : f32 to vector<8x128xf32>
    %831 = arith.mulf %830, %827 : vector<8x128xf32>
    %832 = arith.mulf %831, %827 : vector<8x128xf32>
    %833 = arith.mulf %832, %827 : vector<8x128xf32>
    %834 = arith.addf %827, %833 : vector<8x128xf32>
    %cst_416 = arith.constant 0.797884583 : f32
    %835 = vector.broadcast %cst_416 : f32 to vector<8x128xf32>
    %836 = arith.mulf %835, %834 : vector<8x128xf32>
    %837 = math.tanh %836 : vector<8x128xf32>
    %cst_417 = arith.constant 1.000000e+00 : f32
    %838 = vector.broadcast %cst_417 : f32 to vector<8x128xf32>
    %839 = arith.addf %838, %837 : vector<8x128xf32>
    %840 = arith.mulf %829, %839 : vector<8x128xf32>
    %c5_418 = arith.constant 5 : index
    %c0_419 = arith.constant 0 : index
    %c0_420 = arith.constant 0 : index
    %841 = vector.load %arg21[%c5_418, %c0_419, %c0_420] : memref<6x128x32xf32, #tpu.memory_space<vmem>>, vector<1x128x32xf32>
    %842 = vector.shape_cast %841 : vector<1x128x32xf32> to vector<128x32xf32>
    %cst_421 = arith.constant dense<0.000000e+00> : vector<8x32xf32>
    %843 = tpu.matmul %840, %842, %cst_421 {dimension_numbers = #tpu.dot_dimension_numbers<[1], [0], [0], [1], [0, 0, 1, 1], [], []>} : vector<8x128xf32>, vector<128x32xf32>, vector<8x32xf32> -> vector<8x32xf32>
    %844 = arith.addf %793, %843 : vector<8x32xf32>
    %c5_422 = arith.constant 5 : index
    %c0_423 = arith.constant 0 : index
    %c0_424 = arith.constant 0 : index
    %845 = vector.load %arg22[%c5_422, %c0_423, %c0_424] : memref<6x1x32xf32, #tpu.memory_space<vmem>>, vector<1x1x32xf32>
    %846 = vector.shape_cast %845 : vector<1x1x32xf32> to vector<1x32xf32>
    %847 = vector.broadcast %846 : vector<1x32xf32> to vector<8x32xf32>
    %848 = arith.addf %844, %847 : vector<8x32xf32>
    %c0_425 = arith.constant 0 : index
    %c0_426 = arith.constant 0 : index
    %849 = vector.load %arg23[%c0_425, %c0_426] : memref<1x32xf32, #tpu.memory_space<vmem>>, vector<1x32xf32>
    %c0_427 = arith.constant 0 : index
    %c0_428 = arith.constant 0 : index
    %850 = vector.load %arg24[%c0_427, %c0_428] : memref<1x32xf32, #tpu.memory_space<vmem>>, vector<1x32xf32>
    %851 = arith.mulf %848, %848 : vector<8x32xf32>
    %852 = tpu.concatenate %848, %851 in 0 : vector<8x32xf32>, vector<8x32xf32> -> vector<16x32xf32>
    %cst_429 = arith.constant dense<0.000000e+00> : vector<16xf32>
    %853 = vector.multi_reduction <add>, %852, %cst_429 [1] : vector<16x32xf32> to vector<16xf32>
    %854 = vector.shape_cast %853 : vector<16xf32> to vector<16x1xf32>
    %855 = vector.extract_strided_slice %854 {offsets = [0, 0], sizes = [8, 1], strides = [1, 1]} : vector<16x1xf32> to vector<8x1xf32>
    %cst_430 = arith.constant 3.125000e-02 : f32
    %856 = vector.broadcast %cst_430 : f32 to vector<8x1xf32>
    %857 = arith.mulf %855, %856 : vector<8x1xf32>
    %858 = vector.extract_strided_slice %854 {offsets = [8, 0], sizes = [8, 1], strides = [1, 1]} : vector<16x1xf32> to vector<8x1xf32>
    %cst_431 = arith.constant 3.125000e-02 : f32
    %859 = vector.broadcast %cst_431 : f32 to vector<8x1xf32>
    %860 = arith.mulf %858, %859 : vector<8x1xf32>
    %861 = arith.mulf %857, %857 : vector<8x1xf32>
    %862 = arith.subf %860, %861 : vector<8x1xf32>
    %863 = vector.broadcast %857 : vector<8x1xf32> to vector<8x32xf32>
    %864 = arith.subf %848, %863 : vector<8x32xf32>
    %cst_432 = arith.constant 9.99999974E-6 : f32
    %865 = vector.broadcast %cst_432 : f32 to vector<8x1xf32>
    %866 = arith.addf %862, %865 : vector<8x1xf32>
    %867 = math.rsqrt %866 : vector<8x1xf32>
    %868 = vector.broadcast %867 : vector<8x1xf32> to vector<8x32xf32>
    %869 = arith.mulf %864, %868 : vector<8x32xf32>
    %870 = vector.broadcast %849 : vector<1x32xf32> to vector<8x32xf32>
    %871 = arith.mulf %869, %870 : vector<8x32xf32>
    %872 = vector.broadcast %850 : vector<1x32xf32> to vector<8x32xf32>
    %873 = arith.addf %871, %872 : vector<8x32xf32>
    %c0_433 = arith.constant 0 : index
    %c0_434 = arith.constant 0 : index
    %c0_435 = arith.constant 0 : index
    %874 = vector.load %arg4[%c0_433, %c0_434, %c0_435] : memref<1x1x32xf32, #tpu.memory_space<vmem>>, vector<1x1x32xf32>
    %875 = vector.shape_cast %874 : vector<1x1x32xf32> to vector<1x32xf32>
    %c0_436 = arith.constant 0 : index
    %c0_437 = arith.constant 0 : index
    %876 = vector.load %arg27[%c0_436, %c0_437] : memref<32x100xf32, #tpu.memory_space<vmem>>, vector<32x100xf32>
    %cst_438 = arith.constant dense<0.000000e+00> : vector<1x100xf32>
    %877 = tpu.matmul %875, %876, %cst_438 {dimension_numbers = #tpu.dot_dimension_numbers<[1], [0], [0], [1], [0, 0, 1, 1], [], []>} : vector<1x32xf32>, vector<32x100xf32>, vector<1x100xf32> -> vector<1x100xf32>
    %c0_439 = arith.constant 0 : index
    %c0_440 = arith.constant 0 : index
    %878 = vector.load %arg25[%c0_439, %c0_440] : memref<32x100xf32, #tpu.memory_space<vmem>>, vector<32x100xf32>
    %cst_441 = arith.constant dense<0.000000e+00> : vector<8x100xf32>
    %879 = tpu.matmul %873, %878, %cst_441 {dimension_numbers = #tpu.dot_dimension_numbers<[1], [0], [0], [1], [0, 0, 1, 1], [], []>} : vector<8x32xf32>, vector<32x100xf32>, vector<8x100xf32> -> vector<8x100xf32>
    %c0_442 = arith.constant 0 : index
    %c0_443 = arith.constant 0 : index
    %c0_444 = arith.constant 0 : index
    %880 = vector.load %arg3[%c0_442, %c0_443, %c0_444] : memref<1x8x8xf32, #tpu.memory_space<vmem>>, vector<1x8x8xf32>
    %881 = vector.shape_cast %880 : vector<1x8x8xf32> to vector<8x8xf32>
    %c0_445 = arith.constant 0 : index
    %c0_446 = arith.constant 0 : index
    %882 = vector.load %arg26[%c0_445, %c0_446] : memref<8x100xf32, #tpu.memory_space<vmem>>, vector<8x100xf32>
    %cst_447 = arith.constant dense<0.000000e+00> : vector<8x100xf32>
    %883 = tpu.matmul %881, %882, %cst_447 {dimension_numbers = #tpu.dot_dimension_numbers<[1], [0], [0], [1], [0, 0, 1, 1], [], []>} : vector<8x8xf32>, vector<8x100xf32>, vector<8x100xf32> -> vector<8x100xf32>
    %884 = arith.addf %879, %883 : vector<8x100xf32>
    %885 = vector.broadcast %877 : vector<1x100xf32> to vector<8x100xf32>
    %886 = arith.addf %884, %885 : vector<8x100xf32>
    %c0_448 = arith.constant 0 : index
    %c0_449 = arith.constant 0 : index
    %887 = vector.load %arg28[%c0_448, %c0_449] : memref<1x100xf32, #tpu.memory_space<vmem>>, vector<1x100xf32>
    %888 = vector.broadcast %887 : vector<1x100xf32> to vector<8x100xf32>
    %889 = arith.addf %886, %888 : vector<8x100xf32>
    %cst_450 = arith.constant 0.000000e+00 : f32
    %890 = vector.broadcast %cst_450 : f32 to vector<8x100xf32>
    %891 = arith.maximumf %889, %890 : vector<8x100xf32>
    %c0_451 = arith.constant 0 : index
    %c0_452 = arith.constant 0 : index
    %892 = vector.load %arg29[%c0_451, %c0_452] : memref<100x50xf32, #tpu.memory_space<vmem>>, vector<100x50xf32>
    %cst_453 = arith.constant dense<0.000000e+00> : vector<8x50xf32>
    %893 = tpu.matmul %891, %892, %cst_453 {dimension_numbers = #tpu.dot_dimension_numbers<[1], [0], [0], [1], [0, 0, 1, 1], [], []>} : vector<8x100xf32>, vector<100x50xf32>, vector<8x50xf32> -> vector<8x50xf32>
    %c0_454 = arith.constant 0 : index
    %c0_455 = arith.constant 0 : index
    %894 = vector.load %arg30[%c0_454, %c0_455] : memref<1x50xf32, #tpu.memory_space<vmem>>, vector<1x50xf32>
    %895 = vector.broadcast %894 : vector<1x50xf32> to vector<8x50xf32>
    %896 = arith.addf %893, %895 : vector<8x50xf32>
    %cst_456 = arith.constant 0.000000e+00 : f32
    %897 = vector.broadcast %cst_456 : f32 to vector<8x50xf32>
    %898 = arith.maximumf %896, %897 : vector<8x50xf32>
    %c0_457 = arith.constant 0 : index
    %c0_458 = arith.constant 0 : index
    %899 = vector.load %arg31[%c0_457, %c0_458] : memref<50x3xf32, #tpu.memory_space<vmem>>, vector<50x3xf32>
    %cst_459 = arith.constant dense<0.000000e+00> : vector<8x3xf32>
    %900 = tpu.matmul %898, %899, %cst_459 {dimension_numbers = #tpu.dot_dimension_numbers<[1], [0], [0], [1], [0, 0, 1, 1], [], []>} : vector<8x50xf32>, vector<50x3xf32>, vector<8x3xf32> -> vector<8x3xf32>
    %c0_460 = arith.constant 0 : index
    %c0_461 = arith.constant 0 : index
    %901 = vector.load %arg32[%c0_460, %c0_461] : memref<1x3xf32, #tpu.memory_space<vmem>>, vector<1x3xf32>
    %902 = vector.broadcast %901 : vector<1x3xf32> to vector<8x3xf32>
    %903 = arith.addf %900, %902 : vector<8x3xf32>
    %cst_462 = arith.constant dense<0xFF800000> : vector<8xf32>
    %904 = vector.multi_reduction <maximumf>, %903, %cst_462 [1] : vector<8x3xf32> to vector<8xf32>
    %905 = vector.shape_cast %904 : vector<8xf32> to vector<8x1xf32>
    %906 = vector.broadcast %905 : vector<8x1xf32> to vector<8x3xf32>
    %907 = arith.subf %903, %906 : vector<8x3xf32>
    %908 = math.exp %907 : vector<8x3xf32>
    %cst_463 = arith.constant dense<0.000000e+00> : vector<8xf32>
    %909 = vector.multi_reduction <add>, %908, %cst_463 [1] : vector<8x3xf32> to vector<8xf32>
    %910 = vector.shape_cast %909 : vector<8xf32> to vector<8x1xf32>
    %911 = math.log %910 : vector<8x1xf32>
    %912 = arith.addf %911, %905 : vector<8x1xf32>
    %c0_464 = arith.constant 0 : index
    %c0_465 = arith.constant 0 : index
    %c0_466 = arith.constant 0 : index
    %913 = vector.load %arg5[%c0_464, %c0_465, %c0_466] : memref<1x8x3xf32, #tpu.memory_space<vmem>>, vector<1x8x3xf32>
    %914 = vector.shape_cast %913 : vector<1x8x3xf32> to vector<8x3xf32>
    %915 = arith.mulf %903, %914 : vector<8x3xf32>
    %cst_467 = arith.constant dense<0.000000e+00> : vector<8xf32>
    %916 = vector.multi_reduction <add>, %915, %cst_467 [1] : vector<8x3xf32> to vector<8xf32>
    %917 = vector.shape_cast %916 : vector<8xf32> to vector<8x1xf32>
    %918 = arith.subf %912, %917 : vector<8x1xf32>
    %c0_468 = arith.constant 0 : index
    %c0_469 = arith.constant 0 : index
    %c0_470 = arith.constant 0 : index
    %919 = vector.load %arg6[%c0_468, %c0_469, %c0_470] : memref<1x8x1xf32, #tpu.memory_space<vmem>>, vector<1x8x1xf32>
    %920 = vector.shape_cast %919 : vector<1x8x1xf32> to vector<8x1xf32>
    %921 = arith.mulf %918, %920 : vector<8x1xf32>
    %cst_471 = arith.constant dense<0.000000e+00> : vector<1xf32>
    %922 = vector.multi_reduction <add>, %921, %cst_471 [0] : vector<8x1xf32> to vector<1xf32>
    %923 = vector.shape_cast %922 : vector<1xf32> to vector<1x1xf32>
    %c0_472 = arith.constant 0 : index
    %c0_473 = arith.constant 0 : index
    %c0_474 = arith.constant 0 : index
    %924 = vector.load %arg33[%c0_472, %c0_473, %c0_474] : memref<1x1x1xf32, #tpu.memory_space<vmem>>, vector<1x1x1xf32>
    %925 = vector.shape_cast %924 : vector<1x1x1xf32> to vector<1x1xf32>
    %926 = vector.shape_cast %923 : vector<1x1xf32> to vector<1x1x1xf32>
    tpu.vector_store %arg33[%c0_472, %c0_473, %c0_474], %926 {strides = array<i32>} : memref<1x1x1xf32, #tpu.memory_space<vmem>>, vector<1x1x1xf32>,
    return
  }
  func.func @transform_0(%arg0: i32) -> (i32, i32, i32) {
    %c0_i32 = arith.constant 0 : i32
    %c0_i32_0 = arith.constant 0 : i32
    %c0_i32_1 = arith.constant 0 : i32
    return %arg0, %c0_i32, %c0_i32_0 : i32, i32, i32
  }
  func.func @transform_1(%arg0: i32) -> (i32, i32, i32) {
    %c0_i32 = arith.constant 0 : i32
    %c0_i32_0 = arith.constant 0 : i32
    %c0_i32_1 = arith.constant 0 : i32
    return %arg0, %c0_i32, %c0_i32_0 : i32, i32, i32
  }
  func.func @transform_2(%arg0: i32) -> (i32, i32, i32) {
    %c0_i32 = arith.constant 0 : i32
    %c0_i32_0 = arith.constant 0 : i32
    %c0_i32_1 = arith.constant 0 : i32
    return %arg0, %c0_i32, %c0_i32_0 : i32, i32, i32
  }
  func.func @transform_3(%arg0: i32) -> (i32, i32, i32) {
    %c0_i32 = arith.constant 0 : i32
    %c0_i32_0 = arith.constant 0 : i32
    %c0_i32_1 = arith.constant 0 : i32
    return %arg0, %c0_i32, %c0_i32_0 : i32, i32, i32
  }
  func.func @transform_4(%arg0: i32) -> (i32, i32, i32) {
    %c0_i32 = arith.constant 0 : i32
    %c0_i32_0 = arith.constant 0 : i32
    %c0_i32_1 = arith.constant 0 : i32
    return %arg0, %c0_i32, %c0_i32_0 : i32, i32, i32
  }
  func.func @transform_5(%arg0: i32) -> (i32, i32, i32) {
    %c0_i32 = arith.constant 0 : i32
    %c0_i32_0 = arith.constant 0 : i32
    %c0_i32_1 = arith.constant 0 : i32
    return %arg0, %c0_i32, %c0_i32_0 : i32, i32, i32
  }
  func.func @transform_6(%arg0: i32) -> (i32, i32, i32) {
    %c0_i32 = arith.constant 0 : i32
    %c0_i32_0 = arith.constant 0 : i32
    %c0_i32_1 = arith.constant 0 : i32
    %c0_i32_2 = arith.constant 0 : i32
    return %c0_i32, %c0_i32_0, %c0_i32_1 : i32, i32, i32
  }
  func.func @transform_7(%arg0: i32) -> (i32, i32, i32) {
    %c0_i32 = arith.constant 0 : i32
    %c0_i32_0 = arith.constant 0 : i32
    %c0_i32_1 = arith.constant 0 : i32
    %c0_i32_2 = arith.constant 0 : i32
    return %c0_i32, %c0_i32_0, %c0_i32_1 : i32, i32, i32
  }
  func.func @transform_8(%arg0: i32) -> (i32, i32, i32) {
    %c0_i32 = arith.constant 0 : i32
    %c0_i32_0 = arith.constant 0 : i32
    %c0_i32_1 = arith.constant 0 : i32
    %c0_i32_2 = arith.constant 0 : i32
    return %c0_i32, %c0_i32_0, %c0_i32_1 : i32, i32, i32
  }
  func.func @transform_9(%arg0: i32) -> (i32, i32, i32) {
    %c0_i32 = arith.constant 0 : i32
    %c0_i32_0 = arith.constant 0 : i32
    %c0_i32_1 = arith.constant 0 : i32
    %c0_i32_2 = arith.constant 0 : i32
    return %c0_i32, %c0_i32_0, %c0_i32_1 : i32, i32, i32
  }
  func.func @transform_10(%arg0: i32) -> (i32, i32, i32) {
    %c0_i32 = arith.constant 0 : i32
    %c0_i32_0 = arith.constant 0 : i32
    %c0_i32_1 = arith.constant 0 : i32
    %c0_i32_2 = arith.constant 0 : i32
    return %c0_i32, %c0_i32_0, %c0_i32_1 : i32, i32, i32
  }
  func.func @transform_11(%arg0: i32) -> (i32, i32, i32) {
    %c0_i32 = arith.constant 0 : i32
    %c0_i32_0 = arith.constant 0 : i32
    %c0_i32_1 = arith.constant 0 : i32
    %c0_i32_2 = arith.constant 0 : i32
    return %c0_i32, %c0_i32_0, %c0_i32_1 : i32, i32, i32
  }
  func.func @transform_12(%arg0: i32) -> (i32, i32, i32) {
    %c0_i32 = arith.constant 0 : i32
    %c0_i32_0 = arith.constant 0 : i32
    %c0_i32_1 = arith.constant 0 : i32
    %c0_i32_2 = arith.constant 0 : i32
    return %c0_i32, %c0_i32_0, %c0_i32_1 : i32, i32, i32
  }
  func.func @transform_13(%arg0: i32) -> (i32, i32, i32) {
    %c0_i32 = arith.constant 0 : i32
    %c0_i32_0 = arith.constant 0 : i32
    %c0_i32_1 = arith.constant 0 : i32
    %c0_i32_2 = arith.constant 0 : i32
    return %c0_i32, %c0_i32_0, %c0_i32_1 : i32, i32, i32
  }
  func.func @transform_14(%arg0: i32) -> (i32, i32, i32) {
    %c0_i32 = arith.constant 0 : i32
    %c0_i32_0 = arith.constant 0 : i32
    %c0_i32_1 = arith.constant 0 : i32
    %c0_i32_2 = arith.constant 0 : i32
    return %c0_i32, %c0_i32_0, %c0_i32_1 : i32, i32, i32
  }
  func.func @transform_15(%arg0: i32) -> (i32, i32, i32) {
    %c0_i32 = arith.constant 0 : i32
    %c0_i32_0 = arith.constant 0 : i32
    %c0_i32_1 = arith.constant 0 : i32
    %c0_i32_2 = arith.constant 0 : i32
    return %c0_i32, %c0_i32_0, %c0_i32_1 : i32, i32, i32
  }
  func.func @transform_16(%arg0: i32) -> (i32, i32, i32) {
    %c0_i32 = arith.constant 0 : i32
    %c0_i32_0 = arith.constant 0 : i32
    %c0_i32_1 = arith.constant 0 : i32
    %c0_i32_2 = arith.constant 0 : i32
    return %c0_i32, %c0_i32_0, %c0_i32_1 : i32, i32, i32
  }
  func.func @transform_17(%arg0: i32) -> (i32, i32, i32) {
    %c0_i32 = arith.constant 0 : i32
    %c0_i32_0 = arith.constant 0 : i32
    %c0_i32_1 = arith.constant 0 : i32
    %c0_i32_2 = arith.constant 0 : i32
    return %c0_i32, %c0_i32_0, %c0_i32_1 : i32, i32, i32
  }
  func.func @transform_18(%arg0: i32) -> (i32, i32, i32) {
    %c0_i32 = arith.constant 0 : i32
    %c0_i32_0 = arith.constant 0 : i32
    %c0_i32_1 = arith.constant 0 : i32
    %c0_i32_2 = arith.constant 0 : i32
    return %c0_i32, %c0_i32_0, %c0_i32_1 : i32, i32, i32
  }
  func.func @transform_19(%arg0: i32) -> (i32, i32, i32) {
    %c0_i32 = arith.constant 0 : i32
    %c0_i32_0 = arith.constant 0 : i32
    %c0_i32_1 = arith.constant 0 : i32
    %c0_i32_2 = arith.constant 0 : i32
    return %c0_i32, %c0_i32_0, %c0_i32_1 : i32, i32, i32
  }
  func.func @transform_20(%arg0: i32) -> (i32, i32, i32) {
    %c0_i32 = arith.constant 0 : i32
    %c0_i32_0 = arith.constant 0 : i32
    %c0_i32_1 = arith.constant 0 : i32
    %c0_i32_2 = arith.constant 0 : i32
    return %c0_i32, %c0_i32_0, %c0_i32_1 : i32, i32, i32
  }
  func.func @transform_21(%arg0: i32) -> (i32, i32, i32) {
    %c0_i32 = arith.constant 0 : i32
    %c0_i32_0 = arith.constant 0 : i32
    %c0_i32_1 = arith.constant 0 : i32
    %c0_i32_2 = arith.constant 0 : i32
    return %c0_i32, %c0_i32_0, %c0_i32_1 : i32, i32, i32
  }
  func.func @transform_22(%arg0: i32) -> (i32, i32) {
    %c0_i32 = arith.constant 0 : i32
    %c0_i32_0 = arith.constant 0 : i32
    %c0_i32_1 = arith.constant 0 : i32
    return %c0_i32, %c0_i32_0 : i32, i32
  }
  func.func @transform_23(%arg0: i32) -> (i32, i32) {
    %c0_i32 = arith.constant 0 : i32
    %c0_i32_0 = arith.constant 0 : i32
    %c0_i32_1 = arith.constant 0 : i32
    return %c0_i32, %c0_i32_0 : i32, i32
  }
  func.func @transform_24(%arg0: i32) -> (i32, i32) {
    %c0_i32 = arith.constant 0 : i32
    %c0_i32_0 = arith.constant 0 : i32
    %c0_i32_1 = arith.constant 0 : i32
    return %c0_i32, %c0_i32_0 : i32, i32
  }
  func.func @transform_25(%arg0: i32) -> (i32, i32) {
    %c0_i32 = arith.constant 0 : i32
    %c0_i32_0 = arith.constant 0 : i32
    %c0_i32_1 = arith.constant 0 : i32
    return %c0_i32, %c0_i32_0 : i32, i32
  }
  func.func @transform_26(%arg0: i32) -> (i32, i32) {
    %c0_i32 = arith.constant 0 : i32
    %c0_i32_0 = arith.constant 0 : i32
    %c0_i32_1 = arith.constant 0 : i32
    return %c0_i32, %c0_i32_0 : i32, i32
  }
  func.func @transform_27(%arg0: i32) -> (i32, i32) {
    %c0_i32 = arith.constant 0 : i32
    %c0_i32_0 = arith.constant 0 : i32
    %c0_i32_1 = arith.constant 0 : i32
    return %c0_i32, %c0_i32_0 : i32, i32
  }
  func.func @transform_28(%arg0: i32) -> (i32, i32) {
    %c0_i32 = arith.constant 0 : i32
    %c0_i32_0 = arith.constant 0 : i32
    %c0_i32_1 = arith.constant 0 : i32
    return %c0_i32, %c0_i32_0 : i32, i32
  }
  func.func @transform_29(%arg0: i32) -> (i32, i32) {
    %c0_i32 = arith.constant 0 : i32
    %c0_i32_0 = arith.constant 0 : i32
    %c0_i32_1 = arith.constant 0 : i32
    return %c0_i32, %c0_i32_0 : i32, i32
  }
  func.func @transform_30(%arg0: i32) -> (i32, i32) {
    %c0_i32 = arith.constant 0 : i32
    %c0_i32_0 = arith.constant 0 : i32
    %c0_i32_1 = arith.constant 0 : i32
    return %c0_i32, %c0_i32_0 : i32, i32
  }
  func.func @transform_31(%arg0: i32) -> (i32, i32) {
    %c0_i32 = arith.constant 0 : i32
    %c0_i32_0 = arith.constant 0 : i32
    %c0_i32_1 = arith.constant 0 : i32
    return %c0_i32, %c0_i32_0 : i32, i32
  }
  func.func @transform_32(%arg0: i32) -> (i32, i32, i32) {
    %c0_i32 = arith.constant 0 : i32
    %c0_i32_0 = arith.constant 0 : i32
    %c0_i32_1 = arith.constant 0 : i32
    return %arg0, %c0_i32, %c0_i32_0 : i32, i32, i32
  }
}

</mosaic_0001>

<llo_original>
// kernel: planner_forward.1
$region0: #{planner_forward.1}
  #allocation0 [shape = 'u32[]', space=smem, size = 0x4, offset = 0x4, fixed_abs, tag = 'smem constant byte address 0x4 - core index']
  #allocation1 [shape = 'u32[72,128]{1,0:T(1,128)}', space=vmem, size = 0x9000, scoped, tag = 'internal scratch']
  %s0 = inlined_call_operand.smem [shape: u32[33], index: -1, kind: input, shape index: {}]
  %s1 = sld [smem:[%s0]]
  %s2 = scalar_lea.smem %s0, 1
  %s3 = sld [smem:[%s2]]
  %s4 = scalar_lea.smem %s0, 2
  %s5 = sld [smem:[%s4]]
  %s6 = scalar_lea.smem %s0, 3
  %s7 = sld [smem:[%s6]]
  %s8 = scalar_lea.smem %s0, 4
  %s9 = sld [smem:[%s8]]
  %s10 = scalar_lea.smem %s0, 5
  %s11 = sld [smem:[%s10]]
  %s12 = scalar_lea.smem %s0, 6
  %s13 = sld [smem:[%s12]]
  %s14 = scalar_lea.smem %s0, 7
  %s15 = sld [smem:[%s14]]
  %s16 = scalar_lea.smem %s0, 8
  %s17 = sld [smem:[%s16]]
  %s18 = scalar_lea.smem %s0, 9
  %s19 = sld [smem:[%s18]]
  %s20 = scalar_lea.smem %s0, 10
  %s21 = sld [smem:[%s20]]
  %s22 = scalar_lea.smem %s0, 11
  %s23 = sld [smem:[%s22]]
  %s24 = scalar_lea.smem %s0, 12
  %s25 = sld [smem:[%s24]]
  %s26 = scalar_lea.smem %s0, 13
  %s27 = sld [smem:[%s26]]
  %s28 = scalar_lea.smem %s0, 14
  %s29 = sld [smem:[%s28]]
  %s30 = scalar_lea.smem %s0, 15
  %s31 = sld [smem:[%s30]]
  %s32 = scalar_lea.smem %s0, 16
  %s33 = sld [smem:[%s32]]
  %s34 = scalar_lea.smem %s0, 17
  %s35 = sld [smem:[%s34]]
  %s36 = scalar_lea.smem %s0, 18
  %s37 = sld [smem:[%s36]]
  %s38 = scalar_lea.smem %s0, 19
  %s39 = sld [smem:[%s38]]
  %s40 = scalar_lea.smem %s0, 20
  %s41 = sld [smem:[%s40]]
  %s42 = scalar_lea.smem %s0, 21
  %s43 = sld [smem:[%s42]]
  %s44 = scalar_lea.smem %s0, 22
  %s45 = sld [smem:[%s44]]
  %s46 = scalar_lea.smem %s0, 23
  %s47 = sld [smem:[%s46]]
  %s48 = scalar_lea.smem %s0, 24
  %s49 = sld [smem:[%s48]]
  %s50 = scalar_lea.smem %s0, 25
  %s51 = sld [smem:[%s50]]
  %s52 = scalar_lea.smem %s0, 26
  %s53 = sld [smem:[%s52]]
  %s54 = scalar_lea.smem %s0, 27
  %s55 = sld [smem:[%s54]]
  %s56 = scalar_lea.smem %s0, 28
  %s57 = sld [smem:[%s56]]
  %s58 = scalar_lea.smem %s0, 29
  %s59 = sld [smem:[%s58]]
  %s60 = scalar_lea.smem %s0, 30
  %s61 = sld [smem:[%s60]]
  %s62 = scalar_lea.smem %s0, 31
  %s63 = sld [smem:[%s62]]
  %s64 = scalar_lea.smem %s0, 32
  %s65 = sld [smem:[%s64]]
  %s66 = sld [smem:[#allocation0]]
  $region161: #{planner_forward.1} parent=0
    _
  %s68 = ssub.s32 1, %s66
  %s69 = scalar_select 0, %s68, %s66
  loop: start=0, step=1, limit=4
  $region2: #{planner_forward.1} parent=0 // loop_pre_header
    _
  $region3: #{planner_forward.1} parent=0 // loop_header
    %s71 = sphi 0, %s75
    %p72 = scmp.ge.s32.totalorder %s71, 4
    %s81 = sphi 0, %s83
    %s84 = sphi 0, %s81
    %s85 = sphi 0, %s84
    %s101 = sphi 0, %s85
    %s107 = sphi 0, %s109
    %s110 = sphi 0, %s107
    %s111 = sphi 0, %s110
    %s127 = sphi 0, %s111
    %s133 = sphi 0, %s135
    %s136 = sphi 0, %s133
    %s137 = sphi 0, %s136
    %s153 = sphi 0, %s137
    %s159 = sphi 0, %s161
    %s162 = sphi 0, %s159
    %s163 = sphi 0, %s162
    %s179 = sphi 0, %s163
    %s185 = sphi 0, %s187
    %s188 = sphi 0, %s185
    %s189 = sphi 0, %s188
    %s205 = sphi 0, %s189
    %s211 = sphi 0, %s213
    %s214 = sphi 0, %s211
    %s215 = sphi 0, %s214
    %s231 = sphi 0, %s215
    %s235 = sphi 0, %s235
    %s237 = sphi 0, %s235
    %s238 = sphi 0, %s237
    %s252 = sphi 0, %s238
    %s256 = sphi 0, %s256
    %s258 = sphi 0, %s256
    %s259 = sphi 0, %s258
    %s273 = sphi 0, %s259
    %s277 = sphi 0, %s277
    %s279 = sphi 0, %s277
    %s280 = sphi 0, %s279
    %s294 = sphi 0, %s280
    %s298 = sphi 0, %s298
    %s300 = sphi 0, %s298
    %s301 = sphi 0, %s300
    %s315 = sphi 0, %s301
    %s319 = sphi 0, %s319
    %s321 = sphi 0, %s319
    %s322 = sphi 0, %s321
    %s336 = sphi 0, %s322
    %s340 = sphi 0, %s340
    %s342 = sphi 0, %s340
    %s343 = sphi 0, %s342
    %s357 = sphi 0, %s343
    %s361 = sphi 0, %s361
    %s363 = sphi 0, %s361
    %s364 = sphi 0, %s363
    %s378 = sphi 0, %s364
    %s382 = sphi 0, %s382
    %s384 = sphi 0, %s382
    %s385 = sphi 0, %s384
    %s399 = sphi 0, %s385
    %s403 = sphi 0, %s403
    %s405 = sphi 0, %s403
    %s406 = sphi 0, %s405
    %s420 = sphi 0, %s406
    %s424 = sphi 0, %s424
    %s426 = sphi 0, %s424
    %s427 = sphi 0, %s426
    %s441 = sphi 0, %s427
    %s445 = sphi 0, %s445
    %s447 = sphi 0, %s445
    %s448 = sphi 0, %s447
    %s462 = sphi 0, %s448
    %s466 = sphi 0, %s466
    %s468 = sphi 0, %s466
    %s469 = sphi 0, %s468
    %s483 = sphi 0, %s469
    %s487 = sphi 0, %s487
    %s489 = sphi 0, %s487
    %s490 = sphi 0, %s489
    %s504 = sphi 0, %s490
    %s508 = sphi 0, %s508
    %s510 = sphi 0, %s508
    %s511 = sphi 0, %s510
    %s525 = sphi 0, %s511
    %s529 = sphi 0, %s529
    %s531 = sphi 0, %s529
    %s532 = sphi 0, %s531
    %s546 = sphi 0, %s532
    %s550 = sphi 0, %s550
    %s552 = sphi 0, %s550
    %s553 = sphi 0, %s552
    %s567 = sphi 0, %s553
    %s571 = sphi 0, %s571
    %s573 = sphi 0, %s571
    %s574 = sphi 0, %s573
    %s588 = sphi 0, %s574
    %s592 = sphi 0, %s592
    %s594 = sphi 0, %s592
    %s595 = sphi 0, %s594
    %s609 = sphi 0, %s595
    %s613 = sphi 0, %s613
    %s615 = sphi 0, %s613
    %s616 = sphi 0, %s615
    %s630 = sphi 0, %s616
    %s634 = sphi 0, %s634
    %s636 = sphi 0, %s634
    %s637 = sphi 0, %s636
    %s651 = sphi 0, %s637
    %s655 = sphi 0, %s655
    %s657 = sphi 0, %s655
    %s658 = sphi 0, %s657
    %s672 = sphi 0, %s658
    %s676 = sphi 0, %s676
    %s678 = sphi 0, %s676
    %s679 = sphi 0, %s678
    %s693 = sphi 0, %s679
    %s697 = sphi 0, %s697
    %s699 = sphi 0, %s697
    %s700 = sphi 0, %s699
    %s714 = sphi 0, %s700
    %s718 = sphi 0, %s718
    %s720 = sphi 0, %s718
    %s721 = sphi 0, %s720
    %s735 = sphi 0, %s721
    %s739 = sphi 0, %s739
    %s741 = sphi 0, %s739
    %s742 = sphi 0, %s741
    %s756 = sphi 0, %s742
    %s760 = sphi 0, %s760
    %s762 = sphi 0, %s760
    %s763 = sphi 0, %s762
    %s777 = sphi 0, %s763
    %s783 = sphi 0, %s785
    %s786 = sphi 0, %s783
    %s787 = sphi 0, %s786
    %s803 = sphi 0, %s787
  $region4: #{planner_forward.1} parent=0 // loop_header_branch
    %74 = sbr.rel (%p72) target = $region8
  $region5: #{planner_forward.1} parent=0 // loop_body
    %s76 = ssub.s32 %s71, 1
    %s77 = ssub.s32 %s71, 2
    %s78 = sadd.s32 %s71, 1
    %s79 = ssub.s32 %s71, %s78
    %p80 = scmp.eq.s32.totalorder %s79, 0
    %s82 = sadd.s32 %s81, 1
    %s83 = scalar_select %p80, %s81, %s82
    %p86 = pneg %p80
    %p87 = scmp.eq.s32.totalorder %s71, 1
    %p88 = por %p86, %p87
    %p89 = scmp.ne.s32.totalorder %s81, %s84
    %p90 = scmp.eq.s32.totalorder %s71, 0
    %p91 = por %p89, %p90
    %p92 = scmp.ne.s32.totalorder %s81, %s84
    %p93 = scmp.eq.s32.totalorder %s76, 1
    %p94 = por %p92, %p93
    %p95 = scmp.ne.s32.totalorder %s84, %s85
    %p96 = scmp.eq.s32.totalorder %s76, 0
    %p97 = por %p95, %p96
    %p98 = scmp.ne.s32.totalorder %s84, %s85
    %p99 = scmp.eq.s32.totalorder %s77, 1
    %p100 = por %p98, %p99
    %p102 = scmp.ne.s32.totalorder %s85, %s101
    %p103 = scmp.eq.s32.totalorder %s77, 0
    %p104 = por %p102, %p103
    %s105 = ssub.s32 %s71, %s78
    %p106 = scmp.eq.s32.totalorder %s105, 0
    %s108 = sadd.s32 %s107, 1
    %s109 = scalar_select %p106, %s107, %s108
    %p112 = pneg %p106
    %p113 = scmp.eq.s32.totalorder %s71, 1
    %p114 = por %p112, %p113
    %p115 = scmp.ne.s32.totalorder %s107, %s110
    %p116 = scmp.eq.s32.totalorder %s71, 0
    %p117 = por %p115, %p116
    %p118 = scmp.ne.s32.totalorder %s107, %s110
    %p119 = scmp.eq.s32.totalorder %s76, 1
    %p120 = por %p118, %p119
    %p121 = scmp.ne.s32.totalorder %s110, %s111
    %p122 = scmp.eq.s32.totalorder %s76, 0
    %p123 = por %p121, %p122
    %p124 = scmp.ne.s32.totalorder %s110, %s111
    %p125 = scmp.eq.s32.totalorder %s77, 1
    %p126 = por %p124, %p125
    %p128 = scmp.ne.s32.totalorder %s111, %s127
    %p129 = scmp.eq.s32.totalorder %s77, 0
    %p130 = por %p128, %p129
    %s131 = ssub.s32 %s71, %s78
    %p132 = scmp.eq.s32.totalorder %s131, 0
    %s134 = sadd.s32 %s133, 1
    %s135 = scalar_select %p132, %s133, %s134
    %p138 = pneg %p132
    %p139 = scmp.eq.s32.totalorder %s71, 1
    %p140 = por %p138, %p139
    %p141 = scmp.ne.s32.totalorder %s133, %s136
    %p142 = scmp.eq.s32.totalorder %s71, 0
    %p143 = por %p141, %p142
    %p144 = scmp.ne.s32.totalorder %s133, %s136
    %p145 = scmp.eq.s32.totalorder %s76, 1
    %p146 = por %p144, %p145
    %p147 = scmp.ne.s32.totalorder %s136, %s137
    %p148 = scmp.eq.s32.totalorder %s76, 0
    %p149 = por %p147, %p148
    %p150 = scmp.ne.s32.totalorder %s136, %s137
    %p151 = scmp.eq.s32.totalorder %s77, 1
    %p152 = por %p150, %p151
    %p154 = scmp.ne.s32.totalorder %s137, %s153
    %p155 = scmp.eq.s32.totalorder %s77, 0
    %p156 = por %p154, %p155
    %s157 = ssub.s32 %s71, %s78
    %p158 = scmp.eq.s32.totalorder %s157, 0
    %s160 = sadd.s32 %s159, 1
    %s161 = scalar_select %p158, %s159, %s160
    %p164 = pneg %p158
    %p165 = scmp.eq.s32.totalorder %s71, 1
    %p166 = por %p164, %p165
    %p167 = scmp.ne.s32.totalorder %s159, %s162
    %p168 = scmp.eq.s32.totalorder %s71, 0
    %p169 = por %p167, %p168
    %p170 = scmp.ne.s32.totalorder %s159, %s162
    %p171 = scmp.eq.s32.totalorder %s76, 1
    %p172 = por %p170, %p171
    %p173 = scmp.ne.s32.totalorder %s162, %s163
    %p174 = scmp.eq.s32.totalorder %s76, 0
    %p175 = por %p173, %p174
    %p176 = scmp.ne.s32.totalorder %s162, %s163
    %p177 = scmp.eq.s32.totalorder %s77, 1
    %p178 = por %p176, %p177
    %p180 = scmp.ne.s32.totalorder %s163, %s179
    %p181 = scmp.eq.s32.totalorder %s77, 0
    %p182 = por %p180, %p181
    %s183 = ssub.s32 %s71, %s78
    %p184 = scmp.eq.s32.totalorder %s183, 0
    %s186 = sadd.s32 %s185, 1
    %s187 = scalar_select %p184, %s185, %s186
    %p190 = pneg %p184
    %p191 = scmp.eq.s32.totalorder %s71, 1
    %p192 = por %p190, %p191
    %p193 = scmp.ne.s32.totalorder %s185, %s188
    %p194 = scmp.eq.s32.totalorder %s71, 0
    %p195 = por %p193, %p194
    %p196 = scmp.ne.s32.totalorder %s185, %s188
    %p197 = scmp.eq.s32.totalorder %s76, 1
    %p198 = por %p196, %p197
    %p199 = scmp.ne.s32.totalorder %s188, %s189
    %p200 = scmp.eq.s32.totalorder %s76, 0
    %p201 = por %p199, %p200
    %p202 = scmp.ne.s32.totalorder %s188, %s189
    %p203 = scmp.eq.s32.totalorder %s77, 1
    %p204 = por %p202, %p203
    %p206 = scmp.ne.s32.totalorder %s189, %s205
    %p207 = scmp.eq.s32.totalorder %s77, 0
    %p208 = por %p206, %p207
    %s209 = ssub.s32 %s71, %s78
    %p210 = scmp.eq.s32.totalorder %s209, 0
    %s212 = sadd.s32 %s211, 1
    %s213 = scalar_select %p210, %s211, %s212
    %p216 = pneg %p210
    %p217 = scmp.eq.s32.totalorder %s71, 1
    %p218 = por %p216, %p217
    %p219 = scmp.ne.s32.totalorder %s211, %s214
    %p220 = scmp.eq.s32.totalorder %s71, 0
    %p221 = por %p219, %p220
    %p222 = scmp.ne.s32.totalorder %s211, %s214
    %p223 = scmp.eq.s32.totalorder %s76, 1
    %p224 = por %p222, %p223
    %p225 = scmp.ne.s32.totalorder %s214, %s215
    %p226 = scmp.eq.s32.totalorder %s76, 0
    %p227 = por %p225, %p226
    %p228 = scmp.ne.s32.totalorder %s214, %s215
    %p229 = scmp.eq.s32.totalorder %s77, 1
    %p230 = por %p228, %p229
    %p232 = scmp.ne.s32.totalorder %s215, %s231
    %p233 = scmp.eq.s32.totalorder %s77, 0
    %p234 = por %p232, %p233
    %s236 = sadd.s32 %s235, 1
    %p239 = scmp.eq.s32.totalorder %s71, 1
    %p240 = scmp.ne.s32.totalorder %s235, %s237
    %p241 = scmp.eq.s32.totalorder %s71, 0
    %p242 = por %p240, %p241
    %p243 = scmp.ne.s32.totalorder %s235, %s237
    %p244 = scmp.eq.s32.totalorder %s76, 1
    %p245 = por %p243, %p244
    %p246 = scmp.ne.s32.totalorder %s237, %s238
    %p247 = scmp.eq.s32.totalorder %s76, 0
    %p248 = por %p246, %p247
    %p249 = scmp.ne.s32.totalorder %s237, %s238
    %p250 = scmp.eq.s32.totalorder %s77, 1
    %p251 = por %p249, %p250
    %p253 = scmp.ne.s32.totalorder %s238, %s252
    %p254 = scmp.eq.s32.totalorder %s77, 0
    %p255 = por %p253, %p254
    %s257 = sadd.s32 %s256, 1
    %p260 = scmp.eq.s32.totalorder %s71, 1
    %p261 = scmp.ne.s32.totalorder %s256, %s258
    %p262 = scmp.eq.s32.totalorder %s71, 0
    %p263 = por %p261, %p262
    %p264 = scmp.ne.s32.totalorder %s256, %s258
    %p265 = scmp.eq.s32.totalorder %s76, 1
    %p266 = por %p264, %p265
    %p267 = scmp.ne.s32.totalorder %s258, %s259
    %p268 = scmp.eq.s32.totalorder %s76, 0
    %p269 = por %p267, %p268
    %p270 = scmp.ne.s32.totalorder %s258, %s259
    %p271 = scmp.eq.s32.totalorder %s77, 1
    %p272 = por %p270, %p271
    %p274 = scmp.ne.s32.totalorder %s259, %s273
    %p275 = scmp.eq.s32.totalorder %s77, 0
    %p276 = por %p274, %p275
    %s278 = sadd.s32 %s277, 1
    %p281 = scmp.eq.s32.totalorder %s71, 1
    %p282 = scmp.ne.s32.totalorder %s277, %s279
    %p283 = scmp.eq.s32.totalorder %s71, 0
    %p284 = por %p282, %p283
    %p285 = scmp.ne.s32.totalorder %s277, %s279
    %p286 = scmp.eq.s32.totalorder %s76, 1
    %p287 = por %p285, %p286
    %p288 = scmp.ne.s32.totalorder %s279, %s280
    %p289 = scmp.eq.s32.totalorder %s76, 0
    %p290 = por %p288, %p289
    %p291 = scmp.ne.s32.totalorder %s279, %s280
    %p292 = scmp.eq.s32.totalorder %s77, 1
    %p293 = por %p291, %p292
    %p295 = scmp.ne.s32.totalorder %s280, %s294
    %p296 = scmp.eq.s32.totalorder %s77, 0
    %p297 = por %p295, %p296
    %s299 = sadd.s32 %s298, 1
    %p302 = scmp.eq.s32.totalorder %s71, 1
    %p303 = scmp.ne.s32.totalorder %s298, %s300
    %p304 = scmp.eq.s32.totalorder %s71, 0
    %p305 = por %p303, %p304
    %p306 = scmp.ne.s32.totalorder %s298, %s300
    %p307 = scmp.eq.s32.totalorder %s76, 1
    %p308 = por %p306, %p307
    %p309 = scmp.ne.s32.totalorder %s300, %s301
    %p310 = scmp.eq.s32.totalorder %s76, 0
    %p311 = por %p309, %p310
    %p312 = scmp.ne.s32.totalorder %s300, %s301
    %p313 = scmp.eq.s32.totalorder %s77, 1
    %p314 = por %p312, %p313
    %p316 = scmp.ne.s32.totalorder %s301, %s315
    %p317 = scmp.eq.s32.totalorder %s77, 0
    %p318 = por %p316, %p317
    %s320 = sadd.s32 %s319, 1
    %p323 = scmp.eq.s32.totalorder %s71, 1
    %p324 = scmp.ne.s32.totalorder %s319, %s321
    %p325 = scmp.eq.s32.totalorder %s71, 0
    %p326 = por %p324, %p325
    %p327 = scmp.ne.s32.totalorder %s319, %s321
    %p328 = scmp.eq.s32.totalorder %s76, 1
    %p329 = por %p327, %p328
    %p330 = scmp.ne.s32.totalorder %s321, %s322
    %p331 = scmp.eq.s32.totalorder %s76, 0
    %p332 = por %p330, %p331
    %p333 = scmp.ne.s32.totalorder %s321, %s322
    %p334 = scmp.eq.s32.totalorder %s77, 1
    %p335 = por %p333, %p334
    %p337 = scmp.ne.s32.totalorder %s322, %s336
    %p338 = scmp.eq.s32.totalorder %s77, 0
    %p339 = por %p337, %p338
    %s341 = sadd.s32 %s340, 1
    %p344 = scmp.eq.s32.totalorder %s71, 1
    %p345 = scmp.ne.s32.totalorder %s340, %s342
    %p346 = scmp.eq.s32.totalorder %s71, 0
    %p347 = por %p345, %p346
    %p348 = scmp.ne.s32.totalorder %s340, %s342
    %p349 = scmp.eq.s32.totalorder %s76, 1
    %p350 = por %p348, %p349
    %p351 = scmp.ne.s32.totalorder %s342, %s343
    %p352 = scmp.eq.s32.totalorder %s76, 0
    %p353 = por %p351, %p352
    %p354 = scmp.ne.s32.totalorder %s342, %s343
    %p355 = scmp.eq.s32.totalorder %s77, 1
    %p356 = por %p354, %p355
    %p358 = scmp.ne.s32.totalorder %s343, %s357
    %p359 = scmp.eq.s32.totalorder %s77, 0
    %p360 = por %p358, %p359
    %s362 = sadd.s32 %s361, 1
    %p365 = scmp.eq.s32.totalorder %s71, 1
    %p366 = scmp.ne.s32.totalorder %s361, %s363
    %p367 = scmp.eq.s32.totalorder %s71, 0
    %p368 = por %p366, %p367
    %p369 = scmp.ne.s32.totalorder %s361, %s363
    %p370 = scmp.eq.s32.totalorder %s76, 1
    %p371 = por %p369, %p370
    %p372 = scmp.ne.s32.totalorder %s363, %s364
    %p373 = scmp.eq.s32.totalorder %s76, 0
    %p374 = por %p372, %p373
    %p375 = scmp.ne.s32.totalorder %s363, %s364
    %p376 = scmp.eq.s32.totalorder %s77, 1
    %p377 = por %p375, %p376
    %p379 = scmp.ne.s32.totalorder %s364, %s378
    %p380 = scmp.eq.s32.totalorder %s77, 0
    %p381 = por %p379, %p380
    %s383 = sadd.s32 %s382, 1
    %p386 = scmp.eq.s32.totalorder %s71, 1
    %p387 = scmp.ne.s32.totalorder %s382, %s384
    %p388 = scmp.eq.s32.totalorder %s71, 0
    %p389 = por %p387, %p388
    %p390 = scmp.ne.s32.totalorder %s382, %s384
    %p391 = scmp.eq.s32.totalorder %s76, 1
    %p392 = por %p390, %p391
    %p393 = scmp.ne.s32.totalorder %s384, %s385
    %p394 = scmp.eq.s32.totalorder %s76, 0
    %p395 = por %p393, %p394
    %p396 = scmp.ne.s32.totalorder %s384, %s385
    %p397 = scmp.eq.s32.totalorder %s77, 1
    %p398 = por %p396, %p397
    %p400 = scmp.ne.s32.totalorder %s385, %s399
    %p401 = scmp.eq.s32.totalorder %s77, 0
    %p402 = por %p400, %p401
    %s404 = sadd.s32 %s403, 1
    %p407 = scmp.eq.s32.totalorder %s71, 1
    %p408 = scmp.ne.s32.totalorder %s403, %s405
    %p409 = scmp.eq.s32.totalorder %s71, 0
    %p410 = por %p408, %p409
    %p411 = scmp.ne.s32.totalorder %s403, %s405
    %p412 = scmp.eq.s32.totalorder %s76, 1
    %p413 = por %p411, %p412
    %p414 = scmp.ne.s32.totalorder %s405, %s406
    %p415 = scmp.eq.s32.totalorder %s76, 0
    %p416 = por %p414, %p415
    %p417 = scmp.ne.s32.totalorder %s405, %s406
    %p418 = scmp.eq.s32.totalorder %s77, 1
    %p419 = por %p417, %p418
    %p421 = scmp.ne.s32.totalorder %s406, %s420
    %p422 = scmp.eq.s32.totalorder %s77, 0
    %p423 = por %p421, %p422
    %s425 = sadd.s32 %s424, 1
    %p428 = scmp.eq.s32.totalorder %s71, 1
    %p429 = scmp.ne.s32.totalorder %s424, %s426
    %p430 = scmp.eq.s32.totalorder %s71, 0
    %p431 = por %p429, %p430
    %p432 = scmp.ne.s32.totalorder %s424, %s426
    %p433 = scmp.eq.s32.totalorder %s76, 1
    %p434 = por %p432, %p433
    %p435 = scmp.ne.s32.totalorder %s426, %s427
    %p436 = scmp.eq.s32.totalorder %s76, 0
    %p437 = por %p435, %p436
    %p438 = scmp.ne.s32.totalorder %s426, %s427
    %p439 = scmp.eq.s32.totalorder %s77, 1
    %p440 = por %p438, %p439
    %p442 = scmp.ne.s32.totalorder %s427, %s441
    %p443 = scmp.eq.s32.totalorder %s77, 0
    %p444 = por %p442, %p443
    %s446 = sadd.s32 %s445, 1
    %p449 = scmp.eq.s32.totalorder %s71, 1
    %p450 = scmp.ne.s32.totalorder %s445, %s447
    %p451 = scmp.eq.s32.totalorder %s71, 0
    %p452 = por %p450, %p451
    %p453 = scmp.ne.s32.totalorder %s445, %s447
    %p454 = scmp.eq.s32.totalorder %s76, 1
    %p455 = por %p453, %p454
    %p456 = scmp.ne.s32.totalorder %s447, %s448
    %p457 = scmp.eq.s32.totalorder %s76, 0
    %p458 = por %p456, %p457
    %p459 = scmp.ne.s32.totalorder %s447, %s448
    %p460 = scmp.eq.s32.totalorder %s77, 1
    %p461 = por %p459, %p460
    %p463 = scmp.ne.s32.totalorder %s448, %s462
    %p464 = scmp.eq.s32.totalorder %s77, 0
    %p465 = por %p463, %p464
    %s467 = sadd.s32 %s466, 1
    %p470 = scmp.eq.s32.totalorder %s71, 1
    %p471 = scmp.ne.s32.totalorder %s466, %s468
    %p472 = scmp.eq.s32.totalorder %s71, 0
    %p473 = por %p471, %p472
    %p474 = scmp.ne.s32.totalorder %s466, %s468
    %p475 = scmp.eq.s32.totalorder %s76, 1
    %p476 = por %p474, %p475
    %p477 = scmp.ne.s32.totalorder %s468, %s469
    %p478 = scmp.eq.s32.totalorder %s76, 0
    %p479 = por %p477, %p478
    %p480 = scmp.ne.s32.totalorder %s468, %s469
    %p481 = scmp.eq.s32.totalorder %s77, 1
    %p482 = por %p480, %p481
    %p484 = scmp.ne.s32.totalorder %s469, %s483
    %p485 = scmp.eq.s32.totalorder %s77, 0
    %p486 = por %p484, %p485
    %s488 = sadd.s32 %s487, 1
    %p491 = scmp.eq.s32.totalorder %s71, 1
    %p492 = scmp.ne.s32.totalorder %s487, %s489
    %p493 = scmp.eq.s32.totalorder %s71, 0
    %p494 = por %p492, %p493
    %p495 = scmp.ne.s32.totalorder %s487, %s489
    %p496 = scmp.eq.s32.totalorder %s76, 1
    %p497 = por %p495, %p496
    %p498 = scmp.ne.s32.totalorder %s489, %s490
    %p499 = scmp.eq.s32.totalorder %s76, 0
    %p500 = por %p498, %p499
    %p501 = scmp.ne.s32.totalorder %s489, %s490
    %p502 = scmp.eq.s32.totalorder %s77, 1
    %p503 = por %p501, %p502
    %p505 = scmp.ne.s32.totalorder %s490, %s504
    %p506 = scmp.eq.s32.totalorder %s77, 0
    %p507 = por %p505, %p506
    %s509 = sadd.s32 %s508, 1
    %p512 = scmp.eq.s32.totalorder %s71, 1
    %p513 = scmp.ne.s32.totalorder %s508, %s510
    %p514 = scmp.eq.s32.totalorder %s71, 0
    %p515 = por %p513, %p514
    %p516 = scmp.ne.s32.totalorder %s508, %s510
    %p517 = scmp.eq.s32.totalorder %s76, 1
    %p518 = por %p516, %p517
    %p519 = scmp.ne.s32.totalorder %s510, %s511
    %p520 = scmp.eq.s32.totalorder %s76, 0
    %p521 = por %p519, %p520
    %p522 = scmp.ne.s32.totalorder %s510, %s511
    %p523 = scmp.eq.s32.totalorder %s77, 1
    %p524 = por %p522, %p523
    %p526 = scmp.ne.s32.totalorder %s511, %s525
    %p527 = scmp.eq.s32.totalorder %s77, 0
    %p528 = por %p526, %p527
    %s530 = sadd.s32 %s529, 1
    %p533 = scmp.eq.s32.totalorder %s71, 1
    %p534 = scmp.ne.s32.totalorder %s529, %s531
    %p535 = scmp.eq.s32.totalorder %s71, 0
    %p536 = por %p534, %p535
    %p537 = scmp.ne.s32.totalorder %s529, %s531
    %p538 = scmp.eq.s32.totalorder %s76, 1
    %p539 = por %p537, %p538
    %p540 = scmp.ne.s32.totalorder %s531, %s532
    %p541 = scmp.eq.s32.totalorder %s76, 0
    %p542 = por %p540, %p541
    %p543 = scmp.ne.s32.totalorder %s531, %s532
    %p544 = scmp.eq.s32.totalorder %s77, 1
    %p545 = por %p543, %p544
    %p547 = scmp.ne.s32.totalorder %s532, %s546
    %p548 = scmp.eq.s32.totalorder %s77, 0
    %p549 = por %p547, %p548
    %s551 = sadd.s32 %s550, 1
    %p554 = scmp.eq.s32.totalorder %s71, 1
    %p555 = scmp.ne.s32.totalorder %s550, %s552
    %p556 = scmp.eq.s32.totalorder %s71, 0
    %p557 = por %p555, %p556
    %p558 = scmp.ne.s32.totalorder %s550, %s552
    %p559 = scmp.eq.s32.totalorder %s76, 1
    %p560 = por %p558, %p559
    %p561 = scmp.ne.s32.totalorder %s552, %s553
    %p562 = scmp.eq.s32.totalorder %s76, 0
    %p563 = por %p561, %p562
    %p564 = scmp.ne.s32.totalorder %s552, %s553
    %p565 = scmp.eq.s32.totalorder %s77, 1
    %p566 = por %p564, %p565
    %p568 = scmp.ne.s32.totalorder %s553, %s567
    %p569 = scmp.eq.s32.totalorder %s77, 0
    %p570 = por %p568, %p569
    %s572 = sadd.s32 %s571, 1
    %p575 = scmp.eq.s32.totalorder %s71, 1
    %p576 = scmp.ne.s32.totalorder %s571, %s573
    %p577 = scmp.eq.s32.totalorder %s71, 0
    %p578 = por %p576, %p577
    %p579 = scmp.ne.s32.totalorder %s571, %s573
    %p580 = scmp.eq.s32.totalorder %s76, 1
    %p581 = por %p579, %p580
    %p582 = scmp.ne.s32.totalorder %s573, %s574
    %p583 = scmp.eq.s32.totalorder %s76, 0
    %p584 = por %p582, %p583
    %p585 = scmp.ne.s32.totalorder %s573, %s574
    %p586 = scmp.eq.s32.totalorder %s77, 1
    %p587 = por %p585, %p586
    %p589 = scmp.ne.s32.totalorder %s574, %s588
    %p590 = scmp.eq.s32.totalorder %s77, 0
    %p591 = por %p589, %p590
    %s593 = sadd.s32 %s592, 1
    %p596 = scmp.eq.s32.totalorder %s71, 1
    %p597 = scmp.ne.s32.totalorder %s592, %s594
    %p598 = scmp.eq.s32.totalorder %s71, 0
    %p599 = por %p597, %p598
    %p600 = scmp.ne.s32.totalorder %s592, %s594
    %p601 = scmp.eq.s32.totalorder %s76, 1
    %p602 = por %p600, %p601
    %p603 = scmp.ne.s32.totalorder %s594, %s595
    %p604 = scmp.eq.s32.totalorder %s76, 0
    %p605 = por %p603, %p604
    %p606 = scmp.ne.s32.totalorder %s594, %s595
    %p607 = scmp.eq.s32.totalorder %s77, 1
    %p608 = por %p606, %p607
    %p610 = scmp.ne.s32.totalorder %s595, %s609
    %p611 = scmp.eq.s32.totalorder %s77, 0
    %p612 = por %p610, %p611
    %s614 = sadd.s32 %s613, 1
    %p617 = scmp.eq.s32.totalorder %s71, 1
    %p618 = scmp.ne.s32.totalorder %s613, %s615
    %p619 = scmp.eq.s32.totalorder %s71, 0
    %p620 = por %p618, %p619
    %p621 = scmp.ne.s32.totalorder %s613, %s615
    %p622 = scmp.eq.s32.totalorder %s76, 1
    %p623 = por %p621, %p622
    %p624 = scmp.ne.s32.totalorder %s615, %s616
    %p625 = scmp.eq.s32.totalorder %s76, 0
    %p626 = por %p624, %p625
    %p627 = scmp.ne.s32.totalorder %s615, %s616
    %p628 = scmp.eq.s32.totalorder %s77, 1
    %p629 = por %p627, %p628
    %p631 = scmp.ne.s32.totalorder %s616, %s630
    %p632 = scmp.eq.s32.totalorder %s77, 0
    %p633 = por %p631, %p632
    %s635 = sadd.s32 %s634, 1
    %p638 = scmp.eq.s32.totalorder %s71, 1
    %p639 = scmp.ne.s32.totalorder %s634, %s636
    %p640 = scmp.eq.s32.totalorder %s71, 0
    %p641 = por %p639, %p640
    %p642 = scmp.ne.s32.totalorder %s634, %s636
    %p643 = scmp.eq.s32.totalorder %s76, 1
    %p644 = por %p642, %p643
    %p645 = scmp.ne.s32.totalorder %s636, %s637
    %p646 = scmp.eq.s32.totalorder %s76, 0
    %p647 = por %p645, %p646
    %p648 = scmp.ne.s32.totalorder %s636, %s637
    %p649 = scmp.eq.s32.totalorder %s77, 1
    %p650 = por %p648, %p649
    %p652 = scmp.ne.s32.totalorder %s637, %s651
    %p653 = scmp.eq.s32.totalorder %s77, 0
    %p654 = por %p652, %p653
    %s656 = sadd.s32 %s655, 1
    %p659 = scmp.eq.s32.totalorder %s71, 1
    %p660 = scmp.ne.s32.totalorder %s655, %s657
    %p661 = scmp.eq.s32.totalorder %s71, 0
    %p662 = por %p660, %p661
    %p663 = scmp.ne.s32.totalorder %s655, %s657
    %p664 = scmp.eq.s32.totalorder %s76, 1
    %p665 = por %p663, %p664
    %p666 = scmp.ne.s32.totalorder %s657, %s658
    %p667 = scmp.eq.s32.totalorder %s76, 0
    %p668 = por %p666, %p667
    %p669 = scmp.ne.s32.totalorder %s657, %s658
    %p670 = scmp.eq.s32.totalorder %s77, 1
    %p671 = por %p669, %p670
    %p673 = scmp.ne.s32.totalorder %s658, %s672
    %p674 = scmp.eq.s32.totalorder %s77, 0
    %p675 = por %p673, %p674
    %s677 = sadd.s32 %s676, 1
    %p680 = scmp.eq.s32.totalorder %s71, 1
    %p681 = scmp.ne.s32.totalorder %s676, %s678
    %p682 = scmp.eq.s32.totalorder %s71, 0
    %p683 = por %p681, %p682
    %p684 = scmp.ne.s32.totalorder %s676, %s678
    %p685 = scmp.eq.s32.totalorder %s76, 1
    %p686 = por %p684, %p685
    %p687 = scmp.ne.s32.totalorder %s678, %s679
    %p688 = scmp.eq.s32.totalorder %s76, 0
    %p689 = por %p687, %p688
    %p690 = scmp.ne.s32.totalorder %s678, %s679
    %p691 = scmp.eq.s32.totalorder %s77, 1
    %p692 = por %p690, %p691
    %p694 = scmp.ne.s32.totalorder %s679, %s693
    %p695 = scmp.eq.s32.totalorder %s77, 0
    %p696 = por %p694, %p695
    %s698 = sadd.s32 %s697, 1
    %p701 = scmp.eq.s32.totalorder %s71, 1
    %p702 = scmp.ne.s32.totalorder %s697, %s699
    %p703 = scmp.eq.s32.totalorder %s71, 0
    %p704 = por %p702, %p703
    %p705 = scmp.ne.s32.totalorder %s697, %s699
    %p706 = scmp.eq.s32.totalorder %s76, 1
    %p707 = por %p705, %p706
    %p708 = scmp.ne.s32.totalorder %s699, %s700
    %p709 = scmp.eq.s32.totalorder %s76, 0
    %p710 = por %p708, %p709
    %p711 = scmp.ne.s32.totalorder %s699, %s700
    %p712 = scmp.eq.s32.totalorder %s77, 1
    %p713 = por %p711, %p712
    %p715 = scmp.ne.s32.totalorder %s700, %s714
    %p716 = scmp.eq.s32.totalorder %s77, 0
    %p717 = por %p715, %p716
    %s719 = sadd.s32 %s718, 1
    %p722 = scmp.eq.s32.totalorder %s71, 1
    %p723 = scmp.ne.s32.totalorder %s718, %s720
    %p724 = scmp.eq.s32.totalorder %s71, 0
    %p725 = por %p723, %p724
    %p726 = scmp.ne.s32.totalorder %s718, %s720
    %p727 = scmp.eq.s32.totalorder %s76, 1
    %p728 = por %p726, %p727
    %p729 = scmp.ne.s32.totalorder %s720, %s721
    %p730 = scmp.eq.s32.totalorder %s76, 0
    %p731 = por %p729, %p730
    %p732 = scmp.ne.s32.totalorder %s720, %s721
    %p733 = scmp.eq.s32.totalorder %s77, 1
    %p734 = por %p732, %p733
    %p736 = scmp.ne.s32.totalorder %s721, %s735
    %p737 = scmp.eq.s32.totalorder %s77, 0
    %p738 = por %p736, %p737
    %s740 = sadd.s32 %s739, 1
    %p743 = scmp.eq.s32.totalorder %s71, 1
    %p744 = scmp.ne.s32.totalorder %s739, %s741
    %p745 = scmp.eq.s32.totalorder %s71, 0
    %p746 = por %p744, %p745
    %p747 = scmp.ne.s32.totalorder %s739, %s741
    %p748 = scmp.eq.s32.totalorder %s76, 1
    %p749 = por %p747, %p748
    %p750 = scmp.ne.s32.totalorder %s741, %s742
    %p751 = scmp.eq.s32.totalorder %s76, 0
    %p752 = por %p750, %p751
    %p753 = scmp.ne.s32.totalorder %s741, %s742
    %p754 = scmp.eq.s32.totalorder %s77, 1
    %p755 = por %p753, %p754
    %p757 = scmp.ne.s32.totalorder %s742, %s756
    %p758 = scmp.eq.s32.totalorder %s77, 0
    %p759 = por %p757, %p758
    %s761 = sadd.s32 %s760, 1
    %p764 = scmp.eq.s32.totalorder %s71, 1
    %p765 = scmp.ne.s32.totalorder %s760, %s762
    %p766 = scmp.eq.s32.totalorder %s71, 0
    %p767 = por %p765, %p766
    %p768 = scmp.ne.s32.totalorder %s760, %s762
    %p769 = scmp.eq.s32.totalorder %s76, 1
    %p770 = por %p768, %p769
    %p771 = scmp.ne.s32.totalorder %s762, %s763
    %p772 = scmp.eq.s32.totalorder %s76, 0
    %p773 = por %p771, %p772
    %p774 = scmp.ne.s32.totalorder %s762, %s763
    %p775 = scmp.eq.s32.totalorder %s77, 1
    %p776 = por %p774, %p775
    %p778 = scmp.ne.s32.totalorder %s763, %s777
    %p779 = scmp.eq.s32.totalorder %s77, 0
    %p780 = por %p778, %p779
    %s781 = ssub.s32 %s71, %s78
    %p782 = scmp.eq.s32.totalorder %s781, 0
    %s784 = sadd.s32 %s783, 1
    %s785 = scalar_select %p782, %s783, %s784
    %p788 = pneg %p782
    %p789 = scmp.eq.s32.totalorder %s71, 1
    %p790 = por %p788, %p789
    %p791 = scmp.ne.s32.totalorder %s783, %s786
    %p792 = scmp.eq.s32.totalorder %s71, 0
    %p793 = por %p791, %p792
    %p794 = scmp.ne.s32.totalorder %s783, %s786
    %p795 = scmp.eq.s32.totalorder %s76, 1
    %p796 = por %p794, %p795
    %p797 = scmp.ne.s32.totalorder %s786, %s787
    %p798 = scmp.eq.s32.totalorder %s76, 0
    %p799 = por %p797, %p798
    %p800 = scmp.ne.s32.totalorder %s786, %s787
    %p801 = scmp.eq.s32.totalorder %s77, 1
    %p802 = por %p800, %p801
    %p804 = scmp.ne.s32.totalorder %s787, %s803
    %p805 = scmp.eq.s32.totalorder %s77, 0
    %p806 = por %p804, %p805
    %p807 = scmp.le.s32.totalorder 1, %s71
    %p808 = scmp.lt.s32.totalorder %s71, 3
    %p809 = pnand %p807, %p808
    %p810 = pneg %p809
    // Predicated region
    $region9: #{planner_forward.1} parent=5 // pred_check
      _
    $region10: #{planner_forward.1} parent=5 // pred_check_branch
      %812 = sbr.rel (%p809) target = $region12
    $region11: #{planner_forward.1} parent=5 // pred_region
      %s813 = ssub.s32 %s71, 1
      // Predicated region
      $region13: #{planner_forward.1} parent=11 // pred_check
        %p814 = pneg %p248
      $region14: #{planner_forward.1} parent=11 // pred_check_branch
        %816 = sbr.rel (%p814) target = $region16
      $region15: #{planner_forward.1} parent=11 // pred_region
        _
      $region16: #{planner_forward.1} parent=11 // pred_fallthru
        _
      // Predicated region
      $region17: #{planner_forward.1} parent=11 // pred_check
        %p817 = pneg %p269
      $region18: #{planner_forward.1} parent=11 // pred_check_branch
        %819 = sbr.rel (%p817) target = $region20
      $region19: #{planner_forward.1} parent=11 // pred_region
        _
      $region20: #{planner_forward.1} parent=11 // pred_fallthru
        _
      // Predicated region
      $region21: #{planner_forward.1} parent=11 // pred_check
        %p820 = pneg %p290
      $region22: #{planner_forward.1} parent=11 // pred_check_branch
        %822 = sbr.rel (%p820) target = $region24
      $region23: #{planner_forward.1} parent=11 // pred_region
        _
      $region24: #{planner_forward.1} parent=11 // pred_fallthru
        _
      // Predicated region
      $region25: #{planner_forward.1} parent=11 // pred_check
        %p823 = pneg %p311
      $region26: #{planner_forward.1} parent=11 // pred_check_branch
        %825 = sbr.rel (%p823) target = $region28
      $region27: #{planner_forward.1} parent=11 // pred_region
        _
      $region28: #{planner_forward.1} parent=11 // pred_fallthru
        _
      // Predicated region
      $region29: #{planner_forward.1} parent=11 // pred_check
        %p826 = pneg %p332
      $region30: #{planner_forward.1} parent=11 // pred_check_branch
        %828 = sbr.rel (%p826) target = $region32
      $region31: #{planner_forward.1} parent=11 // pred_region
        _
      $region32: #{planner_forward.1} parent=11 // pred_fallthru
        _
      // Predicated region
      $region33: #{planner_forward.1} parent=11 // pred_check
        %p829 = pneg %p353
      $region34: #{planner_forward.1} parent=11 // pred_check_branch
        %831 = sbr.rel (%p829) target = $region36
      $region35: #{planner_forward.1} parent=11 // pred_region
        _
      $region36: #{planner_forward.1} parent=11 // pred_fallthru
        _
      // Predicated region
      $region37: #{planner_forward.1} parent=11 // pred_check
        %p832 = pneg %p374
      $region38: #{planner_forward.1} parent=11 // pred_check_branch
        %834 = sbr.rel (%p832) target = $region40
      $region39: #{planner_forward.1} parent=11 // pred_region
        _
      $region40: #{planner_forward.1} parent=11 // pred_fallthru
        _
      // Predicated region
      $region41: #{planner_forward.1} parent=11 // pred_check
        %p835 = pneg %p395
      $region42: #{planner_forward.1} parent=11 // pred_check_branch
        %837 = sbr.rel (%p835) target = $region44
      $region43: #{planner_forward.1} parent=11 // pred_region
        _
      $region44: #{planner_forward.1} parent=11 // pred_fallthru
        _
      // Predicated region
      $region45: #{planner_forward.1} parent=11 // pred_check
        %p838 = pneg %p416
      $region46: #{planner_forward.1} parent=11 // pred_check_branch
        %840 = sbr.rel (%p838) target = $region48
      $region47: #{planner_forward.1} parent=11 // pred_region
        _
      $region48: #{planner_forward.1} parent=11 // pred_fallthru
        _
      // Predicated region
      $region49: #{planner_forward.1} parent=11 // pred_check
        %p841 = pneg %p437
      $region50: #{planner_forward.1} parent=11 // pred_check_branch
        %843 = sbr.rel (%p841) target = $region52
      $region51: #{planner_forward.1} parent=11 // pred_region
        _
      $region52: #{planner_forward.1} parent=11 // pred_fallthru
        _
      // Predicated region
      $region53: #{planner_forward.1} parent=11 // pred_check
        %p844 = pneg %p458
      $region54: #{planner_forward.1} parent=11 // pred_check_branch
        %846 = sbr.rel (%p844) target = $region56
      $region55: #{planner_forward.1} parent=11 // pred_region
        _
      $region56: #{planner_forward.1} parent=11 // pred_fallthru
        _
      // Predicated region
      $region57: #{planner_forward.1} parent=11 // pred_check
        %p847 = pneg %p479
      $region58: #{planner_forward.1} parent=11 // pred_check_branch
        %849 = sbr.rel (%p847) target = $region60
      $region59: #{planner_forward.1} parent=11 // pred_region
        _
      $region60: #{planner_forward.1} parent=11 // pred_fallthru
        _
      // Predicated region
      $region61: #{planner_forward.1} parent=11 // pred_check
        %p850 = pneg %p500
      $region62: #{planner_forward.1} parent=11 // pred_check_branch
        %852 = sbr.rel (%p850) target = $region64
      $region63: #{planner_forward.1} parent=11 // pred_region
        _
      $region64: #{planner_forward.1} parent=11 // pred_fallthru
        _
      // Predicated region
      $region65: #{planner_forward.1} parent=11 // pred_check
        %p853 = pneg %p521
      $region66: #{planner_forward.1} parent=11 // pred_check_branch
        %855 = sbr.rel (%p853) target = $region68
      $region67: #{planner_forward.1} parent=11 // pred_region
        _
      $region68: #{planner_forward.1} parent=11 // pred_fallthru
        _
      // Predicated region
      $region69: #{planner_forward.1} parent=11 // pred_check
        %p856 = pneg %p542
      $region70: #{planner_forward.1} parent=11 // pred_check_branch
        %858 = sbr.rel (%p856) target = $region72
      $region71: #{planner_forward.1} parent=11 // pred_region
        _
      $region72: #{planner_forward.1} parent=11 // pred_fallthru
        _
      // Predicated region
      $region73: #{planner_forward.1} parent=11 // pred_check
        %p859 = pneg %p563
      $region74: #{planner_forward.1} parent=11 // pred_check_branch
        %861 = sbr.rel (%p859) target = $region76
      $region75: #{planner_forward.1} parent=11 // pred_region
        _
      $region76: #{planner_forward.1} parent=11 // pred_fallthru
        _
      // Predicated region
      $region77: #{planner_forward.1} parent=11 // pred_check
        %p862 = pneg %p584
      $region78: #{planner_forward.1} parent=11 // pred_check_branch
        %864 = sbr.rel (%p862) target = $region80
      $region79: #{planner_forward.1} parent=11 // pred_region
        _
      $region80: #{planner_forward.1} parent=11 // pred_fallthru
        _
      // Predicated region
      $region81: #{planner_forward.1} parent=11 // pred_check
        %p865 = pneg %p605
      $region82: #{planner_forward.1} parent=11 // pred_check_branch
        %867 = sbr.rel (%p865) target = $region84
      $region83: #{planner_forward.1} parent=11 // pred_region
        _
      $region84: #{planner_forward.1} parent=11 // pred_fallthru
        _
      // Predicated region
      $region85: #{planner_forward.1} parent=11 // pred_check
        %p868 = pneg %p626
      $region86: #{planner_forward.1} parent=11 // pred_check_branch
        %870 = sbr.rel (%p868) target = $region88
      $region87: #{planner_forward.1} parent=11 // pred_region
        _
      $region88: #{planner_forward.1} parent=11 // pred_fallthru
        _
      // Predicated region
      $region89: #{planner_forward.1} parent=11 // pred_check
        %p871 = pneg %p647
      $region90: #{planner_forward.1} parent=11 // pred_check_branch
        %873 = sbr.rel (%p871) target = $region92
      $region91: #{planner_forward.1} parent=11 // pred_region
        _
      $region92: #{planner_forward.1} parent=11 // pred_fallthru
        _
      // Predicated region
      $region93: #{planner_forward.1} parent=11 // pred_check
        %p874 = pneg %p668
      $region94: #{planner_forward.1} parent=11 // pred_check_branch
        %876 = sbr.rel (%p874) target = $region96
      $region95: #{planner_forward.1} parent=11 // pred_region
        _
      $region96: #{planner_forward.1} parent=11 // pred_fallthru
        _
      // Predicated region
      $region97: #{planner_forward.1} parent=11 // pred_check
        %p877 = pneg %p689
      $region98: #{planner_forward.1} parent=11 // pred_check_branch
        %879 = sbr.rel (%p877) target = $region100
      $region99: #{planner_forward.1} parent=11 // pred_region
        _
      $region100: #{planner_forward.1} parent=11 // pred_fallthru
        _
      // Predicated region
      $region101: #{planner_forward.1} parent=11 // pred_check
        %p880 = pneg %p710
      $region102: #{planner_forward.1} parent=11 // pred_check_branch
        %882 = sbr.rel (%p880) target = $region104
      $region103: #{planner_forward.1} parent=11 // pred_region
        _
      $region104: #{planner_forward.1} parent=11 // pred_fallthru
        _
      // Predicated region
      $region105: #{planner_forward.1} parent=11 // pred_check
        %p883 = pneg %p731
      $region106: #{planner_forward.1} parent=11 // pred_check_branch
        %885 = sbr.rel (%p883) target = $region108
      $region107: #{planner_forward.1} parent=11 // pred_region
        _
      $region108: #{planner_forward.1} parent=11 // pred_fallthru
        _
      // Predicated region
      $region109: #{planner_forward.1} parent=11 // pred_check
        %p886 = pneg %p752
      $region110: #{planner_forward.1} parent=11 // pred_check_branch
        %888 = sbr.rel (%p886) target = $region112
      $region111: #{planner_forward.1} parent=11 // pred_region
        _
      $region112: #{planner_forward.1} parent=11 // pred_fallthru
        _
      // Predicated region
      $region113: #{planner_forward.1} parent=11 // pred_check
        %p889 = pneg %p773
      $region114: #{planner_forward.1} parent=11 // pred_check_branch
        %891 = sbr.rel (%p889) target = $region116
      $region115: #{planner_forward.1} parent=11 // pred_region
        _
      $region116: #{planner_forward.1} parent=11 // pred_fallthru
        _
    $region12: #{planner_forward.1} parent=5 // pred_fallthru
      _
    %p892 = scmp.lt.s32.totalorder %s71, 2
    // Predicated region
    $region117: #{planner_forward.1} parent=5 // pred_check
      %p893 = pneg %p892
    $region118: #{planner_forward.1} parent=5 // pred_check_branch
      %895 = sbr.rel (%p893) target = $region120
    $region119: #{planner_forward.1} parent=5 // pred_region
      // Predicated region
      $region121: #{planner_forward.1} parent=119 // pred_check
        %p896 = pneg %p91
      $region122: #{planner_forward.1} parent=119 // pred_check_branch
        %898 = sbr.rel (%p896) target = $region124
      $region123: #{planner_forward.1} parent=119 // pred_region
        %p899 = scmp.lt.s32.totalorder %s71, 1
        %s900 = scalar_select %p899, %s71, 1
        %s901 = smul.addr %s900, 8
        %s902 = scalar_lea.vmem %s1, %s901
      $region124: #{planner_forward.1} parent=119 // pred_fallthru
        _
      // Predicated region
      $region125: #{planner_forward.1} parent=119 // pred_check
        %p903 = pneg %p117
      $region126: #{planner_forward.1} parent=119 // pred_check_branch
        %905 = sbr.rel (%p903) target = $region128
      $region127: #{planner_forward.1} parent=119 // pred_region
        %p906 = scmp.lt.s32.totalorder %s71, 1
        %s907 = scalar_select %p906, %s71, 1
        %s908 = scalar_lea.vmem %s3, %s907
      $region128: #{planner_forward.1} parent=119 // pred_fallthru
        _
      // Predicated region
      $region129: #{planner_forward.1} parent=119 // pred_check
        %p909 = pneg %p143
      $region130: #{planner_forward.1} parent=119 // pred_check_branch
        %911 = sbr.rel (%p909) target = $region132
      $region131: #{planner_forward.1} parent=119 // pred_region
        %p912 = scmp.lt.s32.totalorder %s71, 1
        %s913 = scalar_select %p912, %s71, 1
        %s914 = smul.addr %s913, 8
        %s915 = scalar_lea.vmem %s5, %s914
      $region132: #{planner_forward.1} parent=119 // pred_fallthru
        _
      // Predicated region
      $region133: #{planner_forward.1} parent=119 // pred_check
        %p916 = pneg %p169
      $region134: #{planner_forward.1} parent=119 // pred_check_branch
        %918 = sbr.rel (%p916) target = $region136
      $region135: #{planner_forward.1} parent=119 // pred_region
        %p919 = scmp.lt.s32.totalorder %s71, 1
        %s920 = scalar_select %p919, %s71, 1
        %s921 = scalar_lea.vmem %s7, %s920
      $region136: #{planner_forward.1} parent=119 // pred_fallthru
        _
      // Predicated region
      $region137: #{planner_forward.1} parent=119 // pred_check
        %p922 = pneg %p195
      $region138: #{planner_forward.1} parent=119 // pred_check_branch
        %924 = sbr.rel (%p922) target = $region140
      $region139: #{planner_forward.1} parent=119 // pred_region
        %p925 = scmp.lt.s32.totalorder %s71, 1
        %s926 = scalar_select %p925, %s71, 1
        %s927 = smul.addr %s926, 8
        %s928 = scalar_lea.vmem %s9, %s927
      $region140: #{planner_forward.1} parent=119 // pred_fallthru
        _
      // Predicated region
      $region141: #{planner_forward.1} parent=119 // pred_check
        %p929 = pneg %p221
      $region142: #{planner_forward.1} parent=119 // pred_check_branch
        %931 = sbr.rel (%p929) target = $region144
      $region143: #{planner_forward.1} parent=119 // pred_region
        %p932 = scmp.lt.s32.totalorder %s71, 1
        %s933 = scalar_select %p932, %s71, 1
        %s934 = smul.addr %s933, 8
        %s935 = scalar_lea.vmem %s11, %s934
      $region144: #{planner_forward.1} parent=119 // pred_fallthru
        _
    $region120: #{planner_forward.1} parent=5 // pred_fallthru
      _
    %p936 = scmp.le.s32.totalorder 1, %s71
    %p937 = scmp.lt.s32.totalorder %s71, 3
    %p938 = pnand %p936, %p937
    %p939 = pneg %p938
    // Predicated region
    $region145: #{planner_forward.1} parent=5 // pred_check
      _
    $region146: #{planner_forward.1} parent=5 // pred_check_branch
      %941 = sbr.rel (%p938) target = $region148
    $region147: #{planner_forward.1} parent=5 // pred_region
      %s942 = ssub.s32 %s71, 1
      %p943 = scmp.lt.s32.totalorder %s76, 1
      %s944 = scalar_select %p943, %s76, 1
      %s945 = smul.addr %s944, 8
      %s946 = scalar_lea.vmem %s1, %s945
      %p947 = pneg %p97
      %p948 = pneg %p94
      %p949 = scmp.lt.s32.totalorder %s76, 1
      %s950 = scalar_select %p949, %s76, 1
      %s951 = scalar_lea.vmem %s3, %s950
      %p952 = pneg %p123
      %p953 = pneg %p120
      %p954 = scmp.lt.s32.totalorder %s76, 1
      %s955 = scalar_select %p954, %s76, 1
      %s956 = smul.addr %s955, 8
      %s957 = scalar_lea.vmem %s5, %s956
      %p958 = pneg %p149
      %p959 = pneg %p146
      %p960 = scmp.lt.s32.totalorder %s76, 1
      %s961 = scalar_select %p960, %s76, 1
      %s962 = scalar_lea.vmem %s7, %s961
      %p963 = pneg %p175
      %p964 = pneg %p172
      %p965 = scmp.lt.s32.totalorder %s76, 1
      %s966 = scalar_select %p965, %s76, 1
      %s967 = smul.addr %s966, 8
      %s968 = scalar_lea.vmem %s9, %s967
      %p969 = pneg %p201
      %p970 = pneg %p198
      %p971 = scmp.lt.s32.totalorder %s76, 1
      %s972 = scalar_select %p971, %s76, 1
      %s973 = smul.addr %s972, 8
      %s974 = scalar_lea.vmem %s11, %s973
      %p975 = pneg %p227
      %p976 = pneg %p224
      %p977 = pneg %p248
      %p978 = pneg %p245
      %p979 = pneg %p269
      %p980 = pneg %p266
      %p981 = pneg %p290
      %p982 = pneg %p287
      %p983 = pneg %p311
      %p984 = pneg %p308
      %p985 = pneg %p332
      %p986 = pneg %p329
      %p987 = pneg %p353
      %p988 = pneg %p350
      %p989 = pneg %p374
      %p990 = pneg %p371
      %p991 = pneg %p395
      %p992 = pneg %p392
      %p993 = pneg %p416
      %p994 = pneg %p413
      %p995 = pneg %p437
      %p996 = pneg %p434
      %p997 = pneg %p458
      %p998 = pneg %p455
      %p999 = pneg %p479
      %p1000 = pneg %p476
      %p1001 = pneg %p500
      %p1002 = pneg %p497
      %p1003 = pneg %p521
      %p1004 = pneg %p518
      %p1005 = pneg %p542
      %p1006 = pneg %p539
      %p1007 = pneg %p563
      %p1008 = pneg %p560
      %p1009 = pneg %p584
      %p1010 = pneg %p581
      %p1011 = pneg %p605
      %p1012 = pneg %p602
      %p1013 = pneg %p626
      %p1014 = pneg %p623
      %p1015 = pneg %p647
      %p1016 = pneg %p644
      %p1017 = pneg %p668
      %p1018 = pneg %p665
      %p1019 = pneg %p689
      %p1020 = pneg %p686
      %p1021 = pneg %p710
      %p1022 = pneg %p707
      %p1023 = pneg %p731
      %p1024 = pneg %p728
      %p1025 = pneg %p752
      %p1026 = pneg %p749
      %p1027 = pneg %p773
      %p1028 = pneg %p770
      %p1029 = pneg %p799
      %p1030 = pneg %p796
      %p1031 = scmp.lt.s32.totalorder %s76, 1
      %s1032 = scalar_select %p1031, %s76, 1
      %s1033 = scalar_lea.vmem %s65, %s1032
      %p1034 = scmp.lt.s32.totalorder %s76, 1
      %s1035 = scalar_select %p1034, %s76, 1
      %s1036 = smul.addr %s1035, 8
      %s1037 = scalar_lea.vmem %s1, %s1036
      %p1038 = scmp.lt.s32.totalorder %s76, 1
      %s1039 = scalar_select %p1038, %s76, 1
      %s1040 = scalar_lea.vmem %s3, %s1039
      %p1041 = scmp.lt.s32.totalorder %s76, 1
      %s1042 = scalar_select %p1041, %s76, 1
      %s1043 = smul.addr %s1042, 8
      %s1044 = scalar_lea.vmem %s5, %s1043
      %p1045 = scmp.lt.s32.totalorder %s76, 1
      %s1046 = scalar_select %p1045, %s76, 1
      %s1047 = scalar_lea.vmem %s7, %s1046
      %p1048 = scmp.lt.s32.totalorder %s76, 1
      %s1049 = scalar_select %p1048, %s76, 1
      %s1050 = smul.addr %s1049, 8
      %s1051 = scalar_lea.vmem %s9, %s1050
      %p1052 = scmp.lt.s32.totalorder %s76, 1
      %s1053 = scalar_select %p1052, %s76, 1
      %s1054 = smul.addr %s1053, 8
      %s1055 = scalar_lea.vmem %s11, %s1054
      %p1056 = scmp.lt.s32.totalorder %s76, 1
      %s1057 = scalar_select %p1056, %s76, 1
      %s1058 = scalar_lea.vmem %s65, %s1057
      %v1059 = vlaneseq
      %v1060 = vshrl.u32 %v1059, 7
      %v1061 = vlaneseq
      %v1062 = vand.u32 %v1061, 127
      %v1063 = vld [vmem:[%s1040] sm:$0x1]
      %vm1064 = vcmp.gt.f32.partialorder %v1063, 0.5
      %vm1065 = vcmp.ge.s32.totalorder %v1060, %v1062
      %v1066 = vsel %vm1064, 1, 0
      %v1067 = vperm.slane %v1066, 0
      %vm1068 = vcmp.eq.s32.totalorder %v1067, 1
      %vm1069 = vmand %vm1065, %vm1068
      %v1070 = vsel %vm1069, 0.0, -1e+09
      %vm1071 = vcmp.ge.s32.totalorder %v1062, 0
      %vm1072 = vcmp.lt.s32.totalorder %v1062, 8
      %vm1073 = vmand %vm1071, %vm1072
      %v1074 = vsel %vm1073, 1, 0
      %v1075 = vcvt.s32.f32 %v1074
      %vm1076 = vcmp.ge.s32.totalorder %v1062, 8
      %vm1077 = vcmp.lt.s32.totalorder %v1062, 16
      %vm1078 = vmand %vm1076, %vm1077
      %v1079 = vsel %vm1078, 1, 0
      %v1080 = vcvt.s32.f32 %v1079
      %vm1081 = vcmp.ge.s32.totalorder %v1062, 16
      %vm1082 = vcmp.lt.s32.totalorder %v1062, 24
      %vm1083 = vmand %vm1081, %vm1082
      %v1084 = vsel %vm1083, 1, 0
      %v1085 = vcvt.s32.f32 %v1084
      %vm1086 = vcmp.ge.s32.totalorder %v1062, 24
      %vm1087 = vcmp.lt.s32.totalorder %v1062, 32
      %vm1088 = vmand %vm1086, %vm1087
      %v1089 = vsel %vm1088, 1, 0
      %v1090 = vcvt.s32.f32 %v1089
      %v1091 = vld [vmem:[%s1037] sm:$0xff]
      %v1092 = vld [vmem:[%s13] sm:$0x1]
      %v1093 = vld [vmem:[%s15] sm:$0x1]
      %v1094 = vmul.f32 %v1091, %v1091
      %vm1095 = vcmask 261120
      %v1096 = vsel %vm1095, %v1091, 0.0
      %1097 = vadd.xlane.f32.xlu0 %v1096
      %v1098 = vpop.xlane.xlu0 %1097
      %v1099 = vsel %vm1095, %v1094, 0.0
      %1100 = vadd.xlane.f32.xlu0 %v1099
      %v1101 = vpop.xlane.xlu0 %1100
      %v1102 = vmul.f32 %v1098, 0.03125
      %v1103 = vmul.f32 %v1101, 0.03125
      %v1104 = vmul.f32 %v1102, %v1102
      %v1105 = vsub.f32 %v1103, %v1104
      %v1106 = vsub.f32 %v1091, %v1102
      %v1107 = vadd.f32 %v1105, 1e-05
      %v1108 = vrsqrt.pop %v1107
      %v1109 = vmul.f32 %v1108, %v1107
      %v1110 = vmul.f32 %v1109, %v1108
      %v1111 = vmul.f32 0.5, %v1110
      %v1112 = vsub.f32 1.5, %v1111
      %v1113 = vmul.f32 %v1108, %v1112
      %vm1114 = vweird.f32 %v1107
      %vm1115 = vweird.f32 %v1108
      %vm1116 = vmor %vm1114, %vm1115
      %v1117 = vsel %vm1116, %v1108, %v1113
      %v1118 = vmul.f32 %v1106, %v1117
      %v1120 = vperm.slane %v1092, 0
      %v1122 = vmul.f32 %v1118, %v1120
      %v1124 = vperm.slane %v1093, 0
      %v1126 = vadd.f32 %v1122, %v1124
      %v1127 = vld [vmem:[%s17] sm:$0xff]
      %v1128 = vld [vmem:[%s17 + $0x8] sm:$0xff]
      %v1129 = vld [vmem:[%s17 + $0x10] sm:$0xff]
      %v1130 = vld [vmem:[%s17 + $0x18] sm:$0xff]
      %v1131 = vld [vmem:[%s19] sm:$0x1]
      %v1133 = vperm.slane %v1131, 0
      %v1136 = vsel %vm1095, %v1126, 0
      %1138 = vmatpush.msra.mxu0 0.0
      %1139 = vmatpush.msra.mxu0 0.0
      %1140 = vmatpush.msra.mxu0 0.0
      %1141 = vmatpush.msra.mxu0 0.0
      %1142 = vmatpush.msra.mxu0 0.0
      %1143 = vmatpush.msra.mxu0 0.0
      %1144 = vmatpush.msra.mxu0 0.0
      %1145 = vmatpush.msra.mxu0 0.0
      %1146 = vmatpush.msra.mxu0 0.0
      %1147 = vmatpush.msra.mxu0 0.0
      %1148 = vmatpush.msra.mxu0 0.0
      %1149 = vmatpush.msra.mxu0 0.0
      %1150 = vmatpush.msra.mxu0 %v1130
      %1151 = vmatpush.msra.mxu0 %v1129
      %1152 = vmatpush.msra.mxu0 %v1128
      %1153 = vmatpush.msra.mxu0 %v1127
      %1154 = vmatmul.f32.gmra.mxu0 %v1136
      %v1155 = vpop.f32.mrf.mxu0
      %v1156 = vadd.f32 %v1133, %v1155
      %1157 = vdwg.mxu0
      %v1158 = vld [vmem:[%s21] sm:$0xff]
      %v1159 = vld [vmem:[%s21 + $0x8] sm:$0xff]
      %v1160 = vld [vmem:[%s21 + $0x10] sm:$0xff]
      %v1161 = vld [vmem:[%s21 + $0x18] sm:$0xff]
      %v1162 = vld [vmem:[%s23] sm:$0x1]
      %v1164 = vperm.slane %v1162, 0
      %1166 = vmatpush.msra.mxu0 0.0
      %1167 = vmatpush.msra.mxu0 0.0
      %1168 = vmatpush.msra.mxu0 0.0
      %1169 = vmatpush.msra.mxu0 0.0
      %1170 = vmatpush.msra.mxu0 0.0
      %1171 = vmatpush.msra.mxu0 0.0
      %1172 = vmatpush.msra.mxu0 0.0
      %1173 = vmatpush.msra.mxu0 0.0
      %1174 = vmatpush.msra.mxu0 0.0
      %1175 = vmatpush.msra.mxu0 0.0
      %1176 = vmatpush.msra.mxu0 0.0
      %1177 = vmatpush.msra.mxu0 0.0
      %1178 = vmatpush.msra.mxu0 %v1161
      %1179 = vmatpush.msra.mxu0 %v1160
      %1180 = vmatpush.msra.mxu0 %v1159
      %1181 = vmatpush.msra.mxu0 %v1158
      %1182 = vmatmul.f32.gmra.mxu0 %v1136
      %v1183 = vpop.f32.mrf.mxu0
      %v1184 = vadd.f32 %v1164, %v1183
      %1185 = vdwg.mxu0
      %v1186 = vld [vmem:[%s25] sm:$0xff]
      %v1187 = vld [vmem:[%s25 + $0x8] sm:$0xff]
      %v1188 = vld [vmem:[%s25 + $0x10] sm:$0xff]
      %v1189 = vld [vmem:[%s25 + $0x18] sm:$0xff]
      %v1190 = vld [vmem:[%s27] sm:$0x1]
      %v1192 = vperm.slane %v1190, 0
      %1194 = vmatpush.msra.mxu0 0.0
      %1195 = vmatpush.msra.mxu0 0.0
      %1196 = vmatpush.msra.mxu0 0.0
      %1197 = vmatpush.msra.mxu0 0.0
      %1198 = vmatpush.msra.mxu0 0.0
      %1199 = vmatpush.msra.mxu0 0.0
      %1200 = vmatpush.msra.mxu0 0.0
      %1201 = vmatpush.msra.mxu0 0.0
      %1202 = vmatpush.msra.mxu0 0.0
      %1203 = vmatpush.msra.mxu0 0.0
      %1204 = vmatpush.msra.mxu0 0.0
      %1205 = vmatpush.msra.mxu0 0.0
      %1206 = vmatpush.msra.mxu0 %v1189
      %1207 = vmatpush.msra.mxu0 %v1188
      %1208 = vmatpush.msra.mxu0 %v1187
      %1209 = vmatpush.msra.mxu0 %v1186
      %1210 = vmatmul.f32.gmra.mxu0 %v1136
      %v1211 = vpop.f32.mrf.mxu0
      %v1212 = vadd.f32 %v1192, %v1211
      %1213 = vdwg.mxu0
      %v1214 = vmul.f32 %v1156, %v1075
      %v1215 = vmul.f32 %v1156, %v1080
      %v1216 = vmul.f32 %v1156, %v1085
      %v1217 = vmul.f32 %v1156, %v1090
      %v1219 = vsel %vm1095, %v1214, 0
      %v1222 = vsel %vm1095, %v1215, 0
      %v1225 = vsel %vm1095, %v1216, 0
      %v1228 = vsel %vm1095, %v1217, 0
      %v1231 = vsel %vm1095, %v1184, 0
      %1233 = vmatpush.xpose.msra.mxu0 0.0
      %1234 = vmatpush.xpose.msra.mxu0 0.0
      %1235 = vmatpush.xpose.msra.mxu0 0.0
      %1236 = vmatpush.xpose.msra.mxu0 0.0
      %1237 = vmatpush.xpose.msra.mxu0 0.0
      %1238 = vmatpush.xpose.msra.mxu0 0.0
      %1239 = vmatpush.xpose.msra.mxu0 0.0
      %1240 = vmatpush.xpose.msra.mxu0 0.0
      %1241 = vmatpush.xpose.msra.mxu0 0.0
      %1242 = vmatpush.xpose.msra.mxu0 0.0
      %1243 = vmatpush.xpose.msra.mxu0 0.0
      %1244 = vmatpush.xpose.msra.mxu0 0.0
      %1245 = vmatpush.xpose.msra.mxu0 0.0
      %1246 = vmatpush.xpose.msra.mxu0 0.0
      %1247 = vmatpush.xpose.msra.mxu0 0.0
      %1248 = vmatpush.xpose.msra.mxu0 %v1231
      %1249 = vmatmul.f32.gmra.mxu0 %v1219
      %v1250 = vpop.f32.mrf.mxu0
      %v1251 = vadd.f32 %v1070, %v1250
      %1252 = vmatmul.f32.gmra.mxu0 %v1222
      %v1253 = vpop.f32.mrf.mxu0
      %v1254 = vadd.f32 %v1070, %v1253
      %1255 = vmatmul.f32.gmra.mxu0 %v1225
      %v1256 = vpop.f32.mrf.mxu0
      %v1257 = vadd.f32 %v1070, %v1256
      %1258 = vmatmul.f32.gmra.mxu0 %v1228
      %v1259 = vpop.f32.mrf.mxu0
      %v1260 = vadd.f32 %v1070, %v1259
      %1261 = vdwg.mxu0
      %vm1262 = vcmask 64512
      %v1263 = vsel %vm1262, %v1251, -inf
      %1264 = vmax.xlane.f32.xlu0 %v1263
      %v1265 = vpop.xlane.xlu0 %1264
      %v1266 = vsel %vm1262, %v1254, -inf
      %1267 = vmax.xlane.f32.xlu0 %v1266
      %v1268 = vpop.xlane.xlu0 %1267
      %v1269 = vsel %vm1262, %v1257, -inf
      %1270 = vmax.xlane.f32.xlu0 %v1269
      %v1271 = vpop.xlane.xlu0 %1270
      %v1272 = vsel %vm1262, %v1260, -inf
      %1273 = vmax.xlane.f32.xlu0 %v1272
      %v1274 = vpop.xlane.xlu0 %1273
      %v1275 = vsub.f32 %v1251, %v1265
      %v1276 = vsub.f32 %v1254, %v1268
      %v1277 = vsub.f32 %v1257, %v1271
      %v1278 = vsub.f32 %v1260, %v1274
      %v1279 = vmul.f32 %v1275, 1.442695
      %v1280 = vpow.pop %v1279
      %v1281 = vmul.f32 %v1276, 1.442695
      %v1282 = vpow.pop %v1281
      %v1283 = vmul.f32 %v1277, 1.442695
      %v1284 = vpow.pop %v1283
      %v1285 = vmul.f32 %v1278, 1.442695
      %v1286 = vpow.pop %v1285
      %v1287 = vsel %vm1262, %v1280, 0.0
      %1288 = vadd.xlane.f32.xlu0 %v1287
      %v1289 = vpop.xlane.xlu0 %1288
      %v1290 = vsel %vm1262, %v1282, 0.0
      %1291 = vadd.xlane.f32.xlu0 %v1290
      %v1292 = vpop.xlane.xlu0 %1291
      %v1293 = vsel %vm1262, %v1284, 0.0
      %1294 = vadd.xlane.f32.xlu0 %v1293
      %v1295 = vpop.xlane.xlu0 %1294
      %v1296 = vsel %vm1262, %v1286, 0.0
      %1297 = vadd.xlane.f32.xlu0 %v1296
      %v1298 = vpop.xlane.xlu0 %1297
      %v1299 = vrcp.pop %v1289
      %v1300 = vrcp.pop %v1292
      %v1301 = vrcp.pop %v1295
      %v1302 = vrcp.pop %v1298
      %v1303 = vmul.f32 %v1280, %v1299
      %v1304 = vmul.f32 %v1282, %v1300
      %v1305 = vmul.f32 %v1284, %v1301
      %v1306 = vmul.f32 %v1286, %v1302
      %v1308 = vsel %vm1262, %v1303, 0
      %v1311 = vsel %vm1262, %v1304, 0
      %v1314 = vsel %vm1262, %v1305, 0
      %v1317 = vsel %vm1262, %v1306, 0
      %1319 = vmatpush.msra.mxu0 0.0
      %1320 = vmatpush.msra.mxu0 0.0
      %1321 = vmatpush.msra.mxu0 0.0
      %1322 = vmatpush.msra.mxu0 0.0
      %1323 = vmatpush.msra.mxu0 0.0
      %1324 = vmatpush.msra.mxu0 0.0
      %1325 = vmatpush.msra.mxu0 0.0
      %1326 = vmatpush.msra.mxu0 0.0
      %1327 = vmatpush.msra.mxu0 0.0
      %1328 = vmatpush.msra.mxu0 0.0
      %1329 = vmatpush.msra.mxu0 0.0
      %1330 = vmatpush.msra.mxu0 0.0
      %1331 = vmatpush.msra.mxu0 0.0
      %1332 = vmatpush.msra.mxu0 0.0
      %1333 = vmatpush.msra.mxu0 0.0
      %1334 = vmatpush.msra.mxu0 %v1212
      %1335 = vmatmul.f32.gmra.mxu0 %v1308
      %v1336 = vpop.f32.mrf.mxu0
      %v1337 = vadd.f32 0.0, %v1336
      %1338 = vmatmul.f32.gmra.mxu0 %v1311
      %v1339 = vpop.f32.mrf.mxu0
      %v1340 = vadd.f32 0.0, %v1339
      %1341 = vmatmul.f32.gmra.mxu0 %v1314
      %v1342 = vpop.f32.mrf.mxu0
      %v1343 = vadd.f32 0.0, %v1342
      %1344 = vmatmul.f32.gmra.mxu0 %v1317
      %v1345 = vpop.f32.mrf.mxu0
      %v1346 = vadd.f32 0.0, %v1345
      %1347 = vdwg.mxu0
      %v1348 = vmul.f32 %v1337, %v1075
      %v1349 = vmul.f32 %v1340, %v1080
      %v1350 = vmul.f32 %v1343, %v1085
      %v1351 = vmul.f32 %v1346, %v1090
      %v1352 = vld [vmem:[%s29] sm:$0xff]
      %v1353 = vld [vmem:[%s29 + $0x8] sm:$0xff]
      %v1354 = vld [vmem:[%s29 + $0x10] sm:$0xff]
      %v1355 = vld [vmem:[%s29 + $0x18] sm:$0xff]
      %v1357 = vsel %vm1095, %v1348, 0
      %v1360 = vsel %vm1095, %v1349, 0
      %v1363 = vsel %vm1095, %v1350, 0
      %v1366 = vsel %vm1095, %v1351, 0
      %1368 = vmatpush.msra.mxu0 0.0
      %1369 = vmatpush.msra.mxu0 0.0
      %1370 = vmatpush.msra.mxu0 0.0
      %1371 = vmatpush.msra.mxu0 0.0
      %1372 = vmatpush.msra.mxu0 0.0
      %1373 = vmatpush.msra.mxu0 0.0
      %1374 = vmatpush.msra.mxu0 0.0
      %1375 = vmatpush.msra.mxu0 0.0
      %1376 = vmatpush.msra.mxu0 0.0
      %1377 = vmatpush.msra.mxu0 0.0
      %1378 = vmatpush.msra.mxu0 0.0
      %1379 = vmatpush.msra.mxu0 0.0
      %1380 = vmatpush.msra.mxu0 %v1355
      %1381 = vmatpush.msra.mxu0 %v1354
      %1382 = vmatpush.msra.mxu0 %v1353
      %1383 = vmatpush.msra.mxu0 %v1352
      %1384 = vmatmul.f32.gmra.mxu0 %v1357
      %v1385 = vpop.f32.mrf.mxu0
      %v1386 = vadd.f32 0.0, %v1385
      %1387 = vmatmul.f32.gmra.mxu0 %v1360
      %v1388 = vpop.f32.mrf.mxu0
      %v1389 = vadd.f32 0.0, %v1388
      %1390 = vmatmul.f32.gmra.mxu0 %v1363
      %v1391 = vpop.f32.mrf.mxu0
      %v1392 = vadd.f32 0.0, %v1391
      %1393 = vmatmul.f32.gmra.mxu0 %v1366
      %v1394 = vpop.f32.mrf.mxu0
      %v1395 = vadd.f32 0.0, %v1394
      %1396 = vdwg.mxu0
      %v1397 = vadd.f32 %v1386, %v1389
      %v1398 = vadd.f32 %v1397, %v1392
      %v1399 = vadd.f32 %v1398, %v1395
      %v1400 = vadd.f32 %v1091, %v1399
      %v1401 = vld [vmem:[%s31] sm:$0x1]
      %v1403 = vperm.slane %v1401, 0
      %v1405 = vadd.f32 %v1400, %v1403
      %v1406 = vld [vmem:[%s33] sm:$0x1]
      %v1407 = vld [vmem:[%s35] sm:$0x1]
      %v1408 = vmul.f32 %v1405, %v1405
      %v1409 = vsel %vm1095, %v1405, 0.0
      %1410 = vadd.xlane.f32.xlu0 %v1409
      %v1411 = vpop.xlane.xlu0 %1410
      %v1412 = vsel %vm1095, %v1408, 0.0
      %1413 = vadd.xlane.f32.xlu0 %v1412
      %v1414 = vpop.xlane.xlu0 %1413
      %v1415 = vmul.f32 %v1411, 0.03125
      %v1416 = vmul.f32 %v1414, 0.03125
      %v1417 = vmul.f32 %v1415, %v1415
      %v1418 = vsub.f32 %v1416, %v1417
      %v1419 = vsub.f32 %v1405, %v1415
      %v1420 = vadd.f32 %v1418, 1e-05
      %v1421 = vrsqrt.pop %v1420
      %v1422 = vmul.f32 %v1421, %v1420
      %v1423 = vmul.f32 %v1422, %v1421
      %v1424 = vmul.f32 0.5, %v1423
      %v1425 = vsub.f32 1.5, %v1424
      %v1426 = vmul.f32 %v1421, %v1425
      %vm1427 = vweird.f32 %v1420
      %vm1428 = vweird.f32 %v1421
      %vm1429 = vmor %vm1427, %vm1428
      %v1430 = vsel %vm1429, %v1421, %v1426
      %v1431 = vmul.f32 %v1419, %v1430
      %v1433 = vperm.slane %v1406, 0
      %v1435 = vmul.f32 %v1431, %v1433
      %v1437 = vperm.slane %v1407, 0
      %v1439 = vadd.f32 %v1435, %v1437
      %v1440 = vld [vmem:[%s37] sm:$0xff]
      %v1441 = vld [vmem:[%s37 + $0x8] sm:$0xff]
      %v1442 = vld [vmem:[%s37 + $0x10] sm:$0xff]
      %v1443 = vld [vmem:[%s37 + $0x18] sm:$0xff]
      %v1444 = vld [vmem:[%s39] sm:$0x1]
      %v1446 = vperm.slane %v1444, 0
      %v1449 = vsel %vm1095, %v1439, 0
      %1451 = vmatpush.msra.mxu0 0.0
      %1452 = vmatpush.msra.mxu0 0.0
      %1453 = vmatpush.msra.mxu0 0.0
      %1454 = vmatpush.msra.mxu0 0.0
      %1455 = vmatpush.msra.mxu0 0.0
      %1456 = vmatpush.msra.mxu0 0.0
      %1457 = vmatpush.msra.mxu0 0.0
      %1458 = vmatpush.msra.mxu0 0.0
      %1459 = vmatpush.msra.mxu0 0.0
      %1460 = vmatpush.msra.mxu0 0.0
      %1461 = vmatpush.msra.mxu0 0.0
      %1462 = vmatpush.msra.mxu0 0.0
      %1463 = vmatpush.msra.mxu0 %v1443
      %1464 = vmatpush.msra.mxu0 %v1442
      %1465 = vmatpush.msra.mxu0 %v1441
      %1466 = vmatpush.msra.mxu0 %v1440
      %1467 = vmatmul.f32.gmra.mxu0 %v1449
      %v1468 = vpop.f32.mrf.mxu0
      %v1469 = vadd.f32 %v1446, %v1468
      %1470 = vdwg.mxu0
      %v1471 = vmul.f32 %v1469, 0.5
      %v1472 = vmul.f32 %v1469, 0.044715
      %v1473 = vmul.f32 %v1472, %v1469
      %v1474 = vmul.f32 %v1473, %v1469
      %v1475 = vadd.f32 %v1469, %v1474
      %v1476 = vmul.f32 %v1475, 0.7978846
      %v1477 = vtanh.pop %v1476
      %v1478 = vadd.f32 %v1477, 1.0
      %v1479 = vmul.f32 %v1471, %v1478
      %v1480 = vld [vmem:[%s41] sm:$0xff]
      %v1481 = vld [vmem:[%s41 + $0x8] sm:$0xff]
      %v1482 = vld [vmem:[%s41 + $0x10] sm:$0xff]
      %v1483 = vld [vmem:[%s41 + $0x18] sm:$0xff]
      %v1484 = vld [vmem:[%s41 + $0x20] sm:$0xff]
      %v1485 = vld [vmem:[%s41 + $0x28] sm:$0xff]
      %v1486 = vld [vmem:[%s41 + $0x30] sm:$0xff]
      %v1487 = vld [vmem:[%s41 + $0x38] sm:$0xff]
      %v1488 = vld [vmem:[%s41 + $0x40] sm:$0xff]
      %v1489 = vld [vmem:[%s41 + $0x48] sm:$0xff]
      %v1490 = vld [vmem:[%s41 + $0x50] sm:$0xff]
      %v1491 = vld [vmem:[%s41 + $0x58] sm:$0xff]
      %v1492 = vld [vmem:[%s41 + $0x60] sm:$0xff]
      %v1493 = vld [vmem:[%s41 + $0x68] sm:$0xff]
      %v1494 = vld [vmem:[%s41 + $0x70] sm:$0xff]
      %v1495 = vld [vmem:[%s41 + $0x78] sm:$0xff]
      %1496 = vmatpush.msra.mxu0 %v1495
      %1497 = vmatpush.msra.mxu0 %v1494
      %1498 = vmatpush.msra.mxu0 %v1493
      %1499 = vmatpush.msra.mxu0 %v1492
      %1500 = vmatpush.msra.mxu0 %v1491
      %1501 = vmatpush.msra.mxu0 %v1490
      %1502 = vmatpush.msra.mxu0 %v1489
      %1503 = vmatpush.msra.mxu0 %v1488
      %1504 = vmatpush.msra.mxu0 %v1487
      %1505 = vmatpush.msra.mxu0 %v1486
      %1506 = vmatpush.msra.mxu0 %v1485
      %1507 = vmatpush.msra.mxu0 %v1484
      %1508 = vmatpush.msra.mxu0 %v1483
      %1509 = vmatpush.msra.mxu0 %v1482
      %1510 = vmatpush.msra.mxu0 %v1481
      %1511 = vmatpush.msra.mxu0 %v1480
      %1512 = vmatmul.f32.gmra.mxu0 %v1479
      %v1513 = vpop.f32.mrf.mxu0
      %v1514 = vadd.f32 0.0, %v1513
      %1515 = vdwg.mxu0
      %v1516 = vadd.f32 %v1405, %v1514
      %v1517 = vld [vmem:[%s43] sm:$0x1]
      %v1519 = vperm.slane %v1517, 0
      %v1521 = vadd.f32 %v1516, %v1519
      %s1522 = scalar_lea.vmem %s13, 1
      %v1523 = vld [vmem:[%s1522] sm:$0x1]
      %s1524 = scalar_lea.vmem %s15, 1
      %v1525 = vld [vmem:[%s1524] sm:$0x1]
      %v1526 = vmul.f32 %v1521, %v1521
      %v1527 = vsel %vm1095, %v1521, 0.0
      %1528 = vadd.xlane.f32.xlu0 %v1527
      %v1529 = vpop.xlane.xlu0 %1528
      %v1530 = vsel %vm1095, %v1526, 0.0
      %1531 = vadd.xlane.f32.xlu0 %v1530
      %v1532 = vpop.xlane.xlu0 %1531
      %v1533 = vmul.f32 %v1529, 0.03125
      %v1534 = vmul.f32 %v1532, 0.03125
      %v1535 = vmul.f32 %v1533, %v1533
      %v1536 = vsub.f32 %v1534, %v1535
      %v1537 = vsub.f32 %v1521, %v1533
      %v1538 = vadd.f32 %v1536, 1e-05
      %v1539 = vrsqrt.pop %v1538
      %v1540 = vmul.f32 %v1539, %v1538
      %v1541 = vmul.f32 %v1540, %v1539
      %v1542 = vmul.f32 0.5, %v1541
      %v1543 = vsub.f32 1.5, %v1542
      %v1544 = vmul.f32 %v1539, %v1543
      %vm1545 = vweird.f32 %v1538
      %vm1546 = vweird.f32 %v1539
      %vm1547 = vmor %vm1545, %vm1546
      %v1548 = vsel %vm1547, %v1539, %v1544
      %v1549 = vmul.f32 %v1537, %v1548
      %v1551 = vperm.slane %v1523, 0
      %v1553 = vmul.f32 %v1549, %v1551
      %v1555 = vperm.slane %v1525, 0
      %v1557 = vadd.f32 %v1553, %v1555
      %s1558 = scalar_lea.vmem %s17, 32
      %v1559 = vld [vmem:[%s1558] sm:$0xff]
      %v1560 = vld [vmem:[%s1558 + $0x8] sm:$0xff]
      %v1561 = vld [vmem:[%s1558 + $0x10] sm:$0xff]
      %v1562 = vld [vmem:[%s1558 + $0x18] sm:$0xff]
      %s1563 = scalar_lea.vmem %s19, 1
      %v1564 = vld [vmem:[%s1563] sm:$0x1]
      %v1566 = vperm.slane %v1564, 0
      %v1569 = vsel %vm1095, %v1557, 0
      %1571 = vmatpush.msra.mxu0 0.0
      %1572 = vmatpush.msra.mxu0 0.0
      %1573 = vmatpush.msra.mxu0 0.0
      %1574 = vmatpush.msra.mxu0 0.0
      %1575 = vmatpush.msra.mxu0 0.0
      %1576 = vmatpush.msra.mxu0 0.0
      %1577 = vmatpush.msra.mxu0 0.0
      %1578 = vmatpush.msra.mxu0 0.0
      %1579 = vmatpush.msra.mxu0 0.0
      %1580 = vmatpush.msra.mxu0 0.0
      %1581 = vmatpush.msra.mxu0 0.0
      %1582 = vmatpush.msra.mxu0 0.0
      %1583 = vmatpush.msra.mxu0 %v1562
      %1584 = vmatpush.msra.mxu0 %v1561
      %1585 = vmatpush.msra.mxu0 %v1560
      %1586 = vmatpush.msra.mxu0 %v1559
      %1587 = vmatmul.f32.gmra.mxu0 %v1569
      %v1588 = vpop.f32.mrf.mxu0
      %v1589 = vadd.f32 %v1566, %v1588
      %1590 = vdwg.mxu0
      %s1591 = scalar_lea.vmem %s21, 32
      %v1592 = vld [vmem:[%s1591] sm:$0xff]
      %v1593 = vld [vmem:[%s1591 + $0x8] sm:$0xff]
      %v1594 = vld [vmem:[%s1591 + $0x10] sm:$0xff]
      %v1595 = vld [vmem:[%s1591 + $0x18] sm:$0xff]
      %s1596 = scalar_lea.vmem %s23, 1
      %v1597 = vld [vmem:[%s1596] sm:$0x1]
      %v1599 = vperm.slane %v1597, 0
      %1601 = vmatpush.msra.mxu0 0.0
      %1602 = vmatpush.msra.mxu0 0.0
      %1603 = vmatpush.msra.mxu0 0.0
      %1604 = vmatpush.msra.mxu0 0.0
      %1605 = vmatpush.msra.mxu0 0.0
      %1606 = vmatpush.msra.mxu0 0.0
      %1607 = vmatpush.msra.mxu0 0.0
      %1608 = vmatpush.msra.mxu0 0.0
      %1609 = vmatpush.msra.mxu0 0.0
      %1610 = vmatpush.msra.mxu0 0.0
      %1611 = vmatpush.msra.mxu0 0.0
      %1612 = vmatpush.msra.mxu0 0.0
      %1613 = vmatpush.msra.mxu0 %v1595
      %1614 = vmatpush.msra.mxu0 %v1594
      %1615 = vmatpush.msra.mxu0 %v1593
      %1616 = vmatpush.msra.mxu0 %v1592
      %1617 = vmatmul.f32.gmra.mxu0 %v1569
      %v1618 = vpop.f32.mrf.mxu0
      %v1619 = vadd.f32 %v1599, %v1618
      %1620 = vdwg.mxu0
      %s1621 = scalar_lea.vmem %s25, 32
      %v1622 = vld [vmem:[%s1621] sm:$0xff]
      %v1623 = vld [vmem:[%s1621 + $0x8] sm:$0xff]
      %v1624 = vld [vmem:[%s1621 + $0x10] sm:$0xff]
      %v1625 = vld [vmem:[%s1621 + $0x18] sm:$0xff]
      %s1626 = scalar_lea.vmem %s27, 1
      %v1627 = vld [vmem:[%s1626] sm:$0x1]
      %v1629 = vperm.slane %v1627, 0
      %1631 = vmatpush.msra.mxu0 0.0
      %1632 = vmatpush.msra.mxu0 0.0
      %1633 = vmatpush.msra.mxu0 0.0
      %1634 = vmatpush.msra.mxu0 0.0
      %1635 = vmatpush.msra.mxu0 0.0
      %1636 = vmatpush.msra.mxu0 0.0
      %1637 = vmatpush.msra.mxu0 0.0
      %1638 = vmatpush.msra.mxu0 0.0
      %1639 = vmatpush.msra.mxu0 0.0
      %1640 = vmatpush.msra.mxu0 0.0
      %1641 = vmatpush.msra.mxu0 0.0
      %1642 = vmatpush.msra.mxu0 0.0
      %1643 = vmatpush.msra.mxu0 %v1625
      %1644 = vmatpush.msra.mxu0 %v1624
      %1645 = vmatpush.msra.mxu0 %v1623
      %1646 = vmatpush.msra.mxu0 %v1622
      %1647 = vmatmul.f32.gmra.mxu0 %v1569
      %v1648 = vpop.f32.mrf.mxu0
      %v1649 = vadd.f32 %v1629, %v1648
      %1650 = vdwg.mxu0
      %v1651 = vmul.f32 %v1589, %v1075
      %v1652 = vmul.f32 %v1589, %v1080
      %v1653 = vmul.f32 %v1589, %v1085
      %v1654 = vmul.f32 %v1589, %v1090
      %v1656 = vsel %vm1095, %v1651, 0
      %v1659 = vsel %vm1095, %v1652, 0
      %v1662 = vsel %vm1095, %v1653, 0
      %v1665 = vsel %vm1095, %v1654, 0
      %v1668 = vsel %vm1095, %v1619, 0
      %1670 = vmatpush.xpose.msra.mxu0 0.0
      %1671 = vmatpush.xpose.msra.mxu0 0.0
      %1672 = vmatpush.xpose.msra.mxu0 0.0
      %1673 = vmatpush.xpose.msra.mxu0 0.0
      %1674 = vmatpush.xpose.msra.mxu0 0.0
      %1675 = vmatpush.xpose.msra.mxu0 0.0
      %1676 = vmatpush.xpose.msra.mxu0 0.0
      %1677 = vmatpush.xpose.msra.mxu0 0.0
      %1678 = vmatpush.xpose.msra.mxu0 0.0
      %1679 = vmatpush.xpose.msra.mxu0 0.0
      %1680 = vmatpush.xpose.msra.mxu0 0.0
      %1681 = vmatpush.xpose.msra.mxu0 0.0
      %1682 = vmatpush.xpose.msra.mxu0 0.0
      %1683 = vmatpush.xpose.msra.mxu0 0.0
      %1684 = vmatpush.xpose.msra.mxu0 0.0
      %1685 = vmatpush.xpose.msra.mxu0 %v1668
      %1686 = vmatmul.f32.gmra.mxu0 %v1656
      %v1687 = vpop.f32.mrf.mxu0
      %v1688 = vadd.f32 %v1070, %v1687
      %1689 = vmatmul.f32.gmra.mxu0 %v1659
      %v1690 = vpop.f32.mrf.mxu0
      %v1691 = vadd.f32 %v1070, %v1690
      %1692 = vmatmul.f32.gmra.mxu0 %v1662
      %v1693 = vpop.f32.mrf.mxu0
      %v1694 = vadd.f32 %v1070, %v1693
      %1695 = vmatmul.f32.gmra.mxu0 %v1665
      %v1696 = vpop.f32.mrf.mxu0
      %v1697 = vadd.f32 %v1070, %v1696
      %1698 = vdwg.mxu0
      %v1699 = vsel %vm1262, %v1688, -inf
      %1700 = vmax.xlane.f32.xlu0 %v1699
      %v1701 = vpop.xlane.xlu0 %1700
      %v1702 = vsel %vm1262, %v1691, -inf
      %1703 = vmax.xlane.f32.xlu0 %v1702
      %v1704 = vpop.xlane.xlu0 %1703
      %v1705 = vsel %vm1262, %v1694, -inf
      %1706 = vmax.xlane.f32.xlu0 %v1705
      %v1707 = vpop.xlane.xlu0 %1706
      %v1708 = vsel %vm1262, %v1697, -inf
      %1709 = vmax.xlane.f32.xlu0 %v1708
      %v1710 = vpop.xlane.xlu0 %1709
      %v1711 = vsub.f32 %v1688, %v1701
      %v1712 = vsub.f32 %v1691, %v1704
      %v1713 = vsub.f32 %v1694, %v1707
      %v1714 = vsub.f32 %v1697, %v1710
      %v1715 = vmul.f32 %v1711, 1.442695
      %v1716 = vpow.pop %v1715
      %v1717 = vmul.f32 %v1712, 1.442695
      %v1718 = vpow.pop %v1717
      %v1719 = vmul.f32 %v1713, 1.442695
      %v1720 = vpow.pop %v1719
      %v1721 = vmul.f32 %v1714, 1.442695
      %v1722 = vpow.pop %v1721
      %v1723 = vsel %vm1262, %v1716, 0.0
      %1724 = vadd.xlane.f32.xlu0 %v1723
      %v1725 = vpop.xlane.xlu0 %1724
      %v1726 = vsel %vm1262, %v1718, 0.0
      %1727 = vadd.xlane.f32.xlu0 %v1726
      %v1728 = vpop.xlane.xlu0 %1727
      %v1729 = vsel %vm1262, %v1720, 0.0
      %1730 = vadd.xlane.f32.xlu0 %v1729
      %v1731 = vpop.xlane.xlu0 %1730
      %v1732 = vsel %vm1262, %v1722, 0.0
      %1733 = vadd.xlane.f32.xlu0 %v1732
      %v1734 = vpop.xlane.xlu0 %1733
      %v1735 = vrcp.pop %v1725
      %v1736 = vrcp.pop %v1728
      %v1737 = vrcp.pop %v1731
      %v1738 = vrcp.pop %v1734
      %v1739 = vmul.f32 %v1716, %v1735
      %v1740 = vmul.f32 %v1718, %v1736
      %v1741 = vmul.f32 %v1720, %v1737
      %v1742 = vmul.f32 %v1722, %v1738
      %v1744 = vsel %vm1262, %v1739, 0
      %v1747 = vsel %vm1262, %v1740, 0
      %v1750 = vsel %vm1262, %v1741, 0
      %v1753 = vsel %vm1262, %v1742, 0
      %1755 = vmatpush.msra.mxu0 0.0
      %1756 = vmatpush.msra.mxu0 0.0
      %1757 = vmatpush.msra.mxu0 0.0
      %1758 = vmatpush.msra.mxu0 0.0
      %1759 = vmatpush.msra.mxu0 0.0
      %1760 = vmatpush.msra.mxu0 0.0
      %1761 = vmatpush.msra.mxu0 0.0
      %1762 = vmatpush.msra.mxu0 0.0
      %1763 = vmatpush.msra.mxu0 0.0
      %1764 = vmatpush.msra.mxu0 0.0
      %1765 = vmatpush.msra.mxu0 0.0
      %1766 = vmatpush.msra.mxu0 0.0
      %1767 = vmatpush.msra.mxu0 0.0
      %1768 = vmatpush.msra.mxu0 0.0
      %1769 = vmatpush.msra.mxu0 0.0
      %1770 = vmatpush.msra.mxu0 %v1649
      %1771 = vmatmul.f32.gmra.mxu0 %v1744
      %v1772 = vpop.f32.mrf.mxu0
      %v1773 = vadd.f32 0.0, %v1772
      %1774 = vmatmul.f32.gmra.mxu0 %v1747
      %v1775 = vpop.f32.mrf.mxu0
      %v1776 = vadd.f32 0.0, %v1775
      %1777 = vmatmul.f32.gmra.mxu0 %v1750
      %v1778 = vpop.f32.mrf.mxu0
      %v1779 = vadd.f32 0.0, %v1778
      %1780 = vmatmul.f32.gmra.mxu0 %v1753
      %v1781 = vpop.f32.mrf.mxu0
      %v1782 = vadd.f32 0.0, %v1781
      %1783 = vdwg.mxu0
      %v1784 = vmul.f32 %v1773, %v1075
      %v1785 = vmul.f32 %v1776, %v1080
      %v1786 = vmul.f32 %v1779, %v1085
      %v1787 = vmul.f32 %v1782, %v1090
      %s1788 = scalar_lea.vmem %s29, 32
      %v1789 = vld [vmem:[%s1788] sm:$0xff]
      %v1790 = vld [vmem:[%s1788 + $0x8] sm:$0xff]
      %v1791 = vld [vmem:[%s1788 + $0x10] sm:$0xff]
      %v1792 = vld [vmem:[%s1788 + $0x18] sm:$0xff]
      %v1794 = vsel %vm1095, %v1784, 0
      %v1797 = vsel %vm1095, %v1785, 0
      %v1800 = vsel %vm1095, %v1786, 0
      %v1803 = vsel %vm1095, %v1787, 0
      %1805 = vmatpush.msra.mxu0 0.0
      %1806 = vmatpush.msra.mxu0 0.0
      %1807 = vmatpush.msra.mxu0 0.0
      %1808 = vmatpush.msra.mxu0 0.0
      %1809 = vmatpush.msra.mxu0 0.0
      %1810 = vmatpush.msra.mxu0 0.0
      %1811 = vmatpush.msra.mxu0 0.0
      %1812 = vmatpush.msra.mxu0 0.0
      %1813 = vmatpush.msra.mxu0 0.0
      %1814 = vmatpush.msra.mxu0 0.0
      %1815 = vmatpush.msra.mxu0 0.0
      %1816 = vmatpush.msra.mxu0 0.0
      %1817 = vmatpush.msra.mxu0 %v1792
      %1818 = vmatpush.msra.mxu0 %v1791
      %1819 = vmatpush.msra.mxu0 %v1790
      %1820 = vmatpush.msra.mxu0 %v1789
      %1821 = vmatmul.f32.gmra.mxu0 %v1794
      %v1822 = vpop.f32.mrf.mxu0
      %v1823 = vadd.f32 0.0, %v1822
      %1824 = vmatmul.f32.gmra.mxu0 %v1797
      %v1825 = vpop.f32.mrf.mxu0
      %v1826 = vadd.f32 0.0, %v1825
      %1827 = vmatmul.f32.gmra.mxu0 %v1800
      %v1828 = vpop.f32.mrf.mxu0
      %v1829 = vadd.f32 0.0, %v1828
      %1830 = vmatmul.f32.gmra.mxu0 %v1803
      %v1831 = vpop.f32.mrf.mxu0
      %v1832 = vadd.f32 0.0, %v1831
      %1833 = vdwg.mxu0
      %v1834 = vadd.f32 %v1823, %v1826
      %v1835 = vadd.f32 %v1834, %v1829
      %v1836 = vadd.f32 %v1835, %v1832
      %v1837 = vadd.f32 %v1521, %v1836
      %s1838 = scalar_lea.vmem %s31, 1
      %v1839 = vld [vmem:[%s1838] sm:$0x1]
      %v1841 = vperm.slane %v1839, 0
      %v1843 = vadd.f32 %v1837, %v1841
      %s1844 = scalar_lea.vmem %s33, 1
      %v1845 = vld [vmem:[%s1844] sm:$0x1]
      %s1846 = scalar_lea.vmem %s35, 1
      %v1847 = vld [vmem:[%s1846] sm:$0x1]
      %v1848 = vmul.f32 %v1843, %v1843
      %v1849 = vsel %vm1095, %v1843, 0.0
      %1850 = vadd.xlane.f32.xlu0 %v1849
      %v1851 = vpop.xlane.xlu0 %1850
      %v1852 = vsel %vm1095, %v1848, 0.0
      %1853 = vadd.xlane.f32.xlu0 %v1852
      %v1854 = vpop.xlane.xlu0 %1853
      %v1855 = vmul.f32 %v1851, 0.03125
      %v1856 = vmul.f32 %v1854, 0.03125
      %v1857 = vmul.f32 %v1855, %v1855
      %v1858 = vsub.f32 %v1856, %v1857
      %v1859 = vsub.f32 %v1843, %v1855
      %v1860 = vadd.f32 %v1858, 1e-05
      %v1861 = vrsqrt.pop %v1860
      %v1862 = vmul.f32 %v1861, %v1860
      %v1863 = vmul.f32 %v1862, %v1861
      %v1864 = vmul.f32 0.5, %v1863
      %v1865 = vsub.f32 1.5, %v1864
      %v1866 = vmul.f32 %v1861, %v1865
      %vm1867 = vweird.f32 %v1860
      %vm1868 = vweird.f32 %v1861
      %vm1869 = vmor %vm1867, %vm1868
      %v1870 = vsel %vm1869, %v1861, %v1866
      %v1871 = vmul.f32 %v1859, %v1870
      %v1873 = vperm.slane %v1845, 0
      %v1875 = vmul.f32 %v1871, %v1873
      %v1877 = vperm.slane %v1847, 0
      %v1879 = vadd.f32 %v1875, %v1877
      %s1880 = scalar_lea.vmem %s37, 32
      %v1881 = vld [vmem:[%s1880] sm:$0xff]
      %v1882 = vld [vmem:[%s1880 + $0x8] sm:$0xff]
      %v1883 = vld [vmem:[%s1880 + $0x10] sm:$0xff]
      %v1884 = vld [vmem:[%s1880 + $0x18] sm:$0xff]
      %s1885 = scalar_lea.vmem %s39, 1
      %v1886 = vld [vmem:[%s1885] sm:$0x1]
      %v1888 = vperm.slane %v1886, 0
      %v1891 = vsel %vm1095, %v1879, 0
      %1893 = vmatpush.msra.mxu0 0.0
      %1894 = vmatpush.msra.mxu0 0.0
      %1895 = vmatpush.msra.mxu0 0.0
      %1896 = vmatpush.msra.mxu0 0.0
      %1897 = vmatpush.msra.mxu0 0.0
      %1898 = vmatpush.msra.mxu0 0.0
      %1899 = vmatpush.msra.mxu0 0.0
      %1900 = vmatpush.msra.mxu0 0.0
      %1901 = vmatpush.msra.mxu0 0.0
      %1902 = vmatpush.msra.mxu0 0.0
      %1903 = vmatpush.msra.mxu0 0.0
      %1904 = vmatpush.msra.mxu0 0.0
      %1905 = vmatpush.msra.mxu0 %v1884
      %1906 = vmatpush.msra.mxu0 %v1883
      %1907 = vmatpush.msra.mxu0 %v1882
      %1908 = vmatpush.msra.mxu0 %v1881
      %1909 = vmatmul.f32.gmra.mxu0 %v1891
      %v1910 = vpop.f32.mrf.mxu0
      %v1911 = vadd.f32 %v1888, %v1910
      %1912 = vdwg.mxu0
      %v1913 = vmul.f32 %v1911, 0.5
      %v1914 = vmul.f32 %v1911, 0.044715
      %v1915 = vmul.f32 %v1914, %v1911
      %v1916 = vmul.f32 %v1915, %v1911
      %v1917 = vadd.f32 %v1911, %v1916
      %v1918 = vmul.f32 %v1917, 0.7978846
      %v1919 = vtanh.pop %v1918
      %v1920 = vadd.f32 %v1919, 1.0
      %v1921 = vmul.f32 %v1913, %v1920
      %s1922 = scalar_lea.vmem %s41, 128
      %v1923 = vld [vmem:[%s1922] sm:$0xff]
      %v1924 = vld [vmem:[%s1922 + $0x8] sm:$0xff]
      %v1925 = vld [vmem:[%s1922 + $0x10] sm:$0xff]
      %v1926 = vld [vmem:[%s1922 + $0x18] sm:$0xff]
      %v1927 = vld [vmem:[%s1922 + $0x20] sm:$0xff]
      %v1928 = vld [vmem:[%s1922 + $0x28] sm:$0xff]
      %v1929 = vld [vmem:[%s1922 + $0x30] sm:$0xff]
      %v1930 = vld [vmem:[%s1922 + $0x38] sm:$0xff]
      %v1931 = vld [vmem:[%s1922 + $0x40] sm:$0xff]
      %v1932 = vld [vmem:[%s1922 + $0x48] sm:$0xff]
      %v1933 = vld [vmem:[%s1922 + $0x50] sm:$0xff]
      %v1934 = vld [vmem:[%s1922 + $0x58] sm:$0xff]
      %v1935 = vld [vmem:[%s1922 + $0x60] sm:$0xff]
      %v1936 = vld [vmem:[%s1922 + $0x68] sm:$0xff]
      %v1937 = vld [vmem:[%s1922 + $0x70] sm:$0xff]
      %v1938 = vld [vmem:[%s1922 + $0x78] sm:$0xff]
      %1939 = vmatpush.msra.mxu0 %v1938
      %1940 = vmatpush.msra.mxu0 %v1937
      %1941 = vmatpush.msra.mxu0 %v1936
      %1942 = vmatpush.msra.mxu0 %v1935
      %1943 = vmatpush.msra.mxu0 %v1934
      %1944 = vmatpush.msra.mxu0 %v1933
      %1945 = vmatpush.msra.mxu0 %v1932
      %1946 = vmatpush.msra.mxu0 %v1931
      %1947 = vmatpush.msra.mxu0 %v1930
      %1948 = vmatpush.msra.mxu0 %v1929
      %1949 = vmatpush.msra.mxu0 %v1928
      %1950 = vmatpush.msra.mxu0 %v1927
      %1951 = vmatpush.msra.mxu0 %v1926
      %1952 = vmatpush.msra.mxu0 %v1925
      %1953 = vmatpush.msra.mxu0 %v1924
      %1954 = vmatpush.msra.mxu0 %v1923
      %1955 = vmatmul.f32.gmra.mxu0 %v1921
      %v1956 = vpop.f32.mrf.mxu0
      %v1957 = vadd.f32 0.0, %v1956
      %1958 = vdwg.mxu0
      %v1959 = vadd.f32 %v1843, %v1957
      %s1960 = scalar_lea.vmem %s43, 1
      %v1961 = vld [vmem:[%s1960] sm:$0x1]
      %v1963 = vperm.slane %v1961, 0
      %v1965 = vadd.f32 %v1959, %v1963
      %s1966 = scalar_lea.vmem %s13, 2
      %v1967 = vld [vmem:[%s1966] sm:$0x1]
      %s1968 = scalar_lea.vmem %s15, 2
      %v1969 = vld [vmem:[%s1968] sm:$0x1]
      %v1970 = vmul.f32 %v1965, %v1965
      %v1971 = vsel %vm1095, %v1965, 0.0
      %1972 = vadd.xlane.f32.xlu0 %v1971
      %v1973 = vpop.xlane.xlu0 %1972
      %v1974 = vsel %vm1095, %v1970, 0.0
      %1975 = vadd.xlane.f32.xlu0 %v1974
      %v1976 = vpop.xlane.xlu0 %1975
      %v1977 = vmul.f32 %v1973, 0.03125
      %v1978 = vmul.f32 %v1976, 0.03125
      %v1979 = vmul.f32 %v1977, %v1977
      %v1980 = vsub.f32 %v1978, %v1979
      %v1981 = vsub.f32 %v1965, %v1977
      %v1982 = vadd.f32 %v1980, 1e-05
      %v1983 = vrsqrt.pop %v1982
      %v1984 = vmul.f32 %v1983, %v1982
      %v1985 = vmul.f32 %v1984, %v1983
      %v1986 = vmul.f32 0.5, %v1985
      %v1987 = vsub.f32 1.5, %v1986
      %v1988 = vmul.f32 %v1983, %v1987
      %vm1989 = vweird.f32 %v1982
      %vm1990 = vweird.f32 %v1983
      %vm1991 = vmor %vm1989, %vm1990
      %v1992 = vsel %vm1991, %v1983, %v1988
      %v1993 = vmul.f32 %v1981, %v1992
      %v1995 = vperm.slane %v1967, 0
      %v1997 = vmul.f32 %v1993, %v1995
      %v1999 = vperm.slane %v1969, 0
      %v2001 = vadd.f32 %v1997, %v1999
      %s2002 = scalar_lea.vmem %s17, 64
      %v2003 = vld [vmem:[%s2002] sm:$0xff]
      %v2004 = vld [vmem:[%s2002 + $0x8] sm:$0xff]
      %v2005 = vld [vmem:[%s2002 + $0x10] sm:$0xff]
      %v2006 = vld [vmem:[%s2002 + $0x18] sm:$0xff]
      %s2007 = scalar_lea.vmem %s19, 2
      %v2008 = vld [vmem:[%s2007] sm:$0x1]
      %v2010 = vperm.slane %v2008, 0
      %v2013 = vsel %vm1095, %v2001, 0
      %2015 = vmatpush.msra.mxu0 0.0
      %2016 = vmatpush.msra.mxu0 0.0
      %2017 = vmatpush.msra.mxu0 0.0
      %2018 = vmatpush.msra.mxu0 0.0
      %2019 = vmatpush.msra.mxu0 0.0
      %2020 = vmatpush.msra.mxu0 0.0
      %2021 = vmatpush.msra.mxu0 0.0
      %2022 = vmatpush.msra.mxu0 0.0
      %2023 = vmatpush.msra.mxu0 0.0
      %2024 = vmatpush.msra.mxu0 0.0
      %2025 = vmatpush.msra.mxu0 0.0
      %2026 = vmatpush.msra.mxu0 0.0
      %2027 = vmatpush.msra.mxu0 %v2006
      %2028 = vmatpush.msra.mxu0 %v2005
      %2029 = vmatpush.msra.mxu0 %v2004
      %2030 = vmatpush.msra.mxu0 %v2003
      %2031 = vmatmul.f32.gmra.mxu0 %v2013
      %v2032 = vpop.f32.mrf.mxu0
      %v2033 = vadd.f32 %v2010, %v2032
      %2034 = vdwg.mxu0
      %s2035 = scalar_lea.vmem %s21, 64
      %v2036 = vld [vmem:[%s2035] sm:$0xff]
      %v2037 = vld [vmem:[%s2035 + $0x8] sm:$0xff]
      %v2038 = vld [vmem:[%s2035 + $0x10] sm:$0xff]
      %v2039 = vld [vmem:[%s2035 + $0x18] sm:$0xff]
      %s2040 = scalar_lea.vmem %s23, 2
      %v2041 = vld [vmem:[%s2040] sm:$0x1]
      %v2043 = vperm.slane %v2041, 0
      %2045 = vmatpush.msra.mxu0 0.0
      %2046 = vmatpush.msra.mxu0 0.0
      %2047 = vmatpush.msra.mxu0 0.0
      %2048 = vmatpush.msra.mxu0 0.0
      %2049 = vmatpush.msra.mxu0 0.0
      %2050 = vmatpush.msra.mxu0 0.0
      %2051 = vmatpush.msra.mxu0 0.0
      %2052 = vmatpush.msra.mxu0 0.0
      %2053 = vmatpush.msra.mxu0 0.0
      %2054 = vmatpush.msra.mxu0 0.0
      %2055 = vmatpush.msra.mxu0 0.0
      %2056 = vmatpush.msra.mxu0 0.0
      %2057 = vmatpush.msra.mxu0 %v2039
      %2058 = vmatpush.msra.mxu0 %v2038
      %2059 = vmatpush.msra.mxu0 %v2037
      %2060 = vmatpush.msra.mxu0 %v2036
      %2061 = vmatmul.f32.gmra.mxu0 %v2013
      %v2062 = vpop.f32.mrf.mxu0
      %v2063 = vadd.f32 %v2043, %v2062
      %2064 = vdwg.mxu0
      %s2065 = scalar_lea.vmem %s25, 64
      %v2066 = vld [vmem:[%s2065] sm:$0xff]
      %v2067 = vld [vmem:[%s2065 + $0x8] sm:$0xff]
      %v2068 = vld [vmem:[%s2065 + $0x10] sm:$0xff]
      %v2069 = vld [vmem:[%s2065 + $0x18] sm:$0xff]
      %s2070 = scalar_lea.vmem %s27, 2
      %v2071 = vld [vmem:[%s2070] sm:$0x1]
      %v2073 = vperm.slane %v2071, 0
      %2075 = vmatpush.msra.mxu0 0.0
      %2076 = vmatpush.msra.mxu0 0.0
      %2077 = vmatpush.msra.mxu0 0.0
      %2078 = vmatpush.msra.mxu0 0.0
      %2079 = vmatpush.msra.mxu0 0.0
      %2080 = vmatpush.msra.mxu0 0.0
      %2081 = vmatpush.msra.mxu0 0.0
      %2082 = vmatpush.msra.mxu0 0.0
      %2083 = vmatpush.msra.mxu0 0.0
      %2084 = vmatpush.msra.mxu0 0.0
      %2085 = vmatpush.msra.mxu0 0.0
      %2086 = vmatpush.msra.mxu0 0.0
      %2087 = vmatpush.msra.mxu0 %v2069
      %2088 = vmatpush.msra.mxu0 %v2068
      %2089 = vmatpush.msra.mxu0 %v2067
      %2090 = vmatpush.msra.mxu0 %v2066
      %2091 = vmatmul.f32.gmra.mxu0 %v2013
      %v2092 = vpop.f32.mrf.mxu0
      %v2093 = vadd.f32 %v2073, %v2092
      %2094 = vdwg.mxu0
      %v2095 = vmul.f32 %v2033, %v1075
      %v2096 = vmul.f32 %v2033, %v1080
      %v2097 = vmul.f32 %v2033, %v1085
      %v2098 = vmul.f32 %v2033, %v1090
      %v2100 = vsel %vm1095, %v2095, 0
      %v2103 = vsel %vm1095, %v2096, 0
      %v2106 = vsel %vm1095, %v2097, 0
      %v2109 = vsel %vm1095, %v2098, 0
      %v2112 = vsel %vm1095, %v2063, 0
      %2114 = vmatpush.xpose.msra.mxu0 0.0
      %2115 = vmatpush.xpose.msra.mxu0 0.0
      %2116 = vmatpush.xpose.msra.mxu0 0.0
      %2117 = vmatpush.xpose.msra.mxu0 0.0
      %2118 = vmatpush.xpose.msra.mxu0 0.0
      %2119 = vmatpush.xpose.msra.mxu0 0.0
      %2120 = vmatpush.xpose.msra.mxu0 0.0
      %2121 = vmatpush.xpose.msra.mxu0 0.0
      %2122 = vmatpush.xpose.msra.mxu0 0.0
      %2123 = vmatpush.xpose.msra.mxu0 0.0
      %2124 = vmatpush.xpose.msra.mxu0 0.0
      %2125 = vmatpush.xpose.msra.mxu0 0.0
      %2126 = vmatpush.xpose.msra.mxu0 0.0
      %2127 = vmatpush.xpose.msra.mxu0 0.0
      %2128 = vmatpush.xpose.msra.mxu0 0.0
      %2129 = vmatpush.xpose.msra.mxu0 %v2112
      %2130 = vmatmul.f32.gmra.mxu0 %v2100
      %v2131 = vpop.f32.mrf.mxu0
      %v2132 = vadd.f32 %v1070, %v2131
      %2133 = vmatmul.f32.gmra.mxu0 %v2103
      %v2134 = vpop.f32.mrf.mxu0
      %v2135 = vadd.f32 %v1070, %v2134
      %2136 = vmatmul.f32.gmra.mxu0 %v2106
      %v2137 = vpop.f32.mrf.mxu0
      %v2138 = vadd.f32 %v1070, %v2137
      %2139 = vmatmul.f32.gmra.mxu0 %v2109
      %v2140 = vpop.f32.mrf.mxu0
      %v2141 = vadd.f32 %v1070, %v2140
      %2142 = vdwg.mxu0
      %v2143 = vsel %vm1262, %v2132, -inf
      %2144 = vmax.xlane.f32.xlu0 %v2143
      %v2145 = vpop.xlane.xlu0 %2144
      %v2146 = vsel %vm1262, %v2135, -inf
      %2147 = vmax.xlane.f32.xlu0 %v2146
      %v2148 = vpop.xlane.xlu0 %2147
      %v2149 = vsel %vm1262, %v2138, -inf
      %2150 = vmax.xlane.f32.xlu0 %v2149
      %v2151 = vpop.xlane.xlu0 %2150
      %v2152 = vsel %vm1262, %v2141, -inf
      %2153 = vmax.xlane.f32.xlu0 %v2152
      %v2154 = vpop.xlane.xlu0 %2153
      %v2155 = vsub.f32 %v2132, %v2145
      %v2156 = vsub.f32 %v2135, %v2148
      %v2157 = vsub.f32 %v2138, %v2151
      %v2158 = vsub.f32 %v2141, %v2154
      %v2159 = vmul.f32 %v2155, 1.442695
      %v2160 = vpow.pop %v2159
      %v2161 = vmul.f32 %v2156, 1.442695
      %v2162 = vpow.pop %v2161
      %v2163 = vmul.f32 %v2157, 1.442695
      %v2164 = vpow.pop %v2163
      %v2165 = vmul.f32 %v2158, 1.442695
      %v2166 = vpow.pop %v2165
      %v2167 = vsel %vm1262, %v2160, 0.0
      %2168 = vadd.xlane.f32.xlu0 %v2167
      %v2169 = vpop.xlane.xlu0 %2168
      %v2170 = vsel %vm1262, %v2162, 0.0
      %2171 = vadd.xlane.f32.xlu0 %v2170
      %v2172 = vpop.xlane.xlu0 %2171
      %v2173 = vsel %vm1262, %v2164, 0.0
      %2174 = vadd.xlane.f32.xlu0 %v2173
      %v2175 = vpop.xlane.xlu0 %2174
      %v2176 = vsel %vm1262, %v2166, 0.0
      %2177 = vadd.xlane.f32.xlu0 %v2176
      %v2178 = vpop.xlane.xlu0 %2177
      %v2179 = vrcp.pop %v2169
      %v2180 = vrcp.pop %v2172
      %v2181 = vrcp.pop %v2175
      %v2182 = vrcp.pop %v2178
      %v2183 = vmul.f32 %v2160, %v2179
      %v2184 = vmul.f32 %v2162, %v2180
      %v2185 = vmul.f32 %v2164, %v2181
      %v2186 = vmul.f32 %v2166, %v2182
      %v2188 = vsel %vm1262, %v2183, 0
      %v2191 = vsel %vm1262, %v2184, 0
      %v2194 = vsel %vm1262, %v2185, 0
      %v2197 = vsel %vm1262, %v2186, 0
      %2199 = vmatpush.msra.mxu0 0.0
      %2200 = vmatpush.msra.mxu0 0.0
      %2201 = vmatpush.msra.mxu0 0.0
      %2202 = vmatpush.msra.mxu0 0.0
      %2203 = vmatpush.msra.mxu0 0.0
      %2204 = vmatpush.msra.mxu0 0.0
      %2205 = vmatpush.msra.mxu0 0.0
      %2206 = vmatpush.msra.mxu0 0.0
      %2207 = vmatpush.msra.mxu0 0.0
      %2208 = vmatpush.msra.mxu0 0.0
      %2209 = vmatpush.msra.mxu0 0.0
      %2210 = vmatpush.msra.mxu0 0.0
      %2211 = vmatpush.msra.mxu0 0.0
      %2212 = vmatpush.msra.mxu0 0.0
      %2213 = vmatpush.msra.mxu0 0.0
      %2214 = vmatpush.msra.mxu0 %v2093
      %2215 = vmatmul.f32.gmra.mxu0 %v2188
      %v2216 = vpop.f32.mrf.mxu0
      %v2217 = vadd.f32 0.0, %v2216
      %2218 = vmatmul.f32.gmra.mxu0 %v2191
      %v2219 = vpop.f32.mrf.mxu0
      %v2220 = vadd.f32 0.0, %v2219
      %2221 = vmatmul.f32.gmra.mxu0 %v2194
      %v2222 = vpop.f32.mrf.mxu0
      %v2223 = vadd.f32 0.0, %v2222
      %2224 = vmatmul.f32.gmra.mxu0 %v2197
      %v2225 = vpop.f32.mrf.mxu0
      %v2226 = vadd.f32 0.0, %v2225
      %2227 = vdwg.mxu0
      %v2228 = vmul.f32 %v2217, %v1075
      %v2229 = vmul.f32 %v2220, %v1080
      %v2230 = vmul.f32 %v2223, %v1085
      %v2231 = vmul.f32 %v2226, %v1090
      %s2232 = scalar_lea.vmem %s29, 64
      %v2233 = vld [vmem:[%s2232] sm:$0xff]
      %v2234 = vld [vmem:[%s2232 + $0x8] sm:$0xff]
      %v2235 = vld [vmem:[%s2232 + $0x10] sm:$0xff]
      %v2236 = vld [vmem:[%s2232 + $0x18] sm:$0xff]
      %v2238 = vsel %vm1095, %v2228, 0
      %v2241 = vsel %vm1095, %v2229, 0
      %v2244 = vsel %vm1095, %v2230, 0
      %v2247 = vsel %vm1095, %v2231, 0
      %2249 = vmatpush.msra.mxu0 0.0
      %2250 = vmatpush.msra.mxu0 0.0
      %2251 = vmatpush.msra.mxu0 0.0
      %2252 = vmatpush.msra.mxu0 0.0
      %2253 = vmatpush.msra.mxu0 0.0
      %2254 = vmatpush.msra.mxu0 0.0
      %2255 = vmatpush.msra.mxu0 0.0
      %2256 = vmatpush.msra.mxu0 0.0
      %2257 = vmatpush.msra.mxu0 0.0
      %2258 = vmatpush.msra.mxu0 0.0
      %2259 = vmatpush.msra.mxu0 0.0
      %2260 = vmatpush.msra.mxu0 0.0
      %2261 = vmatpush.msra.mxu0 %v2236
      %2262 = vmatpush.msra.mxu0 %v2235
      %2263 = vmatpush.msra.mxu0 %v2234
      %2264 = vmatpush.msra.mxu0 %v2233
      %2265 = vmatmul.f32.gmra.mxu0 %v2238
      %v2266 = vpop.f32.mrf.mxu0
      %v2267 = vadd.f32 0.0, %v2266
      %2268 = vmatmul.f32.gmra.mxu0 %v2241
      %v2269 = vpop.f32.mrf.mxu0
      %v2270 = vadd.f32 0.0, %v2269
      %2271 = vmatmul.f32.gmra.mxu0 %v2244
      %v2272 = vpop.f32.mrf.mxu0
      %v2273 = vadd.f32 0.0, %v2272
      %2274 = vmatmul.f32.gmra.mxu0 %v2247
      %v2275 = vpop.f32.mrf.mxu0
      %v2276 = vadd.f32 0.0, %v2275
      %2277 = vdwg.mxu0
      %v2278 = vadd.f32 %v2267, %v2270
      %v2279 = vadd.f32 %v2278, %v2273
      %v2280 = vadd.f32 %v2279, %v2276
      %v2281 = vadd.f32 %v1965, %v2280
      %s2282 = scalar_lea.vmem %s31, 2
      %v2283 = vld [vmem:[%s2282] sm:$0x1]
      %v2285 = vperm.slane %v2283, 0
      %v2287 = vadd.f32 %v2281, %v2285
      %s2288 = scalar_lea.vmem %s33, 2
      %v2289 = vld [vmem:[%s2288] sm:$0x1]
      %s2290 = scalar_lea.vmem %s35, 2
      %v2291 = vld [vmem:[%s2290] sm:$0x1]
      %v2292 = vmul.f32 %v2287, %v2287
      %v2293 = vsel %vm1095, %v2287, 0.0
      %2294 = vadd.xlane.f32.xlu0 %v2293
      %v2295 = vpop.xlane.xlu0 %2294
      %v2296 = vsel %vm1095, %v2292, 0.0
      %2297 = vadd.xlane.f32.xlu0 %v2296
      %v2298 = vpop.xlane.xlu0 %2297
      %v2299 = vmul.f32 %v2295, 0.03125
      %v2300 = vmul.f32 %v2298, 0.03125
      %v2301 = vmul.f32 %v2299, %v2299
      %v2302 = vsub.f32 %v2300, %v2301
      %v2303 = vsub.f32 %v2287, %v2299
      %v2304 = vadd.f32 %v2302, 1e-05
      %v2305 = vrsqrt.pop %v2304
      %v2306 = vmul.f32 %v2305, %v2304
      %v2307 = vmul.f32 %v2306, %v2305
      %v2308 = vmul.f32 0.5, %v2307
      %v2309 = vsub.f32 1.5, %v2308
      %v2310 = vmul.f32 %v2305, %v2309
      %vm2311 = vweird.f32 %v2304
      %vm2312 = vweird.f32 %v2305
      %vm2313 = vmor %vm2311, %vm2312
      %v2314 = vsel %vm2313, %v2305, %v2310
      %v2315 = vmul.f32 %v2303, %v2314
      %v2317 = vperm.slane %v2289, 0
      %v2319 = vmul.f32 %v2315, %v2317
      %v2321 = vperm.slane %v2291, 0
      %v2323 = vadd.f32 %v2319, %v2321
      %s2324 = scalar_lea.vmem %s37, 64
      %v2325 = vld [vmem:[%s2324] sm:$0xff]
      %v2326 = vld [vmem:[%s2324 + $0x8] sm:$0xff]
      %v2327 = vld [vmem:[%s2324 + $0x10] sm:$0xff]
      %v2328 = vld [vmem:[%s2324 + $0x18] sm:$0xff]
      %s2329 = scalar_lea.vmem %s39, 2
      %v2330 = vld [vmem:[%s2329] sm:$0x1]
      %v2332 = vperm.slane %v2330, 0
      %v2335 = vsel %vm1095, %v2323, 0
      %2337 = vmatpush.msra.mxu0 0.0
      %2338 = vmatpush.msra.mxu0 0.0
      %2339 = vmatpush.msra.mxu0 0.0
      %2340 = vmatpush.msra.mxu0 0.0
      %2341 = vmatpush.msra.mxu0 0.0
      %2342 = vmatpush.msra.mxu0 0.0
      %2343 = vmatpush.msra.mxu0 0.0
      %2344 = vmatpush.msra.mxu0 0.0
      %2345 = vmatpush.msra.mxu0 0.0
      %2346 = vmatpush.msra.mxu0 0.0
      %2347 = vmatpush.msra.mxu0 0.0
      %2348 = vmatpush.msra.mxu0 0.0
      %2349 = vmatpush.msra.mxu0 %v2328
      %2350 = vmatpush.msra.mxu0 %v2327
      %2351 = vmatpush.msra.mxu0 %v2326
      %2352 = vmatpush.msra.mxu0 %v2325
      %2353 = vmatmul.f32.gmra.mxu0 %v2335
      %v2354 = vpop.f32.mrf.mxu0
      %v2355 = vadd.f32 %v2332, %v2354
      %2356 = vdwg.mxu0
      %v2357 = vmul.f32 %v2355, 0.5
      %v2358 = vmul.f32 %v2355, 0.044715
      %v2359 = vmul.f32 %v2358, %v2355
      %v2360 = vmul.f32 %v2359, %v2355
      %v2361 = vadd.f32 %v2355, %v2360
      %v2362 = vmul.f32 %v2361, 0.7978846
      %v2363 = vtanh.pop %v2362
      %v2364 = vadd.f32 %v2363, 1.0
      %v2365 = vmul.f32 %v2357, %v2364
      %s2366 = scalar_lea.vmem %s41, 256
      %v2367 = vld [vmem:[%s2366] sm:$0xff]
      %v2368 = vld [vmem:[%s2366 + $0x8] sm:$0xff]
      %v2369 = vld [vmem:[%s2366 + $0x10] sm:$0xff]
      %v2370 = vld [vmem:[%s2366 + $0x18] sm:$0xff]
      %v2371 = vld [vmem:[%s2366 + $0x20] sm:$0xff]
      %v2372 = vld [vmem:[%s2366 + $0x28] sm:$0xff]
      %v2373 = vld [vmem:[%s2366 + $0x30] sm:$0xff]
      %v2374 = vld [vmem:[%s2366 + $0x38] sm:$0xff]
      %v2375 = vld [vmem:[%s2366 + $0x40] sm:$0xff]
      %v2376 = vld [vmem:[%s2366 + $0x48] sm:$0xff]
      %v2377 = vld [vmem:[%s2366 + $0x50] sm:$0xff]
      %v2378 = vld [vmem:[%s2366 + $0x58] sm:$0xff]
      %v2379 = vld [vmem:[%s2366 + $0x60] sm:$0xff]
      %v2380 = vld [vmem:[%s2366 + $0x68] sm:$0xff]
      %v2381 = vld [vmem:[%s2366 + $0x70] sm:$0xff]
      %v2382 = vld [vmem:[%s2366 + $0x78] sm:$0xff]
      %2383 = vmatpush.msra.mxu0 %v2382
      %2384 = vmatpush.msra.mxu0 %v2381
      %2385 = vmatpush.msra.mxu0 %v2380
      %2386 = vmatpush.msra.mxu0 %v2379
      %2387 = vmatpush.msra.mxu0 %v2378
      %2388 = vmatpush.msra.mxu0 %v2377
      %2389 = vmatpush.msra.mxu0 %v2376
      %2390 = vmatpush.msra.mxu0 %v2375
      %2391 = vmatpush.msra.mxu0 %v2374
      %2392 = vmatpush.msra.mxu0 %v2373
      %2393 = vmatpush.msra.mxu0 %v2372
      %2394 = vmatpush.msra.mxu0 %v2371
      %2395 = vmatpush.msra.mxu0 %v2370
      %2396 = vmatpush.msra.mxu0 %v2369
      %2397 = vmatpush.msra.mxu0 %v2368
      %2398 = vmatpush.msra.mxu0 %v2367
      %2399 = vmatmul.f32.gmra.mxu0 %v2365
      %v2400 = vpop.f32.mrf.mxu0
      %v2401 = vadd.f32 0.0, %v2400
      %2402 = vdwg.mxu0
      %v2403 = vadd.f32 %v2287, %v2401
      %s2404 = scalar_lea.vmem %s43, 2
      %v2405 = vld [vmem:[%s2404] sm:$0x1]
      %v2407 = vperm.slane %v2405, 0
      %v2409 = vadd.f32 %v2403, %v2407
      %s2410 = scalar_lea.vmem %s13, 3
      %v2411 = vld [vmem:[%s2410] sm:$0x1]
      %s2412 = scalar_lea.vmem %s15, 3
      %v2413 = vld [vmem:[%s2412] sm:$0x1]
      %v2414 = vmul.f32 %v2409, %v2409
      %v2415 = vsel %vm1095, %v2409, 0.0
      %2416 = vadd.xlane.f32.xlu0 %v2415
      %v2417 = vpop.xlane.xlu0 %2416
      %v2418 = vsel %vm1095, %v2414, 0.0
      %2419 = vadd.xlane.f32.xlu0 %v2418
      %v2420 = vpop.xlane.xlu0 %2419
      %v2421 = vmul.f32 %v2417, 0.03125
      %v2422 = vmul.f32 %v2420, 0.03125
      %v2423 = vmul.f32 %v2421, %v2421
      %v2424 = vsub.f32 %v2422, %v2423
      %v2425 = vsub.f32 %v2409, %v2421
      %v2426 = vadd.f32 %v2424, 1e-05
      %v2427 = vrsqrt.pop %v2426
      %v2428 = vmul.f32 %v2427, %v2426
      %v2429 = vmul.f32 %v2428, %v2427
      %v2430 = vmul.f32 0.5, %v2429
      %v2431 = vsub.f32 1.5, %v2430
      %v2432 = vmul.f32 %v2427, %v2431
      %vm2433 = vweird.f32 %v2426
      %vm2434 = vweird.f32 %v2427
      %vm2435 = vmor %vm2433, %vm2434
      %v2436 = vsel %vm2435, %v2427, %v2432
      %v2437 = vmul.f32 %v2425, %v2436
      %v2439 = vperm.slane %v2411, 0
      %v2441 = vmul.f32 %v2437, %v2439
      %v2443 = vperm.slane %v2413, 0
      %v2445 = vadd.f32 %v2441, %v2443
      %s2446 = scalar_lea.vmem %s17, 96
      %v2447 = vld [vmem:[%s2446] sm:$0xff]
      %v2448 = vld [vmem:[%s2446 + $0x8] sm:$0xff]
      %v2449 = vld [vmem:[%s2446 + $0x10] sm:$0xff]
      %v2450 = vld [vmem:[%s2446 + $0x18] sm:$0xff]
      %s2451 = scalar_lea.vmem %s19, 3
      %v2452 = vld [vmem:[%s2451] sm:$0x1]
      %v2454 = vperm.slane %v2452, 0
      %v2457 = vsel %vm1095, %v2445, 0
      %2459 = vmatpush.msra.mxu0 0.0
      %2460 = vmatpush.msra.mxu0 0.0
      %2461 = vmatpush.msra.mxu0 0.0
      %2462 = vmatpush.msra.mxu0 0.0
      %2463 = vmatpush.msra.mxu0 0.0
      %2464 = vmatpush.msra.mxu0 0.0
      %2465 = vmatpush.msra.mxu0 0.0
      %2466 = vmatpush.msra.mxu0 0.0
      %2467 = vmatpush.msra.mxu0 0.0
      %2468 = vmatpush.msra.mxu0 0.0
      %2469 = vmatpush.msra.mxu0 0.0
      %2470 = vmatpush.msra.mxu0 0.0
      %2471 = vmatpush.msra.mxu0 %v2450
      %2472 = vmatpush.msra.mxu0 %v2449
      %2473 = vmatpush.msra.mxu0 %v2448
      %2474 = vmatpush.msra.mxu0 %v2447
      %2475 = vmatmul.f32.gmra.mxu0 %v2457
      %v2476 = vpop.f32.mrf.mxu0
      %v2477 = vadd.f32 %v2454, %v2476
      %2478 = vdwg.mxu0
      %s2479 = scalar_lea.vmem %s21, 96
      %v2480 = vld [vmem:[%s2479] sm:$0xff]
      %v2481 = vld [vmem:[%s2479 + $0x8] sm:$0xff]
      %v2482 = vld [vmem:[%s2479 + $0x10] sm:$0xff]
      %v2483 = vld [vmem:[%s2479 + $0x18] sm:$0xff]
      %s2484 = scalar_lea.vmem %s23, 3
      %v2485 = vld [vmem:[%s2484] sm:$0x1]
      %v2487 = vperm.slane %v2485, 0
      %2489 = vmatpush.msra.mxu0 0.0
      %2490 = vmatpush.msra.mxu0 0.0
      %2491 = vmatpush.msra.mxu0 0.0
      %2492 = vmatpush.msra.mxu0 0.0
      %2493 = vmatpush.msra.mxu0 0.0
      %2494 = vmatpush.msra.mxu0 0.0
      %2495 = vmatpush.msra.mxu0 0.0
      %2496 = vmatpush.msra.mxu0 0.0
      %2497 = vmatpush.msra.mxu0 0.0
      %2498 = vmatpush.msra.mxu0 0.0
      %2499 = vmatpush.msra.mxu0 0.0
      %2500 = vmatpush.msra.mxu0 0.0
      %2501 = vmatpush.msra.mxu0 %v2483
      %2502 = vmatpush.msra.mxu0 %v2482
      %2503 = vmatpush.msra.mxu0 %v2481
      %2504 = vmatpush.msra.mxu0 %v2480
      %2505 = vmatmul.f32.gmra.mxu0 %v2457
      %v2506 = vpop.f32.mrf.mxu0
      %v2507 = vadd.f32 %v2487, %v2506
      %2508 = vdwg.mxu0
      %s2509 = scalar_lea.vmem %s25, 96
      %v2510 = vld [vmem:[%s2509] sm:$0xff]
      %v2511 = vld [vmem:[%s2509 + $0x8] sm:$0xff]
      %v2512 = vld [vmem:[%s2509 + $0x10] sm:$0xff]
      %v2513 = vld [vmem:[%s2509 + $0x18] sm:$0xff]
      %s2514 = scalar_lea.vmem %s27, 3
      %v2515 = vld [vmem:[%s2514] sm:$0x1]
      %v2517 = vperm.slane %v2515, 0
      %2519 = vmatpush.msra.mxu0 0.0
      %2520 = vmatpush.msra.mxu0 0.0
      %2521 = vmatpush.msra.mxu0 0.0
      %2522 = vmatpush.msra.mxu0 0.0
      %2523 = vmatpush.msra.mxu0 0.0
      %2524 = vmatpush.msra.mxu0 0.0
      %2525 = vmatpush.msra.mxu0 0.0
      %2526 = vmatpush.msra.mxu0 0.0
      %2527 = vmatpush.msra.mxu0 0.0
      %2528 = vmatpush.msra.mxu0 0.0
      %2529 = vmatpush.msra.mxu0 0.0
      %2530 = vmatpush.msra.mxu0 0.0
      %2531 = vmatpush.msra.mxu0 %v2513
      %2532 = vmatpush.msra.mxu0 %v2512
      %2533 = vmatpush.msra.mxu0 %v2511
      %2534 = vmatpush.msra.mxu0 %v2510
      %2535 = vmatmul.f32.gmra.mxu0 %v2457
      %v2536 = vpop.f32.mrf.mxu0
      %v2537 = vadd.f32 %v2517, %v2536
      %2538 = vdwg.mxu0
      %v2539 = vmul.f32 %v2477, %v1075
      %v2540 = vmul.f32 %v2477, %v1080
      %v2541 = vmul.f32 %v2477, %v1085
      %v2542 = vmul.f32 %v2477, %v1090
      %v2544 = vsel %vm1095, %v2539, 0
      %v2547 = vsel %vm1095, %v2540, 0
      %v2550 = vsel %vm1095, %v2541, 0
      %v2553 = vsel %vm1095, %v2542, 0
      %v2556 = vsel %vm1095, %v2507, 0
      %2558 = vmatpush.xpose.msra.mxu0 0.0
      %2559 = vmatpush.xpose.msra.mxu0 0.0
      %2560 = vmatpush.xpose.msra.mxu0 0.0
      %2561 = vmatpush.xpose.msra.mxu0 0.0
      %2562 = vmatpush.xpose.msra.mxu0 0.0
      %2563 = vmatpush.xpose.msra.mxu0 0.0
      %2564 = vmatpush.xpose.msra.mxu0 0.0
      %2565 = vmatpush.xpose.msra.mxu0 0.0
      %2566 = vmatpush.xpose.msra.mxu0 0.0
      %2567 = vmatpush.xpose.msra.mxu0 0.0
      %2568 = vmatpush.xpose.msra.mxu0 0.0
      %2569 = vmatpush.xpose.msra.mxu0 0.0
      %2570 = vmatpush.xpose.msra.mxu0 0.0
      %2571 = vmatpush.xpose.msra.mxu0 0.0
      %2572 = vmatpush.xpose.msra.mxu0 0.0
      %2573 = vmatpush.xpose.msra.mxu0 %v2556
      %2574 = vmatmul.f32.gmra.mxu0 %v2544
      %v2575 = vpop.f32.mrf.mxu0
      %v2576 = vadd.f32 %v1070, %v2575
      %2577 = vmatmul.f32.gmra.mxu0 %v2547
      %v2578 = vpop.f32.mrf.mxu0
      %v2579 = vadd.f32 %v1070, %v2578
      %2580 = vmatmul.f32.gmra.mxu0 %v2550
      %v2581 = vpop.f32.mrf.mxu0
      %v2582 = vadd.f32 %v1070, %v2581
      %2583 = vmatmul.f32.gmra.mxu0 %v2553
      %v2584 = vpop.f32.mrf.mxu0
      %v2585 = vadd.f32 %v1070, %v2584
      %2586 = vdwg.mxu0
      %v2587 = vsel %vm1262, %v2576, -inf
      %2588 = vmax.xlane.f32.xlu0 %v2587
      %v2589 = vpop.xlane.xlu0 %2588
      %v2590 = vsel %vm1262, %v2579, -inf
      %2591 = vmax.xlane.f32.xlu0 %v2590
      %v2592 = vpop.xlane.xlu0 %2591
      %v2593 = vsel %vm1262, %v2582, -inf
      %2594 = vmax.xlane.f32.xlu0 %v2593
      %v2595 = vpop.xlane.xlu0 %2594
      %v2596 = vsel %vm1262, %v2585, -inf
      %2597 = vmax.xlane.f32.xlu0 %v2596
      %v2598 = vpop.xlane.xlu0 %2597
      %v2599 = vsub.f32 %v2576, %v2589
      %v2600 = vsub.f32 %v2579, %v2592
      %v2601 = vsub.f32 %v2582, %v2595
      %v2602 = vsub.f32 %v2585, %v2598
      %v2603 = vmul.f32 %v2599, 1.442695
      %v2604 = vpow.pop %v2603
      %v2605 = vmul.f32 %v2600, 1.442695
      %v2606 = vpow.pop %v2605
      %v2607 = vmul.f32 %v2601, 1.442695
      %v2608 = vpow.pop %v2607
      %v2609 = vmul.f32 %v2602, 1.442695
      %v2610 = vpow.pop %v2609
      %v2611 = vsel %vm1262, %v2604, 0.0
      %2612 = vadd.xlane.f32.xlu0 %v2611
      %v2613 = vpop.xlane.xlu0 %2612
      %v2614 = vsel %vm1262, %v2606, 0.0
      %2615 = vadd.xlane.f32.xlu0 %v2614
      %v2616 = vpop.xlane.xlu0 %2615
      %v2617 = vsel %vm1262, %v2608, 0.0
      %2618 = vadd.xlane.f32.xlu0 %v2617
      %v2619 = vpop.xlane.xlu0 %2618
      %v2620 = vsel %vm1262, %v2610, 0.0
      %2621 = vadd.xlane.f32.xlu0 %v2620
      %v2622 = vpop.xlane.xlu0 %2621
      %v2623 = vrcp.pop %v2613
      %v2624 = vrcp.pop %v2616
      %v2625 = vrcp.pop %v2619
      %v2626 = vrcp.pop %v2622
      %v2627 = vmul.f32 %v2604, %v2623
      %v2628 = vmul.f32 %v2606, %v2624
      %v2629 = vmul.f32 %v2608, %v2625
      %v2630 = vmul.f32 %v2610, %v2626
      %v2632 = vsel %vm1262, %v2627, 0
      %v2635 = vsel %vm1262, %v2628, 0
      %v2638 = vsel %vm1262, %v2629, 0
      %v2641 = vsel %vm1262, %v2630, 0
      %2643 = vmatpush.msra.mxu0 0.0
      %2644 = vmatpush.msra.mxu0 0.0
      %2645 = vmatpush.msra.mxu0 0.0
      %2646 = vmatpush.msra.mxu0 0.0
      %2647 = vmatpush.msra.mxu0 0.0
      %2648 = vmatpush.msra.mxu0 0.0
      %2649 = vmatpush.msra.mxu0 0.0
      %2650 = vmatpush.msra.mxu0 0.0
      %2651 = vmatpush.msra.mxu0 0.0
      %2652 = vmatpush.msra.mxu0 0.0
      %2653 = vmatpush.msra.mxu0 0.0
      %2654 = vmatpush.msra.mxu0 0.0
      %2655 = vmatpush.msra.mxu0 0.0
      %2656 = vmatpush.msra.mxu0 0.0
      %2657 = vmatpush.msra.mxu0 0.0
      %2658 = vmatpush.msra.mxu0 %v2537
      %2659 = vmatmul.f32.gmra.mxu0 %v2632
      %v2660 = vpop.f32.mrf.mxu0
      %v2661 = vadd.f32 0.0, %v2660
      %2662 = vmatmul.f32.gmra.mxu0 %v2635
      %v2663 = vpop.f32.mrf.mxu0
      %v2664 = vadd.f32 0.0, %v2663
      %2665 = vmatmul.f32.gmra.mxu0 %v2638
      %v2666 = vpop.f32.mrf.mxu0
      %v2667 = vadd.f32 0.0, %v2666
      %2668 = vmatmul.f32.gmra.mxu0 %v2641
      %v2669 = vpop.f32.mrf.mxu0
      %v2670 = vadd.f32 0.0, %v2669
      %2671 = vdwg.mxu0
      %v2672 = vmul.f32 %v2661, %v1075
      %v2673 = vmul.f32 %v2664, %v1080
      %v2674 = vmul.f32 %v2667, %v1085
      %v2675 = vmul.f32 %v2670, %v1090
      %s2676 = scalar_lea.vmem %s29, 96
      %v2677 = vld [vmem:[%s2676] sm:$0xff]
      %v2678 = vld [vmem:[%s2676 + $0x8] sm:$0xff]
      %v2679 = vld [vmem:[%s2676 + $0x10] sm:$0xff]
      %v2680 = vld [vmem:[%s2676 + $0x18] sm:$0xff]
      %v2682 = vsel %vm1095, %v2672, 0
      %v2685 = vsel %vm1095, %v2673, 0
      %v2688 = vsel %vm1095, %v2674, 0
      %v2691 = vsel %vm1095, %v2675, 0
      %2693 = vmatpush.msra.mxu0 0.0
      %2694 = vmatpush.msra.mxu0 0.0
      %2695 = vmatpush.msra.mxu0 0.0
      %2696 = vmatpush.msra.mxu0 0.0
      %2697 = vmatpush.msra.mxu0 0.0
      %2698 = vmatpush.msra.mxu0 0.0
      %2699 = vmatpush.msra.mxu0 0.0
      %2700 = vmatpush.msra.mxu0 0.0
      %2701 = vmatpush.msra.mxu0 0.0
      %2702 = vmatpush.msra.mxu0 0.0
      %2703 = vmatpush.msra.mxu0 0.0
      %2704 = vmatpush.msra.mxu0 0.0
      %2705 = vmatpush.msra.mxu0 %v2680
      %2706 = vmatpush.msra.mxu0 %v2679
      %2707 = vmatpush.msra.mxu0 %v2678
      %2708 = vmatpush.msra.mxu0 %v2677
      %2709 = vmatmul.f32.gmra.mxu0 %v2682
      %v2710 = vpop.f32.mrf.mxu0
      %v2711 = vadd.f32 0.0, %v2710
      %2712 = vmatmul.f32.gmra.mxu0 %v2685
      %v2713 = vpop.f32.mrf.mxu0
      %v2714 = vadd.f32 0.0, %v2713
      %2715 = vmatmul.f32.gmra.mxu0 %v2688
      %v2716 = vpop.f32.mrf.mxu0
      %v2717 = vadd.f32 0.0, %v2716
      %2718 = vmatmul.f32.gmra.mxu0 %v2691
      %v2719 = vpop.f32.mrf.mxu0
      %v2720 = vadd.f32 0.0, %v2719
      %2721 = vdwg.mxu0
      %v2722 = vadd.f32 %v2711, %v2714
      %v2723 = vadd.f32 %v2722, %v2717
      %v2724 = vadd.f32 %v2723, %v2720
      %v2725 = vadd.f32 %v2409, %v2724
      %s2726 = scalar_lea.vmem %s31, 3
      %v2727 = vld [vmem:[%s2726] sm:$0x1]
      %v2729 = vperm.slane %v2727, 0
      %v2731 = vadd.f32 %v2725, %v2729
      %s2732 = scalar_lea.vmem %s33, 3
      %v2733 = vld [vmem:[%s2732] sm:$0x1]
      %s2734 = scalar_lea.vmem %s35, 3
      %v2735 = vld [vmem:[%s2734] sm:$0x1]
      %v2736 = vmul.f32 %v2731, %v2731
      %v2737 = vsel %vm1095, %v2731, 0.0
      %2738 = vadd.xlane.f32.xlu0 %v2737
      %v2739 = vpop.xlane.xlu0 %2738
      %v2740 = vsel %vm1095, %v2736, 0.0
      %2741 = vadd.xlane.f32.xlu0 %v2740
      %v2742 = vpop.xlane.xlu0 %2741
      %v2743 = vmul.f32 %v2739, 0.03125
      %v2744 = vmul.f32 %v2742, 0.03125
      %v2745 = vmul.f32 %v2743, %v2743
      %v2746 = vsub.f32 %v2744, %v2745
      %v2747 = vsub.f32 %v2731, %v2743
      %v2748 = vadd.f32 %v2746, 1e-05
      %v2749 = vrsqrt.pop %v2748
      %v2750 = vmul.f32 %v2749, %v2748
      %v2751 = vmul.f32 %v2750, %v2749
      %v2752 = vmul.f32 0.5, %v2751
      %v2753 = vsub.f32 1.5, %v2752
      %v2754 = vmul.f32 %v2749, %v2753
      %vm2755 = vweird.f32 %v2748
      %vm2756 = vweird.f32 %v2749
      %vm2757 = vmor %vm2755, %vm2756
      %v2758 = vsel %vm2757, %v2749, %v2754
      %v2759 = vmul.f32 %v2747, %v2758
      %v2761 = vperm.slane %v2733, 0
      %v2763 = vmul.f32 %v2759, %v2761
      %v2765 = vperm.slane %v2735, 0
      %v2767 = vadd.f32 %v2763, %v2765
      %s2768 = scalar_lea.vmem %s37, 96
      %v2769 = vld [vmem:[%s2768] sm:$0xff]
      %v2770 = vld [vmem:[%s2768 + $0x8] sm:$0xff]
      %v2771 = vld [vmem:[%s2768 + $0x10] sm:$0xff]
      %v2772 = vld [vmem:[%s2768 + $0x18] sm:$0xff]
      %s2773 = scalar_lea.vmem %s39, 3
      %v2774 = vld [vmem:[%s2773] sm:$0x1]
      %v2776 = vperm.slane %v2774, 0
      %v2779 = vsel %vm1095, %v2767, 0
      %2781 = vmatpush.msra.mxu0 0.0
      %2782 = vmatpush.msra.mxu0 0.0
      %2783 = vmatpush.msra.mxu0 0.0
      %2784 = vmatpush.msra.mxu0 0.0
      %2785 = vmatpush.msra.mxu0 0.0
      %2786 = vmatpush.msra.mxu0 0.0
      %2787 = vmatpush.msra.mxu0 0.0
      %2788 = vmatpush.msra.mxu0 0.0
      %2789 = vmatpush.msra.mxu0 0.0
      %2790 = vmatpush.msra.mxu0 0.0
      %2791 = vmatpush.msra.mxu0 0.0
      %2792 = vmatpush.msra.mxu0 0.0
      %2793 = vmatpush.msra.mxu0 %v2772
      %2794 = vmatpush.msra.mxu0 %v2771
      %2795 = vmatpush.msra.mxu0 %v2770
      %2796 = vmatpush.msra.mxu0 %v2769
      %2797 = vmatmul.f32.gmra.mxu0 %v2779
      %v2798 = vpop.f32.mrf.mxu0
      %v2799 = vadd.f32 %v2776, %v2798
      %2800 = vdwg.mxu0
      %v2801 = vmul.f32 %v2799, 0.5
      %v2802 = vmul.f32 %v2799, 0.044715
      %v2803 = vmul.f32 %v2802, %v2799
      %v2804 = vmul.f32 %v2803, %v2799
      %v2805 = vadd.f32 %v2799, %v2804
      %v2806 = vmul.f32 %v2805, 0.7978846
      %v2807 = vtanh.pop %v2806
      %v2808 = vadd.f32 %v2807, 1.0
      %v2809 = vmul.f32 %v2801, %v2808
      %s2810 = scalar_lea.vmem %s41, 384
      %v2811 = vld [vmem:[%s2810] sm:$0xff]
      %v2812 = vld [vmem:[%s2810 + $0x8] sm:$0xff]
      %v2813 = vld [vmem:[%s2810 + $0x10] sm:$0xff]
      %v2814 = vld [vmem:[%s2810 + $0x18] sm:$0xff]
      %v2815 = vld [vmem:[%s2810 + $0x20] sm:$0xff]
      %v2816 = vld [vmem:[%s2810 + $0x28] sm:$0xff]
      %v2817 = vld [vmem:[%s2810 + $0x30] sm:$0xff]
      %v2818 = vld [vmem:[%s2810 + $0x38] sm:$0xff]
      %v2819 = vld [vmem:[%s2810 + $0x40] sm:$0xff]
      %v2820 = vld [vmem:[%s2810 + $0x48] sm:$0xff]
      %v2821 = vld [vmem:[%s2810 + $0x50] sm:$0xff]
      %v2822 = vld [vmem:[%s2810 + $0x58] sm:$0xff]
      %v2823 = vld [vmem:[%s2810 + $0x60] sm:$0xff]
      %v2824 = vld [vmem:[%s2810 + $0x68] sm:$0xff]
      %v2825 = vld [vmem:[%s2810 + $0x70] sm:$0xff]
      %v2826 = vld [vmem:[%s2810 + $0x78] sm:$0xff]
      %2827 = vmatpush.msra.mxu0 %v2826
      %2828 = vmatpush.msra.mxu0 %v2825
      %2829 = vmatpush.msra.mxu0 %v2824
      %2830 = vmatpush.msra.mxu0 %v2823
      %2831 = vmatpush.msra.mxu0 %v2822
      %2832 = vmatpush.msra.mxu0 %v2821
      %2833 = vmatpush.msra.mxu0 %v2820
      %2834 = vmatpush.msra.mxu0 %v2819
      %2835 = vmatpush.msra.mxu0 %v2818
      %2836 = vmatpush.msra.mxu0 %v2817
      %2837 = vmatpush.msra.mxu0 %v2816
      %2838 = vmatpush.msra.mxu0 %v2815
      %2839 = vmatpush.msra.mxu0 %v2814
      %2840 = vmatpush.msra.mxu0 %v2813
      %2841 = vmatpush.msra.mxu0 %v2812
      %2842 = vmatpush.msra.mxu0 %v2811
      %2843 = vmatmul.f32.gmra.mxu0 %v2809
      %v2844 = vpop.f32.mrf.mxu0
      %v2845 = vadd.f32 0.0, %v2844
      %2846 = vdwg.mxu0
      %v2847 = vadd.f32 %v2731, %v2845
      %s2848 = scalar_lea.vmem %s43, 3
      %v2849 = vld [vmem:[%s2848] sm:$0x1]
      %v2851 = vperm.slane %v2849, 0
      %v2853 = vadd.f32 %v2847, %v2851
      %s2854 = scalar_lea.vmem %s13, 4
      %v2855 = vld [vmem:[%s2854] sm:$0x1]
      %s2856 = scalar_lea.vmem %s15, 4
      %v2857 = vld [vmem:[%s2856] sm:$0x1]
      %v2858 = vmul.f32 %v2853, %v2853
      %v2859 = vsel %vm1095, %v2853, 0.0
      %2860 = vadd.xlane.f32.xlu0 %v2859
      %v2861 = vpop.xlane.xlu0 %2860
      %v2862 = vsel %vm1095, %v2858, 0.0
      %2863 = vadd.xlane.f32.xlu0 %v2862
      %v2864 = vpop.xlane.xlu0 %2863
      %v2865 = vmul.f32 %v2861, 0.03125
      %v2866 = vmul.f32 %v2864, 0.03125
      %v2867 = vmul.f32 %v2865, %v2865
      %v2868 = vsub.f32 %v2866, %v2867
      %v2869 = vsub.f32 %v2853, %v2865
      %v2870 = vadd.f32 %v2868, 1e-05
      %v2871 = vrsqrt.pop %v2870
      %v2872 = vmul.f32 %v2871, %v2870
      %v2873 = vmul.f32 %v2872, %v2871
      %v2874 = vmul.f32 0.5, %v2873
      %v2875 = vsub.f32 1.5, %v2874
      %v2876 = vmul.f32 %v2871, %v2875
      %vm2877 = vweird.f32 %v2870
      %vm2878 = vweird.f32 %v2871
      %vm2879 = vmor %vm2877, %vm2878
      %v2880 = vsel %vm2879, %v2871, %v2876
      %v2881 = vmul.f32 %v2869, %v2880
      %v2883 = vperm.slane %v2855, 0
      %v2885 = vmul.f32 %v2881, %v2883
      %v2887 = vperm.slane %v2857, 0
      %v2889 = vadd.f32 %v2885, %v2887
      %s2890 = scalar_lea.vmem %s17, 128
      %v2891 = vld [vmem:[%s2890] sm:$0xff]
      %v2892 = vld [vmem:[%s2890 + $0x8] sm:$0xff]
      %v2893 = vld [vmem:[%s2890 + $0x10] sm:$0xff]
      %v2894 = vld [vmem:[%s2890 + $0x18] sm:$0xff]
      %s2895 = scalar_lea.vmem %s19, 4
      %v2896 = vld [vmem:[%s2895] sm:$0x1]
      %v2898 = vperm.slane %v2896, 0
      %v2901 = vsel %vm1095, %v2889, 0
      %2903 = vmatpush.msra.mxu0 0.0
      %2904 = vmatpush.msra.mxu0 0.0
      %2905 = vmatpush.msra.mxu0 0.0
      %2906 = vmatpush.msra.mxu0 0.0
      %2907 = vmatpush.msra.mxu0 0.0
      %2908 = vmatpush.msra.mxu0 0.0
      %2909 = vmatpush.msra.mxu0 0.0
      %2910 = vmatpush.msra.mxu0 0.0
      %2911 = vmatpush.msra.mxu0 0.0
      %2912 = vmatpush.msra.mxu0 0.0
      %2913 = vmatpush.msra.mxu0 0.0
      %2914 = vmatpush.msra.mxu0 0.0
      %2915 = vmatpush.msra.mxu0 %v2894
      %2916 = vmatpush.msra.mxu0 %v2893
      %2917 = vmatpush.msra.mxu0 %v2892
      %2918 = vmatpush.msra.mxu0 %v2891
      %2919 = vmatmul.f32.gmra.mxu0 %v2901
      %v2920 = vpop.f32.mrf.mxu0
      %v2921 = vadd.f32 %v2898, %v2920
      %2922 = vdwg.mxu0
      %s2923 = scalar_lea.vmem %s21, 128
      %v2924 = vld [vmem:[%s2923] sm:$0xff]
      %v2925 = vld [vmem:[%s2923 + $0x8] sm:$0xff]
      %v2926 = vld [vmem:[%s2923 + $0x10] sm:$0xff]
      %v2927 = vld [vmem:[%s2923 + $0x18] sm:$0xff]
      %s2928 = scalar_lea.vmem %s23, 4
      %v2929 = vld [vmem:[%s2928] sm:$0x1]
      %v2931 = vperm.slane %v2929, 0
      %2933 = vmatpush.msra.mxu0 0.0
      %2934 = vmatpush.msra.mxu0 0.0
      %2935 = vmatpush.msra.mxu0 0.0
      %2936 = vmatpush.msra.mxu0 0.0
      %2937 = vmatpush.msra.mxu0 0.0
      %2938 = vmatpush.msra.mxu0 0.0
      %2939 = vmatpush.msra.mxu0 0.0
      %2940 = vmatpush.msra.mxu0 0.0
      %2941 = vmatpush.msra.mxu0 0.0
      %2942 = vmatpush.msra.mxu0 0.0
      %2943 = vmatpush.msra.mxu0 0.0
      %2944 = vmatpush.msra.mxu0 0.0
      %2945 = vmatpush.msra.mxu0 %v2927
      %2946 = vmatpush.msra.mxu0 %v2926
      %2947 = vmatpush.msra.mxu0 %v2925
      %2948 = vmatpush.msra.mxu0 %v2924
      %2949 = vmatmul.f32.gmra.mxu0 %v2901
      %v2950 = vpop.f32.mrf.mxu0
      %v2951 = vadd.f32 %v2931, %v2950
      %2952 = vdwg.mxu0
      %s2953 = scalar_lea.vmem %s25, 128
      %v2954 = vld [vmem:[%s2953] sm:$0xff]
      %v2955 = vld [vmem:[%s2953 + $0x8] sm:$0xff]
      %v2956 = vld [vmem:[%s2953 + $0x10] sm:$0xff]
      %v2957 = vld [vmem:[%s2953 + $0x18] sm:$0xff]
      %s2958 = scalar_lea.vmem %s27, 4
      %v2959 = vld [vmem:[%s2958] sm:$0x1]
      %v2961 = vperm.slane %v2959, 0
      %2963 = vmatpush.msra.mxu0 0.0
      %2964 = vmatpush.msra.mxu0 0.0
      %2965 = vmatpush.msra.mxu0 0.0
      %2966 = vmatpush.msra.mxu0 0.0
      %2967 = vmatpush.msra.mxu0 0.0
      %2968 = vmatpush.msra.mxu0 0.0
      %2969 = vmatpush.msra.mxu0 0.0
      %2970 = vmatpush.msra.mxu0 0.0
      %2971 = vmatpush.msra.mxu0 0.0
      %2972 = vmatpush.msra.mxu0 0.0
      %2973 = vmatpush.msra.mxu0 0.0
      %2974 = vmatpush.msra.mxu0 0.0
      %2975 = vmatpush.msra.mxu0 %v2957
      %2976 = vmatpush.msra.mxu0 %v2956
      %2977 = vmatpush.msra.mxu0 %v2955
      %2978 = vmatpush.msra.mxu0 %v2954
      %2979 = vmatmul.f32.gmra.mxu0 %v2901
      %v2980 = vpop.f32.mrf.mxu0
      %v2981 = vadd.f32 %v2961, %v2980
      %2982 = vdwg.mxu0
      %v2983 = vmul.f32 %v2921, %v1075
      %v2984 = vmul.f32 %v2921, %v1080
      %v2985 = vmul.f32 %v2921, %v1085
      %v2986 = vmul.f32 %v2921, %v1090
      %v2988 = vsel %vm1095, %v2983, 0
      %v2991 = vsel %vm1095, %v2984, 0
      %v2994 = vsel %vm1095, %v2985, 0
      %v2997 = vsel %vm1095, %v2986, 0
      %v3000 = vsel %vm1095, %v2951, 0
      %3002 = vmatpush.xpose.msra.mxu0 0.0
      %3003 = vmatpush.xpose.msra.mxu0 0.0
      %3004 = vmatpush.xpose.msra.mxu0 0.0
      %3005 = vmatpush.xpose.msra.mxu0 0.0
      %3006 = vmatpush.xpose.msra.mxu0 0.0
      %3007 = vmatpush.xpose.msra.mxu0 0.0
      %3008 = vmatpush.xpose.msra.mxu0 0.0
      %3009 = vmatpush.xpose.msra.mxu0 0.0
      %3010 = vmatpush.xpose.msra.mxu0 0.0
      %3011 = vmatpush.xpose.msra.mxu0 0.0
      %3012 = vmatpush.xpose.msra.mxu0 0.0
      %3013 = vmatpush.xpose.msra.mxu0 0.0
      %3014 = vmatpush.xpose.msra.mxu0 0.0
      %3015 = vmatpush.xpose.msra.mxu0 0.0
      %3016 = vmatpush.xpose.msra.mxu0 0.0
      %3017 = vmatpush.xpose.msra.mxu0 %v3000
      %3018 = vmatmul.f32.gmra.mxu0 %v2988
      %v3019 = vpop.f32.mrf.mxu0
      %v3020 = vadd.f32 %v1070, %v3019
      %3021 = vmatmul.f32.gmra.mxu0 %v2991
      %v3022 = vpop.f32.mrf.mxu0
      %v3023 = vadd.f32 %v1070, %v3022
      %3024 = vmatmul.f32.gmra.mxu0 %v2994
      %v3025 = vpop.f32.mrf.mxu0
      %v3026 = vadd.f32 %v1070, %v3025
      %3027 = vmatmul.f32.gmra.mxu0 %v2997
      %v3028 = vpop.f32.mrf.mxu0
      %v3029 = vadd.f32 %v1070, %v3028
      %3030 = vdwg.mxu0
      %v3031 = vsel %vm1262, %v3020, -inf
      %3032 = vmax.xlane.f32.xlu0 %v3031
      %v3033 = vpop.xlane.xlu0 %3032
      %v3034 = vsel %vm1262, %v3023, -inf
      %3035 = vmax.xlane.f32.xlu0 %v3034
      %v3036 = vpop.xlane.xlu0 %3035
      %v3037 = vsel %vm1262, %v3026, -inf
      %3038 = vmax.xlane.f32.xlu0 %v3037
      %v3039 = vpop.xlane.xlu0 %3038
      %v3040 = vsel %vm1262, %v3029, -inf
      %3041 = vmax.xlane.f32.xlu0 %v3040
      %v3042 = vpop.xlane.xlu0 %3041
      %v3043 = vsub.f32 %v3020, %v3033
      %v3044 = vsub.f32 %v3023, %v3036
      %v3045 = vsub.f32 %v3026, %v3039
      %v3046 = vsub.f32 %v3029, %v3042
      %v3047 = vmul.f32 %v3043, 1.442695
      %v3048 = vpow.pop %v3047
      %v3049 = vmul.f32 %v3044, 1.442695
      %v3050 = vpow.pop %v3049
      %v3051 = vmul.f32 %v3045, 1.442695
      %v3052 = vpow.pop %v3051
      %v3053 = vmul.f32 %v3046, 1.442695
      %v3054 = vpow.pop %v3053
      %v3055 = vsel %vm1262, %v3048, 0.0
      %3056 = vadd.xlane.f32.xlu0 %v3055
      %v3057 = vpop.xlane.xlu0 %3056
      %v3058 = vsel %vm1262, %v3050, 0.0
      %3059 = vadd.xlane.f32.xlu0 %v3058
      %v3060 = vpop.xlane.xlu0 %3059
      %v3061 = vsel %vm1262, %v3052, 0.0
      %3062 = vadd.xlane.f32.xlu0 %v3061
      %v3063 = vpop.xlane.xlu0 %3062
      %v3064 = vsel %vm1262, %v3054, 0.0
      %3065 = vadd.xlane.f32.xlu0 %v3064
      %v3066 = vpop.xlane.xlu0 %3065
      %v3067 = vrcp.pop %v3057
      %v3068 = vrcp.pop %v3060
      %v3069 = vrcp.pop %v3063
      %v3070 = vrcp.pop %v3066
      %v3071 = vmul.f32 %v3048, %v3067
      %v3072 = vmul.f32 %v3050, %v3068
      %v3073 = vmul.f32 %v3052, %v3069
      %v3074 = vmul.f32 %v3054, %v3070
      %v3076 = vsel %vm1262, %v3071, 0
      %v3079 = vsel %vm1262, %v3072, 0
      %v3082 = vsel %vm1262, %v3073, 0
      %v3085 = vsel %vm1262, %v3074, 0
      %3087 = vmatpush.msra.mxu0 0.0
      %3088 = vmatpush.msra.mxu0 0.0
      %3089 = vmatpush.msra.mxu0 0.0
      %3090 = vmatpush.msra.mxu0 0.0
      %3091 = vmatpush.msra.mxu0 0.0
      %3092 = vmatpush.msra.mxu0 0.0
      %3093 = vmatpush.msra.mxu0 0.0
      %3094 = vmatpush.msra.mxu0 0.0
      %3095 = vmatpush.msra.mxu0 0.0
      %3096 = vmatpush.msra.mxu0 0.0
      %3097 = vmatpush.msra.mxu0 0.0
      %3098 = vmatpush.msra.mxu0 0.0
      %3099 = vmatpush.msra.mxu0 0.0
      %3100 = vmatpush.msra.mxu0 0.0
      %3101 = vmatpush.msra.mxu0 0.0
      %3102 = vmatpush.msra.mxu0 %v2981
      %3103 = vmatmul.f32.gmra.mxu0 %v3076
      %v3104 = vpop.f32.mrf.mxu0
      %v3105 = vadd.f32 0.0, %v3104
      %3106 = vmatmul.f32.gmra.mxu0 %v3079
      %v3107 = vpop.f32.mrf.mxu0
      %v3108 = vadd.f32 0.0, %v3107
      %3109 = vmatmul.f32.gmra.mxu0 %v3082
      %v3110 = vpop.f32.mrf.mxu0
      %v3111 = vadd.f32 0.0, %v3110
      %3112 = vmatmul.f32.gmra.mxu0 %v3085
      %v3113 = vpop.f32.mrf.mxu0
      %v3114 = vadd.f32 0.0, %v3113
      %3115 = vdwg.mxu0
      %v3116 = vmul.f32 %v3105, %v1075
      %v3117 = vmul.f32 %v3108, %v1080
      %v3118 = vmul.f32 %v3111, %v1085
      %v3119 = vmul.f32 %v3114, %v1090
      %s3120 = scalar_lea.vmem %s29, 128
      %v3121 = vld [vmem:[%s3120] sm:$0xff]
      %v3122 = vld [vmem:[%s3120 + $0x8] sm:$0xff]
      %v3123 = vld [vmem:[%s3120 + $0x10] sm:$0xff]
      %v3124 = vld [vmem:[%s3120 + $0x18] sm:$0xff]
      %v3126 = vsel %vm1095, %v3116, 0
      %v3129 = vsel %vm1095, %v3117, 0
      %v3132 = vsel %vm1095, %v3118, 0
      %v3135 = vsel %vm1095, %v3119, 0
      %3137 = vmatpush.msra.mxu0 0.0
      %3138 = vmatpush.msra.mxu0 0.0
      %3139 = vmatpush.msra.mxu0 0.0
      %3140 = vmatpush.msra.mxu0 0.0
      %3141 = vmatpush.msra.mxu0 0.0
      %3142 = vmatpush.msra.mxu0 0.0
      %3143 = vmatpush.msra.mxu0 0.0
      %3144 = vmatpush.msra.mxu0 0.0
      %3145 = vmatpush.msra.mxu0 0.0
      %3146 = vmatpush.msra.mxu0 0.0
      %3147 = vmatpush.msra.mxu0 0.0
      %3148 = vmatpush.msra.mxu0 0.0
      %3149 = vmatpush.msra.mxu0 %v3124
      %3150 = vmatpush.msra.mxu0 %v3123
      %3151 = vmatpush.msra.mxu0 %v3122
      %3152 = vmatpush.msra.mxu0 %v3121
      %3153 = vmatmul.f32.gmra.mxu0 %v3126
      %v3154 = vpop.f32.mrf.mxu0
      %v3155 = vadd.f32 0.0, %v3154
      %3156 = vmatmul.f32.gmra.mxu0 %v3129
      %v3157 = vpop.f32.mrf.mxu0
      %v3158 = vadd.f32 0.0, %v3157
      %3159 = vmatmul.f32.gmra.mxu0 %v3132
      %v3160 = vpop.f32.mrf.mxu0
      %v3161 = vadd.f32 0.0, %v3160
      %3162 = vmatmul.f32.gmra.mxu0 %v3135
      %v3163 = vpop.f32.mrf.mxu0
      %v3164 = vadd.f32 0.0, %v3163
      %3165 = vdwg.mxu0
      %v3166 = vadd.f32 %v3155, %v3158
      %v3167 = vadd.f32 %v3166, %v3161
      %v3168 = vadd.f32 %v3167, %v3164
      %v3169 = vadd.f32 %v2853, %v3168
      %s3170 = scalar_lea.vmem %s31, 4
      %v3171 = vld [vmem:[%s3170] sm:$0x1]
      %v3173 = vperm.slane %v3171, 0
      %v3175 = vadd.f32 %v3169, %v3173
      %s3176 = scalar_lea.vmem %s33, 4
      %v3177 = vld [vmem:[%s3176] sm:$0x1]
      %s3178 = scalar_lea.vmem %s35, 4
      %v3179 = vld [vmem:[%s3178] sm:$0x1]
      %v3180 = vmul.f32 %v3175, %v3175
      %v3181 = vsel %vm1095, %v3175, 0.0
      %3182 = vadd.xlane.f32.xlu0 %v3181
      %v3183 = vpop.xlane.xlu0 %3182
      %v3184 = vsel %vm1095, %v3180, 0.0
      %3185 = vadd.xlane.f32.xlu0 %v3184
      %v3186 = vpop.xlane.xlu0 %3185
      %v3187 = vmul.f32 %v3183, 0.03125
      %v3188 = vmul.f32 %v3186, 0.03125
      %v3189 = vmul.f32 %v3187, %v3187
      %v3190 = vsub.f32 %v3188, %v3189
      %v3191 = vsub.f32 %v3175, %v3187
      %v3192 = vadd.f32 %v3190, 1e-05
      %v3193 = vrsqrt.pop %v3192
      %v3194 = vmul.f32 %v3193, %v3192
      %v3195 = vmul.f32 %v3194, %v3193
      %v3196 = vmul.f32 0.5, %v3195
      %v3197 = vsub.f32 1.5, %v3196
      %v3198 = vmul.f32 %v3193, %v3197
      %vm3199 = vweird.f32 %v3192
      %vm3200 = vweird.f32 %v3193
      %vm3201 = vmor %vm3199, %vm3200
      %v3202 = vsel %vm3201, %v3193, %v3198
      %v3203 = vmul.f32 %v3191, %v3202
      %v3205 = vperm.slane %v3177, 0
      %v3207 = vmul.f32 %v3203, %v3205
      %v3209 = vperm.slane %v3179, 0
      %v3211 = vadd.f32 %v3207, %v3209
      %s3212 = scalar_lea.vmem %s37, 128
      %v3213 = vld [vmem:[%s3212] sm:$0xff]
      %v3214 = vld [vmem:[%s3212 + $0x8] sm:$0xff]
      %v3215 = vld [vmem:[%s3212 + $0x10] sm:$0xff]
      %v3216 = vld [vmem:[%s3212 + $0x18] sm:$0xff]
      %s3217 = scalar_lea.vmem %s39, 4
      %v3218 = vld [vmem:[%s3217] sm:$0x1]
      %v3220 = vperm.slane %v3218, 0
      %v3223 = vsel %vm1095, %v3211, 0
      %3225 = vmatpush.msra.mxu0 0.0
      %3226 = vmatpush.msra.mxu0 0.0
      %3227 = vmatpush.msra.mxu0 0.0
      %3228 = vmatpush.msra.mxu0 0.0
      %3229 = vmatpush.msra.mxu0 0.0
      %3230 = vmatpush.msra.mxu0 0.0
      %3231 = vmatpush.msra.mxu0 0.0
      %3232 = vmatpush.msra.mxu0 0.0
      %3233 = vmatpush.msra.mxu0 0.0
      %3234 = vmatpush.msra.mxu0 0.0
      %3235 = vmatpush.msra.mxu0 0.0
      %3236 = vmatpush.msra.mxu0 0.0
      %3237 = vmatpush.msra.mxu0 %v3216
      %3238 = vmatpush.msra.mxu0 %v3215
      %3239 = vmatpush.msra.mxu0 %v3214
      %3240 = vmatpush.msra.mxu0 %v3213
      %3241 = vmatmul.f32.gmra.mxu0 %v3223
      %v3242 = vpop.f32.mrf.mxu0
      %v3243 = vadd.f32 %v3220, %v3242
      %3244 = vdwg.mxu0
      %v3245 = vmul.f32 %v3243, 0.5
      %v3246 = vmul.f32 %v3243, 0.044715
      %v3247 = vmul.f32 %v3246, %v3243
      %v3248 = vmul.f32 %v3247, %v3243
      %v3249 = vadd.f32 %v3243, %v3248
      %v3250 = vmul.f32 %v3249, 0.7978846
      %v3251 = vtanh.pop %v3250
      %v3252 = vadd.f32 %v3251, 1.0
      %v3253 = vmul.f32 %v3245, %v3252
      %s3254 = scalar_lea.vmem %s41, 512
      %v3255 = vld [vmem:[%s3254] sm:$0xff]
      %v3256 = vld [vmem:[%s3254 + $0x8] sm:$0xff]
      %v3257 = vld [vmem:[%s3254 + $0x10] sm:$0xff]
      %v3258 = vld [vmem:[%s3254 + $0x18] sm:$0xff]
      %v3259 = vld [vmem:[%s3254 + $0x20] sm:$0xff]
      %v3260 = vld [vmem:[%s3254 + $0x28] sm:$0xff]
      %v3261 = vld [vmem:[%s3254 + $0x30] sm:$0xff]
      %v3262 = vld [vmem:[%s3254 + $0x38] sm:$0xff]
      %v3263 = vld [vmem:[%s3254 + $0x40] sm:$0xff]
      %v3264 = vld [vmem:[%s3254 + $0x48] sm:$0xff]
      %v3265 = vld [vmem:[%s3254 + $0x50] sm:$0xff]
      %v3266 = vld [vmem:[%s3254 + $0x58] sm:$0xff]
      %v3267 = vld [vmem:[%s3254 + $0x60] sm:$0xff]
      %v3268 = vld [vmem:[%s3254 + $0x68] sm:$0xff]
      %v3269 = vld [vmem:[%s3254 + $0x70] sm:$0xff]
      %v3270 = vld [vmem:[%s3254 + $0x78] sm:$0xff]
      %3271 = vmatpush.msra.mxu0 %v3270
      %3272 = vmatpush.msra.mxu0 %v3269
      %3273 = vmatpush.msra.mxu0 %v3268
      %3274 = vmatpush.msra.mxu0 %v3267
      %3275 = vmatpush.msra.mxu0 %v3266
      %3276 = vmatpush.msra.mxu0 %v3265
      %3277 = vmatpush.msra.mxu0 %v3264
      %3278 = vmatpush.msra.mxu0 %v3263
      %3279 = vmatpush.msra.mxu0 %v3262
      %3280 = vmatpush.msra.mxu0 %v3261
      %3281 = vmatpush.msra.mxu0 %v3260
      %3282 = vmatpush.msra.mxu0 %v3259
      %3283 = vmatpush.msra.mxu0 %v3258
      %3284 = vmatpush.msra.mxu0 %v3257
      %3285 = vmatpush.msra.mxu0 %v3256
      %3286 = vmatpush.msra.mxu0 %v3255
      %3287 = vmatmul.f32.gmra.mxu0 %v3253
      %v3288 = vpop.f32.mrf.mxu0
      %v3289 = vadd.f32 0.0, %v3288
      %3290 = vdwg.mxu0
      %v3291 = vadd.f32 %v3175, %v3289
      %s3292 = scalar_lea.vmem %s43, 4
      %v3293 = vld [vmem:[%s3292] sm:$0x1]
      %v3295 = vperm.slane %v3293, 0
      %v3297 = vadd.f32 %v3291, %v3295
      %s3298 = scalar_lea.vmem %s13, 5
      %v3299 = vld [vmem:[%s3298] sm:$0x1]
      %s3300 = scalar_lea.vmem %s15, 5
      %v3301 = vld [vmem:[%s3300] sm:$0x1]
      %v3302 = vmul.f32 %v3297, %v3297
      %v3303 = vsel %vm1095, %v3297, 0.0
      %3304 = vadd.xlane.f32.xlu0 %v3303
      %v3305 = vpop.xlane.xlu0 %3304
      %v3306 = vsel %vm1095, %v3302, 0.0
      %3307 = vadd.xlane.f32.xlu0 %v3306
      %v3308 = vpop.xlane.xlu0 %3307
      %v3309 = vmul.f32 %v3305, 0.03125
      %v3310 = vmul.f32 %v3308, 0.03125
      %v3311 = vmul.f32 %v3309, %v3309
      %v3312 = vsub.f32 %v3310, %v3311
      %v3313 = vsub.f32 %v3297, %v3309
      %v3314 = vadd.f32 %v3312, 1e-05
      %v3315 = vrsqrt.pop %v3314
      %v3316 = vmul.f32 %v3315, %v3314
      %v3317 = vmul.f32 %v3316, %v3315
      %v3318 = vmul.f32 0.5, %v3317
      %v3319 = vsub.f32 1.5, %v3318
      %v3320 = vmul.f32 %v3315, %v3319
      %vm3321 = vweird.f32 %v3314
      %vm3322 = vweird.f32 %v3315
      %vm3323 = vmor %vm3321, %vm3322
      %v3324 = vsel %vm3323, %v3315, %v3320
      %v3325 = vmul.f32 %v3313, %v3324
      %v3327 = vperm.slane %v3299, 0
      %v3329 = vmul.f32 %v3325, %v3327
      %v3331 = vperm.slane %v3301, 0
      %v3333 = vadd.f32 %v3329, %v3331
      %s3334 = scalar_lea.vmem %s17, 160
      %v3335 = vld [vmem:[%s3334] sm:$0xff]
      %v3336 = vld [vmem:[%s3334 + $0x8] sm:$0xff]
      %v3337 = vld [vmem:[%s3334 + $0x10] sm:$0xff]
      %v3338 = vld [vmem:[%s3334 + $0x18] sm:$0xff]
      %s3339 = scalar_lea.vmem %s19, 5
      %v3340 = vld [vmem:[%s3339] sm:$0x1]
      %v3342 = vperm.slane %v3340, 0
      %v3345 = vsel %vm1095, %v3333, 0
      %3347 = vmatpush.msra.mxu0 0.0
      %3348 = vmatpush.msra.mxu0 0.0
      %3349 = vmatpush.msra.mxu0 0.0
      %3350 = vmatpush.msra.mxu0 0.0
      %3351 = vmatpush.msra.mxu0 0.0
      %3352 = vmatpush.msra.mxu0 0.0
      %3353 = vmatpush.msra.mxu0 0.0
      %3354 = vmatpush.msra.mxu0 0.0
      %3355 = vmatpush.msra.mxu0 0.0
      %3356 = vmatpush.msra.mxu0 0.0
      %3357 = vmatpush.msra.mxu0 0.0
      %3358 = vmatpush.msra.mxu0 0.0
      %3359 = vmatpush.msra.mxu0 %v3338
      %3360 = vmatpush.msra.mxu0 %v3337
      %3361 = vmatpush.msra.mxu0 %v3336
      %3362 = vmatpush.msra.mxu0 %v3335
      %3363 = vmatmul.f32.gmra.mxu0 %v3345
      %v3364 = vpop.f32.mrf.mxu0
      %v3365 = vadd.f32 %v3342, %v3364
      %3366 = vdwg.mxu0
      %s3367 = scalar_lea.vmem %s21, 160
      %v3368 = vld [vmem:[%s3367] sm:$0xff]
      %v3369 = vld [vmem:[%s3367 + $0x8] sm:$0xff]
      %v3370 = vld [vmem:[%s3367 + $0x10] sm:$0xff]
      %v3371 = vld [vmem:[%s3367 + $0x18] sm:$0xff]
      %s3372 = scalar_lea.vmem %s23, 5
      %v3373 = vld [vmem:[%s3372] sm:$0x1]
      %v3375 = vperm.slane %v3373, 0
      %3377 = vmatpush.msra.mxu0 0.0
      %3378 = vmatpush.msra.mxu0 0.0
      %3379 = vmatpush.msra.mxu0 0.0
      %3380 = vmatpush.msra.mxu0 0.0
      %3381 = vmatpush.msra.mxu0 0.0
      %3382 = vmatpush.msra.mxu0 0.0
      %3383 = vmatpush.msra.mxu0 0.0
      %3384 = vmatpush.msra.mxu0 0.0
      %3385 = vmatpush.msra.mxu0 0.0
      %3386 = vmatpush.msra.mxu0 0.0
      %3387 = vmatpush.msra.mxu0 0.0
      %3388 = vmatpush.msra.mxu0 0.0
      %3389 = vmatpush.msra.mxu0 %v3371
      %3390 = vmatpush.msra.mxu0 %v3370
      %3391 = vmatpush.msra.mxu0 %v3369
      %3392 = vmatpush.msra.mxu0 %v3368
      %3393 = vmatmul.f32.gmra.mxu0 %v3345
      %v3394 = vpop.f32.mrf.mxu0
      %v3395 = vadd.f32 %v3375, %v3394
      %3396 = vdwg.mxu0
      %s3397 = scalar_lea.vmem %s25, 160
      %v3398 = vld [vmem:[%s3397] sm:$0xff]
      %v3399 = vld [vmem:[%s3397 + $0x8] sm:$0xff]
      %v3400 = vld [vmem:[%s3397 + $0x10] sm:$0xff]
      %v3401 = vld [vmem:[%s3397 + $0x18] sm:$0xff]
      %s3402 = scalar_lea.vmem %s27, 5
      %v3403 = vld [vmem:[%s3402] sm:$0x1]
      %v3405 = vperm.slane %v3403, 0
      %3407 = vmatpush.msra.mxu0 0.0
      %3408 = vmatpush.msra.mxu0 0.0
      %3409 = vmatpush.msra.mxu0 0.0
      %3410 = vmatpush.msra.mxu0 0.0
      %3411 = vmatpush.msra.mxu0 0.0
      %3412 = vmatpush.msra.mxu0 0.0
      %3413 = vmatpush.msra.mxu0 0.0
      %3414 = vmatpush.msra.mxu0 0.0
      %3415 = vmatpush.msra.mxu0 0.0
      %3416 = vmatpush.msra.mxu0 0.0
      %3417 = vmatpush.msra.mxu0 0.0
      %3418 = vmatpush.msra.mxu0 0.0
      %3419 = vmatpush.msra.mxu0 %v3401
      %3420 = vmatpush.msra.mxu0 %v3400
      %3421 = vmatpush.msra.mxu0 %v3399
      %3422 = vmatpush.msra.mxu0 %v3398
      %3423 = vmatmul.f32.gmra.mxu0 %v3345
      %v3424 = vpop.f32.mrf.mxu0
      %v3425 = vadd.f32 %v3405, %v3424
      %3426 = vdwg.mxu0
      %v3427 = vmul.f32 %v3365, %v1075
      %v3428 = vmul.f32 %v3365, %v1080
      %v3429 = vmul.f32 %v3365, %v1085
      %v3430 = vmul.f32 %v3365, %v1090
      %v3432 = vsel %vm1095, %v3427, 0
      %v3435 = vsel %vm1095, %v3428, 0
      %v3438 = vsel %vm1095, %v3429, 0
      %v3441 = vsel %vm1095, %v3430, 0
      %v3444 = vsel %vm1095, %v3395, 0
      %3446 = vmatpush.xpose.msra.mxu0 0.0
      %3447 = vmatpush.xpose.msra.mxu0 0.0
      %3448 = vmatpush.xpose.msra.mxu0 0.0
      %3449 = vmatpush.xpose.msra.mxu0 0.0
      %3450 = vmatpush.xpose.msra.mxu0 0.0
      %3451 = vmatpush.xpose.msra.mxu0 0.0
      %3452 = vmatpush.xpose.msra.mxu0 0.0
      %3453 = vmatpush.xpose.msra.mxu0 0.0
      %3454 = vmatpush.xpose.msra.mxu0 0.0
      %3455 = vmatpush.xpose.msra.mxu0 0.0
      %3456 = vmatpush.xpose.msra.mxu0 0.0
      %3457 = vmatpush.xpose.msra.mxu0 0.0
      %3458 = vmatpush.xpose.msra.mxu0 0.0
      %3459 = vmatpush.xpose.msra.mxu0 0.0
      %3460 = vmatpush.xpose.msra.mxu0 0.0
      %3461 = vmatpush.xpose.msra.mxu0 %v3444
      %3462 = vmatmul.f32.gmra.mxu0 %v3432
      %v3463 = vpop.f32.mrf.mxu0
      %v3464 = vadd.f32 %v1070, %v3463
      %3465 = vmatmul.f32.gmra.mxu0 %v3435
      %v3466 = vpop.f32.mrf.mxu0
      %v3467 = vadd.f32 %v1070, %v3466
      %3468 = vmatmul.f32.gmra.mxu0 %v3438
      %v3469 = vpop.f32.mrf.mxu0
      %v3470 = vadd.f32 %v1070, %v3469
      %3471 = vmatmul.f32.gmra.mxu0 %v3441
      %v3472 = vpop.f32.mrf.mxu0
      %v3473 = vadd.f32 %v1070, %v3472
      %3474 = vdwg.mxu0
      %v3475 = vsel %vm1262, %v3464, -inf
      %3476 = vmax.xlane.f32.xlu0 %v3475
      %v3477 = vpop.xlane.xlu0 %3476
      %v3478 = vsel %vm1262, %v3467, -inf
      %3479 = vmax.xlane.f32.xlu0 %v3478
      %v3480 = vpop.xlane.xlu0 %3479
      %v3481 = vsel %vm1262, %v3470, -inf
      %3482 = vmax.xlane.f32.xlu0 %v3481
      %v3483 = vpop.xlane.xlu0 %3482
      %v3484 = vsel %vm1262, %v3473, -inf
      %3485 = vmax.xlane.f32.xlu0 %v3484
      %v3486 = vpop.xlane.xlu0 %3485
      %v3487 = vsub.f32 %v3464, %v3477
      %v3488 = vsub.f32 %v3467, %v3480
      %v3489 = vsub.f32 %v3470, %v3483
      %v3490 = vsub.f32 %v3473, %v3486
      %v3491 = vmul.f32 %v3487, 1.442695
      %v3492 = vpow.pop %v3491
      %v3493 = vmul.f32 %v3488, 1.442695
      %v3494 = vpow.pop %v3493
      %v3495 = vmul.f32 %v3489, 1.442695
      %v3496 = vpow.pop %v3495
      %v3497 = vmul.f32 %v3490, 1.442695
      %v3498 = vpow.pop %v3497
      %v3499 = vsel %vm1262, %v3492, 0.0
      %3500 = vadd.xlane.f32.xlu0 %v3499
      %v3501 = vpop.xlane.xlu0 %3500
      %v3502 = vsel %vm1262, %v3494, 0.0
      %3503 = vadd.xlane.f32.xlu0 %v3502
      %v3504 = vpop.xlane.xlu0 %3503
      %v3505 = vsel %vm1262, %v3496, 0.0
      %3506 = vadd.xlane.f32.xlu0 %v3505
      %v3507 = vpop.xlane.xlu0 %3506
      %v3508 = vsel %vm1262, %v3498, 0.0
      %3509 = vadd.xlane.f32.xlu0 %v3508
      %v3510 = vpop.xlane.xlu0 %3509
      %v3511 = vrcp.pop %v3501
      %v3512 = vrcp.pop %v3504
      %v3513 = vrcp.pop %v3507
      %v3514 = vrcp.pop %v3510
      %v3515 = vmul.f32 %v3492, %v3511
      %v3516 = vmul.f32 %v3494, %v3512
      %v3517 = vmul.f32 %v3496, %v3513
      %v3518 = vmul.f32 %v3498, %v3514
      %v3520 = vsel %vm1262, %v3515, 0
      %v3523 = vsel %vm1262, %v3516, 0
      %v3526 = vsel %vm1262, %v3517, 0
      %v3529 = vsel %vm1262, %v3518, 0
      %3531 = vmatpush.msra.mxu0 0.0
      %3532 = vmatpush.msra.mxu0 0.0
      %3533 = vmatpush.msra.mxu0 0.0
      %3534 = vmatpush.msra.mxu0 0.0
      %3535 = vmatpush.msra.mxu0 0.0
      %3536 = vmatpush.msra.mxu0 0.0
      %3537 = vmatpush.msra.mxu0 0.0
      %3538 = vmatpush.msra.mxu0 0.0
      %3539 = vmatpush.msra.mxu0 0.0
      %3540 = vmatpush.msra.mxu0 0.0
      %3541 = vmatpush.msra.mxu0 0.0
      %3542 = vmatpush.msra.mxu0 0.0
      %3543 = vmatpush.msra.mxu0 0.0
      %3544 = vmatpush.msra.mxu0 0.0
      %3545 = vmatpush.msra.mxu0 0.0
      %3546 = vmatpush.msra.mxu0 %v3425
      %3547 = vmatmul.f32.gmra.mxu0 %v3520
      %v3548 = vpop.f32.mrf.mxu0
      %v3549 = vadd.f32 0.0, %v3548
      %3550 = vmatmul.f32.gmra.mxu0 %v3523
      %v3551 = vpop.f32.mrf.mxu0
      %v3552 = vadd.f32 0.0, %v3551
      %3553 = vmatmul.f32.gmra.mxu0 %v3526
      %v3554 = vpop.f32.mrf.mxu0
      %v3555 = vadd.f32 0.0, %v3554
      %3556 = vmatmul.f32.gmra.mxu0 %v3529
      %v3557 = vpop.f32.mrf.mxu0
      %v3558 = vadd.f32 0.0, %v3557
      %3559 = vdwg.mxu0
      %v3560 = vmul.f32 %v3549, %v1075
      %v3561 = vmul.f32 %v3552, %v1080
      %v3562 = vmul.f32 %v3555, %v1085
      %v3563 = vmul.f32 %v3558, %v1090
      %s3564 = scalar_lea.vmem %s29, 160
      %v3565 = vld [vmem:[%s3564] sm:$0xff]
      %v3566 = vld [vmem:[%s3564 + $0x8] sm:$0xff]
      %v3567 = vld [vmem:[%s3564 + $0x10] sm:$0xff]
      %v3568 = vld [vmem:[%s3564 + $0x18] sm:$0xff]
      %v3570 = vsel %vm1095, %v3560, 0
      %v3573 = vsel %vm1095, %v3561, 0
      %v3576 = vsel %vm1095, %v3562, 0
      %v3579 = vsel %vm1095, %v3563, 0
      %3581 = vmatpush.msra.mxu0 0.0
      %3582 = vmatpush.msra.mxu0 0.0
      %3583 = vmatpush.msra.mxu0 0.0
      %3584 = vmatpush.msra.mxu0 0.0
      %3585 = vmatpush.msra.mxu0 0.0
      %3586 = vmatpush.msra.mxu0 0.0
      %3587 = vmatpush.msra.mxu0 0.0
      %3588 = vmatpush.msra.mxu0 0.0
      %3589 = vmatpush.msra.mxu0 0.0
      %3590 = vmatpush.msra.mxu0 0.0
      %3591 = vmatpush.msra.mxu0 0.0
      %3592 = vmatpush.msra.mxu0 0.0
      %3593 = vmatpush.msra.mxu0 %v3568
      %3594 = vmatpush.msra.mxu0 %v3567
      %3595 = vmatpush.msra.mxu0 %v3566
      %3596 = vmatpush.msra.mxu0 %v3565
      %3597 = vmatmul.f32.gmra.mxu0 %v3570
      %v3598 = vpop.f32.mrf.mxu0
      %v3599 = vadd.f32 0.0, %v3598
      %3600 = vmatmul.f32.gmra.mxu0 %v3573
      %v3601 = vpop.f32.mrf.mxu0
      %v3602 = vadd.f32 0.0, %v3601
      %3603 = vmatmul.f32.gmra.mxu0 %v3576
      %v3604 = vpop.f32.mrf.mxu0
      %v3605 = vadd.f32 0.0, %v3604
      %3606 = vmatmul.f32.gmra.mxu0 %v3579
      %v3607 = vpop.f32.mrf.mxu0
      %v3608 = vadd.f32 0.0, %v3607
      %3609 = vdwg.mxu0
      %v3610 = vadd.f32 %v3599, %v3602
      %v3611 = vadd.f32 %v3610, %v3605
      %v3612 = vadd.f32 %v3611, %v3608
      %v3613 = vadd.f32 %v3297, %v3612
      %s3614 = scalar_lea.vmem %s31, 5
      %v3615 = vld [vmem:[%s3614] sm:$0x1]
      %v3617 = vperm.slane %v3615, 0
      %v3619 = vadd.f32 %v3613, %v3617
      %s3620 = scalar_lea.vmem %s33, 5
      %v3621 = vld [vmem:[%s3620] sm:$0x1]
      %s3622 = scalar_lea.vmem %s35, 5
      %v3623 = vld [vmem:[%s3622] sm:$0x1]
      %v3624 = vmul.f32 %v3619, %v3619
      %v3625 = vsel %vm1095, %v3619, 0.0
      %3626 = vadd.xlane.f32.xlu0 %v3625
      %v3627 = vpop.xlane.xlu0 %3626
      %v3628 = vsel %vm1095, %v3624, 0.0
      %3629 = vadd.xlane.f32.xlu0 %v3628
      %v3630 = vpop.xlane.xlu0 %3629
      %v3631 = vmul.f32 %v3627, 0.03125
      %v3632 = vmul.f32 %v3630, 0.03125
      %v3633 = vmul.f32 %v3631, %v3631
      %v3634 = vsub.f32 %v3632, %v3633
      %v3635 = vsub.f32 %v3619, %v3631
      %v3636 = vadd.f32 %v3634, 1e-05
      %v3637 = vrsqrt.pop %v3636
      %v3638 = vmul.f32 %v3637, %v3636
      %v3639 = vmul.f32 %v3638, %v3637
      %v3640 = vmul.f32 0.5, %v3639
      %v3641 = vsub.f32 1.5, %v3640
      %v3642 = vmul.f32 %v3637, %v3641
      %vm3643 = vweird.f32 %v3636
      %vm3644 = vweird.f32 %v3637
      %vm3645 = vmor %vm3643, %vm3644
      %v3646 = vsel %vm3645, %v3637, %v3642
      %v3647 = vmul.f32 %v3635, %v3646
      %v3649 = vperm.slane %v3621, 0
      %v3651 = vmul.f32 %v3647, %v3649
      %v3653 = vperm.slane %v3623, 0
      %v3655 = vadd.f32 %v3651, %v3653
      %s3656 = scalar_lea.vmem %s37, 160
      %v3657 = vld [vmem:[%s3656] sm:$0xff]
      %v3658 = vld [vmem:[%s3656 + $0x8] sm:$0xff]
      %v3659 = vld [vmem:[%s3656 + $0x10] sm:$0xff]
      %v3660 = vld [vmem:[%s3656 + $0x18] sm:$0xff]
      %s3661 = scalar_lea.vmem %s39, 5
      %v3662 = vld [vmem:[%s3661] sm:$0x1]
      %v3664 = vperm.slane %v3662, 0
      %v3667 = vsel %vm1095, %v3655, 0
      %3669 = vmatpush.msra.mxu0 0.0
      %3670 = vmatpush.msra.mxu0 0.0
      %3671 = vmatpush.msra.mxu0 0.0
      %3672 = vmatpush.msra.mxu0 0.0
      %3673 = vmatpush.msra.mxu0 0.0
      %3674 = vmatpush.msra.mxu0 0.0
      %3675 = vmatpush.msra.mxu0 0.0
      %3676 = vmatpush.msra.mxu0 0.0
      %3677 = vmatpush.msra.mxu0 0.0
      %3678 = vmatpush.msra.mxu0 0.0
      %3679 = vmatpush.msra.mxu0 0.0
      %3680 = vmatpush.msra.mxu0 0.0
      %3681 = vmatpush.msra.mxu0 %v3660
      %3682 = vmatpush.msra.mxu0 %v3659
      %3683 = vmatpush.msra.mxu0 %v3658
      %3684 = vmatpush.msra.mxu0 %v3657
      %3685 = vmatmul.f32.gmra.mxu0 %v3667
      %v3686 = vpop.f32.mrf.mxu0
      %v3687 = vadd.f32 %v3664, %v3686
      %3688 = vdwg.mxu0
      %v3689 = vmul.f32 %v3687, 0.5
      %v3690 = vmul.f32 %v3687, 0.044715
      %v3691 = vmul.f32 %v3690, %v3687
      %v3692 = vmul.f32 %v3691, %v3687
      %v3693 = vadd.f32 %v3687, %v3692
      %v3694 = vmul.f32 %v3693, 0.7978846
      %v3695 = vtanh.pop %v3694
      %v3696 = vadd.f32 %v3695, 1.0
      %v3697 = vmul.f32 %v3689, %v3696
      %s3698 = scalar_lea.vmem %s41, 640
      %v3699 = vld [vmem:[%s3698] sm:$0xff]
      %v3700 = vld [vmem:[%s3698 + $0x8] sm:$0xff]
      %v3701 = vld [vmem:[%s3698 + $0x10] sm:$0xff]
      %v3702 = vld [vmem:[%s3698 + $0x18] sm:$0xff]
      %v3703 = vld [vmem:[%s3698 + $0x20] sm:$0xff]
      %v3704 = vld [vmem:[%s3698 + $0x28] sm:$0xff]
      %v3705 = vld [vmem:[%s3698 + $0x30] sm:$0xff]
      %v3706 = vld [vmem:[%s3698 + $0x38] sm:$0xff]
      %v3707 = vld [vmem:[%s3698 + $0x40] sm:$0xff]
      %v3708 = vld [vmem:[%s3698 + $0x48] sm:$0xff]
      %v3709 = vld [vmem:[%s3698 + $0x50] sm:$0xff]
      %v3710 = vld [vmem:[%s3698 + $0x58] sm:$0xff]
      %v3711 = vld [vmem:[%s3698 + $0x60] sm:$0xff]
      %v3712 = vld [vmem:[%s3698 + $0x68] sm:$0xff]
      %v3713 = vld [vmem:[%s3698 + $0x70] sm:$0xff]
      %v3714 = vld [vmem:[%s3698 + $0x78] sm:$0xff]
      %3715 = vmatpush.msra.mxu0 %v3714
      %3716 = vmatpush.msra.mxu0 %v3713
      %3717 = vmatpush.msra.mxu0 %v3712
      %3718 = vmatpush.msra.mxu0 %v3711
      %3719 = vmatpush.msra.mxu0 %v3710
      %3720 = vmatpush.msra.mxu0 %v3709
      %3721 = vmatpush.msra.mxu0 %v3708
      %3722 = vmatpush.msra.mxu0 %v3707
      %3723 = vmatpush.msra.mxu0 %v3706
      %3724 = vmatpush.msra.mxu0 %v3705
      %3725 = vmatpush.msra.mxu0 %v3704
      %3726 = vmatpush.msra.mxu0 %v3703
      %3727 = vmatpush.msra.mxu0 %v3702
      %3728 = vmatpush.msra.mxu0 %v3701
      %3729 = vmatpush.msra.mxu0 %v3700
      %3730 = vmatpush.msra.mxu0 %v3699
      %3731 = vmatmul.f32.gmra.mxu0 %v3697
      %v3732 = vpop.f32.mrf.mxu0
      %v3733 = vadd.f32 0.0, %v3732
      %3734 = vdwg.mxu0
      %v3735 = vadd.f32 %v3619, %v3733
      %s3736 = scalar_lea.vmem %s43, 5
      %v3737 = vld [vmem:[%s3736] sm:$0x1]
      %v3739 = vperm.slane %v3737, 0
      %v3741 = vadd.f32 %v3735, %v3739
      %v3742 = vld [vmem:[%s45] sm:$0x1]
      %v3743 = vld [vmem:[%s47] sm:$0x1]
      %v3744 = vmul.f32 %v3741, %v3741
      %v3745 = vsel %vm1095, %v3741, 0.0
      %3746 = vadd.xlane.f32.xlu0 %v3745
      %v3747 = vpop.xlane.xlu0 %3746
      %v3748 = vsel %vm1095, %v3744, 0.0
      %3749 = vadd.xlane.f32.xlu0 %v3748
      %v3750 = vpop.xlane.xlu0 %3749
      %v3751 = vmul.f32 %v3747, 0.03125
      %v3752 = vmul.f32 %v3750, 0.03125
      %v3753 = vmul.f32 %v3751, %v3751
      %v3754 = vsub.f32 %v3752, %v3753
      %v3755 = vsub.f32 %v3741, %v3751
      %v3756 = vadd.f32 %v3754, 1e-05
      %v3757 = vrsqrt.pop %v3756
      %v3758 = vmul.f32 %v3757, %v3756
      %v3759 = vmul.f32 %v3758, %v3757
      %v3760 = vmul.f32 0.5, %v3759
      %v3761 = vsub.f32 1.5, %v3760
      %v3762 = vmul.f32 %v3757, %v3761
      %vm3763 = vweird.f32 %v3756
      %vm3764 = vweird.f32 %v3757
      %vm3765 = vmor %vm3763, %vm3764
      %v3766 = vsel %vm3765, %v3757, %v3762
      %v3767 = vmul.f32 %v3755, %v3766
      %v3769 = vperm.slane %v3742, 0
      %v3771 = vmul.f32 %v3767, %v3769
      %v3773 = vperm.slane %v3743, 0
      %v3775 = vadd.f32 %v3771, %v3773
      %v3776 = vld [vmem:[%s1047] sm:$0x1]
      %v3777 = vld [vmem:[%s53] sm:$0xff]
      %v3778 = vld [vmem:[%s53 + $0x8] sm:$0xff]
      %v3779 = vld [vmem:[%s53 + $0x10] sm:$0xff]
      %v3780 = vld [vmem:[%s53 + $0x18] sm:$0xff]
      %v3782 = vsel %vm1095, %v3776, 0
      %3784 = vmatpush.msra.mxu0 0.0
      %3785 = vmatpush.msra.mxu0 0.0
      %3786 = vmatpush.msra.mxu0 0.0
      %3787 = vmatpush.msra.mxu0 0.0
      %3788 = vmatpush.msra.mxu0 0.0
      %3789 = vmatpush.msra.mxu0 0.0
      %3790 = vmatpush.msra.mxu0 0.0
      %3791 = vmatpush.msra.mxu0 0.0
      %3792 = vmatpush.msra.mxu0 0.0
      %3793 = vmatpush.msra.mxu0 0.0
      %3794 = vmatpush.msra.mxu0 0.0
      %3795 = vmatpush.msra.mxu0 0.0
      %3796 = vmatpush.msra.mxu0 %v3780
      %3797 = vmatpush.msra.mxu0 %v3779
      %3798 = vmatpush.msra.mxu0 %v3778
      %3799 = vmatpush.msra.mxu0 %v3777
      %3800 = vmatmul.f32.gmra.mxu0 %v3782
      %v3801 = vpop.f32.mrf.mxu0
      %v3802 = vadd.f32 0.0, %v3801
      %3803 = vdwg.mxu0
      %v3804 = vld [vmem:[%s49] sm:$0xff]
      %v3805 = vld [vmem:[%s49 + $0x8] sm:$0xff]
      %v3806 = vld [vmem:[%s49 + $0x10] sm:$0xff]
      %v3807 = vld [vmem:[%s49 + $0x18] sm:$0xff]
      %v3808 = vld [vmem:[%s1044] sm:$0xff]
      %v3809 = vld [vmem:[%s51] sm:$0xff]
      %v3811 = vsel %vm1262, %v3808, 0
      %3813 = vmatpush.msra.mxu0 0.0
      %3814 = vmatpush.msra.mxu0 0.0
      %3815 = vmatpush.msra.mxu0 0.0
      %3816 = vmatpush.msra.mxu0 0.0
      %3817 = vmatpush.msra.mxu0 0.0
      %3818 = vmatpush.msra.mxu0 0.0
      %3819 = vmatpush.msra.mxu0 0.0
      %3820 = vmatpush.msra.mxu0 0.0
      %3821 = vmatpush.msra.mxu0 0.0
      %3822 = vmatpush.msra.mxu0 0.0
      %3823 = vmatpush.msra.mxu0 0.0
      %3824 = vmatpush.msra.mxu0 0.0
      %3825 = vmatpush.msra.mxu0 0.0
      %3826 = vmatpush.msra.mxu0 0.0
      %3827 = vmatpush.msra.mxu0 0.0
      %3828 = vmatpush.msra.mxu0 %v3809
      %3829 = vmatmul.f32.gmra.mxu0 %v3811
      %v3830 = vpop.f32.mrf.mxu0
      %v3831 = vadd.f32 0.0, %v3830
      %3832 = vdwg.mxu0
      %v3834 = vsel %vm1095, %v3775, 0
      %3836 = vmatpush.msra.mxu0 0.0
      %3837 = vmatpush.msra.mxu0 0.0
      %3838 = vmatpush.msra.mxu0 0.0
      %3839 = vmatpush.msra.mxu0 0.0
      %3840 = vmatpush.msra.mxu0 0.0
      %3841 = vmatpush.msra.mxu0 0.0
      %3842 = vmatpush.msra.mxu0 0.0
      %3843 = vmatpush.msra.mxu0 0.0
      %3844 = vmatpush.msra.mxu0 0.0
      %3845 = vmatpush.msra.mxu0 0.0
      %3846 = vmatpush.msra.mxu0 0.0
      %3847 = vmatpush.msra.mxu0 0.0
      %3848 = vmatpush.msra.mxu0 %v3807
      %3849 = vmatpush.msra.mxu0 %v3806
      %3850 = vmatpush.msra.mxu0 %v3805
      %3851 = vmatpush.msra.mxu0 %v3804
      %3852 = vmatmul.f32.gmra.mxu0 %v3834
      %v3853 = vpop.f32.mrf.mxu0
      %v3854 = vadd.f32 %v3831, %v3853
      %3855 = vdwg.mxu0
      %v3856 = vperm.slane %v3802, 0
      %v3857 = vadd.f32 %v3854, %v3856
      %v3858 = vld [vmem:[%s55] sm:$0x1]
      %v3860 = vperm.slane %v3858, 0
      %v3862 = vadd.f32 %v3857, %v3860
      %v3863 = vmax.f32 %v3862, 0.0
      %v3864 = vld [vmem:[%s57] sm:$0xff]
      %v3865 = vld [vmem:[%s57 + $0x8] sm:$0xff]
      %v3866 = vld [vmem:[%s57 + $0x10] sm:$0xff]
      %v3867 = vld [vmem:[%s57 + $0x18] sm:$0xff]
      %v3868 = vld [vmem:[%s57 + $0x20] sm:$0xff]
      %v3869 = vld [vmem:[%s57 + $0x28] sm:$0xff]
      %v3870 = vld [vmem:[%s57 + $0x30] sm:$0xff]
      %v3871 = vld [vmem:[%s57 + $0x38] sm:$0xff]
      %v3872 = vld [vmem:[%s57 + $0x40] sm:$0xff]
      %v3873 = vld [vmem:[%s57 + $0x48] sm:$0xff]
      %v3874 = vld [vmem:[%s57 + $0x50] sm:$0xff]
      %v3875 = vld [vmem:[%s57 + $0x58] sm:$0xff]
      %v3876 = vld [vmem:[%s57 + $0x60] sm:$0xf]
      %v3877 = vld [vmem:[%s59] sm:$0x1]
      %v3879 = vperm.slane %v3877, 0
      %vm3881 = vcmask 818176
      %v3883 = vsel %vm3881, %v3863, 0
      %vm3885 = vcmask 1043456
      %v3887 = vsel %vm3885, %v3876, 0
      %3889 = vmatpush.msra.mxu0 0.0
      %3890 = vmatpush.msra.mxu0 0.0
      %3891 = vmatpush.msra.mxu0 0.0
      %3892 = vmatpush.msra.mxu0 %v3887
      %3893 = vmatpush.msra.mxu0 %v3875
      %3894 = vmatpush.msra.mxu0 %v3874
      %3895 = vmatpush.msra.mxu0 %v3873
      %3896 = vmatpush.msra.mxu0 %v3872
      %3897 = vmatpush.msra.mxu0 %v3871
      %3898 = vmatpush.msra.mxu0 %v3870
      %3899 = vmatpush.msra.mxu0 %v3869
      %3900 = vmatpush.msra.mxu0 %v3868
      %3901 = vmatpush.msra.mxu0 %v3867
      %3902 = vmatpush.msra.mxu0 %v3866
      %3903 = vmatpush.msra.mxu0 %v3865
      %3904 = vmatpush.msra.mxu0 %v3864
      %3905 = vmatmul.f32.gmra.mxu0 %v3883
      %v3906 = vpop.f32.mrf.mxu0
      %v3907 = vadd.f32 %v3879, %v3906
      %3908 = vdwg.mxu0
      %v3909 = vmax.f32 %v3907, 0.0
      %v3910 = vld [vmem:[%s61] sm:$0xff]
      %v3911 = vld [vmem:[%s61 + $0x8] sm:$0xff]
      %v3912 = vld [vmem:[%s61 + $0x10] sm:$0xff]
      %v3913 = vld [vmem:[%s61 + $0x18] sm:$0xff]
      %v3914 = vld [vmem:[%s61 + $0x20] sm:$0xff]
      %v3915 = vld [vmem:[%s61 + $0x28] sm:$0xff]
      %v3916 = vld [vmem:[%s61 + $0x30] sm:$0x3]
      %v3917 = vld [vmem:[%s63] sm:$0x1]
      %v3919 = vperm.slane %v3917, 0
      %vm3921 = vcmask 408576
      %v3923 = vsel %vm3921, %v3909, 0
      %vm3925 = vcmask 1041408
      %v3927 = vsel %vm3925, %v3916, 0
      %3929 = vmatpush.msra.mxu0 0.0
      %3930 = vmatpush.msra.mxu0 0.0
      %3931 = vmatpush.msra.mxu0 0.0
      %3932 = vmatpush.msra.mxu0 0.0
      %3933 = vmatpush.msra.mxu0 0.0
      %3934 = vmatpush.msra.mxu0 0.0
      %3935 = vmatpush.msra.mxu0 0.0
      %3936 = vmatpush.msra.mxu0 0.0
      %3937 = vmatpush.msra.mxu0 0.0
      %3938 = vmatpush.msra.mxu0 %v3927
      %3939 = vmatpush.msra.mxu0 %v3915
      %3940 = vmatpush.msra.mxu0 %v3914
      %3941 = vmatpush.msra.mxu0 %v3913
      %3942 = vmatpush.msra.mxu0 %v3912
      %3943 = vmatpush.msra.mxu0 %v3911
      %3944 = vmatpush.msra.mxu0 %v3910
      %3945 = vmatmul.f32.gmra.mxu0 %v3923
      %v3946 = vpop.f32.mrf.mxu0
      %v3947 = vadd.f32 %v3919, %v3946
      %3948 = vdwg.mxu0
      %vm3949 = vcmask 23552
      %v3950 = vsel %vm3949, %v3947, -inf
      %3951 = vmax.xlane.f32.xlu0 %v3950
      %v3952 = vpop.xlane.xlu0 %3951
      %v3953 = vsub.f32 %v3947, %v3952
      %v3954 = vmul.f32 %v3953, 1.442695
      %v3955 = vpow.pop %v3954
      %v3956 = vsel %vm3949, %v3955, 0.0
      %3957 = vadd.xlane.f32.xlu0 %v3956
      %v3958 = vpop.xlane.xlu0 %3957
      %v3959 = vlog2.pop %v3958
      %v3960 = vmul.f32 %v3959, 0.6931472
      %v3961 = vadd.f32 %v3960, %v3952
      %v3962 = vld [vmem:[%s1051] sm:$0xff]
      %v3963 = vmul.f32 %v3947, %v3962
      %v3964 = vsel %vm3949, %v3963, 0.0
      %3965 = vadd.xlane.f32.xlu0 %v3964
      %v3966 = vpop.xlane.xlu0 %3965
      %v3967 = vsub.f32 %v3961, %v3966
      %v3968 = vld [vmem:[%s1055] sm:$0xff]
      %v3969 = vmul.f32 %v3967, %v3968
      %vm3970 = vcmask 7168
      %v3971 = vsel %vm3970, %v3969, 0.0
      %v3972 = vrot.slane %v3971, 4
      %v3973 = vadd.f32 %v3971, %v3972
      %v3974 = vrot.slane %v3973, 2
      %v3975 = vadd.f32 %v3973, %v3974
      %v3976 = vrot.slane %v3975, 1
      %v3977 = vadd.f32 %v3975, %v3976
      %vm3978 = vcmask 0
      %3979 = vst.msk [vmem:[%s1058] sm:$0x1] %vm3978, %v3977
      %p3980 = scmp.lt.s32.totalorder %s76, 1
      %s3981 = scalar_select %p3980, %s76, 1
      %s3982 = scalar_lea.vmem %s65, %s3981
      // Predicated region
      $region149: #{planner_forward.1} parent=147 // pred_check
        %p3983 = pneg %p796
      $region150: #{planner_forward.1} parent=147 // pred_check_branch
        %3985 = sbr.rel (%p3983) target = $region152
      $region151: #{planner_forward.1} parent=147 // pred_region
        _
      $region152: #{planner_forward.1} parent=147 // pred_fallthru
        _
    $region148: #{planner_forward.1} parent=5 // pred_fallthru
      _
    %p3986 = scmp.le.s32.totalorder 2, %s71
    // Predicated region
    $region153: #{planner_forward.1} parent=5 // pred_check
      %p3987 = pneg %p3986
    $region154: #{planner_forward.1} parent=5 // pred_check_branch
      %3989 = sbr.rel (%p3987) target = $region156
    $region155: #{planner_forward.1} parent=5 // pred_region
      %s3990 = ssub.s32 %s71, 2
      // Predicated region
      $region157: #{planner_forward.1} parent=155 // pred_check
        %p3991 = pneg %p802
      $region158: #{planner_forward.1} parent=155 // pred_check_branch
        %3993 = sbr.rel (%p3991) target = $region160
      $region159: #{planner_forward.1} parent=155 // pred_region
        %p3994 = scmp.lt.s32.totalorder %s77, 1
        %s3995 = scalar_select %p3994, %s77, 1
        %s3996 = scalar_lea.vmem %s65, %s3995
      $region160: #{planner_forward.1} parent=155 // pred_fallthru
        _
    $region156: #{planner_forward.1} parent=5 // pred_fallthru
      _
  $region6: #{planner_forward.1} parent=0 // loop_footer
    %s75 = sadd.s32 1, %s71
  $region7: #{planner_forward.1} parent=0 // loop_footer_branch
    %70 = sbr.rel target = $region3
  $region8: #{planner_forward.1} parent=0 // loop_exit
    _

</llo_original>
